<compile_context>
chip_gen: v6e
topology: v6e:2x2x1
jax: 0.10.0
libtpu: 0.0.40
codegen_flags: <defaults>
</compile_context>

<pallas_src>
import numpy as np
import jax
import jax.numpy as jnp
from jax.experimental import pallas as pl
from jax.experimental.pallas import tpu as pltpu

CATE_DICT = {2876657: 'bottle', 2880940: 'bowl', 2942699: 'camera',
             2946921: 'can', 3642806: 'laptop', 3797390: 'mug',
             3001627: 'chair'}


def _make_kernel(n_points):
    """Kernel over grid (B//BB, N//TN).

    cate_ref : (BB, 1, 1)  int32
    pred_ref : (BB, C, TN) log-probs (input dtype; bf16 select stays bf16)
    tgt_ref  : (BB, S, TN) int32 class ids
    sym_ref  : (BB, 1, S)  f32 output (per-symmetry mean NLL)
    smp_ref  : (BB, 1, 1)  f32 output (per-sample loss)
    acc_ref  : (BB, 1, S)  f32 VMEM scratch, resident across the N-tile axis
    """
    scale = -1.0 / float(n_points)   # Python float -> jaxpr literal (no captured const)

    def kernel(cate_ref, pred_ref, tgt_ref, sym_ref, smp_ref, acc_ref):
        nt = pl.program_id(1)

        @pl.when(nt == 0)
        def _init():
            acc_ref[...] = jnp.zeros_like(acc_ref)

        tgt = tgt_ref[...]                               # (BB, S, TN) int32
        C = pred_ref.shape[1]

        # Streaming one-hot gather over classes: exactly one class matches per
        # (b, s, n), so a select-chain in the pred dtype is exact. Live set is
        # ~acc + tgt + one pred row -> no (BB,S,C,TN) intermediate, no spill.
        # TODO(synk): F.nll_loss ignore_index=-100 not handled (targets assumed
        # to be valid class ids, as in the original training pipeline).
        sel = jnp.zeros(tgt.shape, dtype=pred_ref.dtype)
        for c in range(C):                               # static unroll over classes
            p_c = pred_ref[:, c:c + 1, :]                # (BB, 1, TN), static slice
            sel = jnp.where(tgt == c, p_c, sel)          # broadcast over S

        # f32 lane reduce over this N tile; accumulate across tiles in scratch.
        acc_ref[...] += jnp.sum(sel.astype(jnp.float32), axis=-1)[:, None, :]

        @pl.when(nt == pl.num_programs(1) - 1)
        def _finalize():
            per_sym = acc_ref[...] * scale               # (BB, 1, S) mean NLL
            sym_ref[...] = per_sym
            nsym = per_sym[:, :, 0:1]                    # symmetry hypothesis 0
            best = jnp.min(per_sym, axis=-1, keepdims=True)
            smp_ref[...] = jnp.where(cate_ref[...] == 0, nsym, best)

    return kernel


def _pick_tiles(B, N, C, S, pred_itemsize):
    """Largest (BB, TN) whose double-buffered blocks fit a VMEM byte budget.

    Small problems collapse to a single grid step; when several batch blocks
    are needed, an even block count is preferred so the 'parallel' batch axis
    shards evenly across the two TensorCores on v7x.
    """
    budget = 24 << 20                                    # bytes per step (double-buffered)
    s_pad = -(-S // 8) * 8                               # sublane padding of the tgt tile

    def step_bytes(bb, tn):
        pred_blk = bb * C * tn * pred_itemsize
        tgt_blk = bb * s_pad * tn * 4
        return 2 * (pred_blk + tgt_blk)

    tn_cands = [N] + [t for t in (4096, 2048, 1024, 512, 256, 128)
                      if t < N and N % t == 0]
    bb_cands = [b for b in range(B, 0, -1) if B % b == 0]
    for tn in tn_cands:
        fitting = [bb for bb in bb_cands if step_bytes(bb, tn) <= budget]
        if fitting:
            even = [bb for bb in fitting if B // bb == 1 or (B // bb) % 2 == 0]
            return (even[0] if even else fitting[0]), tn
    return 1, N                                          # fallback: full N, one row/step


def nll_per_sym_and_sample(pred, target, cate_sym):
    """Returns (per_sym (B, S), per_sample (B,)) — all heavy work in one kernel."""
    B, N, C = pred.shape
    S = target.shape[1]

    # N lane-dense: (B, N, C) -> (B, C, N).
    # TODO(synk): for large B*N*C have upstream emit (B, C, N) directly and drop
    # this extra HBM round trip (negligible at these shapes).
    pred_t = jnp.swapaxes(pred, 1, 2)
    # TODO(synk): target could be shipped as int8 (C<=127) to cut its HBM bytes
    # 4x on v5e; kept int32 here for layout simplicity.
    target = target.astype(jnp.int32)
    cate3 = cate_sym.astype(jnp.int32).reshape(B, 1, 1)

    itemsize = jnp.dtype(pred.dtype).itemsize
    BB, TN = _pick_tiles(B, N, C, S, itemsize)
    grid = (B // BB, N // TN)

    s_pad = -(-S // 8) * 8
    needed = 2 * (BB * C * TN * itemsize + BB * s_pad * TN * 4)
    # Cap well below v7x's 64 MiB/TC physical VMEM to leave compiler headroom.
    vmem_limit = int(min(48 << 20, max(32 << 20, needed + (8 << 20))))

    kernel = _make_kernel(N)

    per_sym, per_sample = pl.pallas_call(
        kernel,
        out_shape=(jax.ShapeDtypeStruct((B, 1, S), jnp.float32),
                   jax.ShapeDtypeStruct((B, 1, 1), jnp.float32)),
        grid_spec=pltpu.PrefetchScalarGridSpec(
            num_scalar_prefetch=0,
            grid=grid,
            in_specs=[
                pl.BlockSpec((BB, 1, 1), lambda bb, nt: (bb, 0, 0)),
                pl.BlockSpec((BB, C, TN), lambda bb, nt: (bb, 0, nt)),
                pl.BlockSpec((BB, S, TN), lambda bb, nt: (bb, 0, nt)),
            ],
            out_specs=[
                pl.BlockSpec((BB, 1, S), lambda bb, nt: (bb, 0, 0)),
                pl.BlockSpec((BB, 1, 1), lambda bb, nt: (bb, 0, 0)),
            ],
            scratch_shapes=[pltpu.VMEM((BB, 1, S), jnp.float32)],
        ),
        compiler_params=pltpu.CompilerParams(
            dimension_semantics=("parallel", "arbitrary"),
            vmem_limit_bytes=vmem_limit),
    )(cate3, pred_t, target)

    return per_sym[:, 0, :], per_sample[:, 0, 0]


def get_loss(pred, target, cate_sym, category):
    """Reproduces gcn3d.get_loss.forward."""
    per_sym, per_sample = nll_per_sym_and_sample(pred, target, cate_sym)

    # Overall mean is permutation-invariant.
    mean_loss = jnp.mean(per_sample)
    losses = {'loss': mean_loss}

    # PyTorch concatenates losses as [nsym samples..., sym samples...] while
    # indexing the per-category masks in the ORIGINAL batch order. Reproduce
    # that pairing exactly (intentional fidelity to the reference quirk).
    is_nsym = (cate_sym == 0)
    order = jnp.argsort((~is_nsym).astype(jnp.int32), stable=True)
    loss_vec = per_sample[order]

    # Per-category means: data-dependent dict keys force a host decision, but
    # it only reads the `category` INPUT (no sync on kernel output).
    # TODO(synk): dynamic boolean-mask selection has no fixed-shape Pallas form.
    cat_np = np.asarray(category)
    for key, name in CATE_DICT.items():
        m_np = cat_np == key
        cnt = int(m_np.sum())
        if cnt == 0:
            continue
        mask = jnp.asarray(m_np)
        losses[f'{name}_loss'] = jnp.sum(jnp.where(mask, loss_vec, 0.0)) / cnt
    return losses


def _reference_per_sym(pred, target):
    """Pure-JAX reference for the kernel (sanity check)."""
    gathered = jnp.take_along_axis(pred[:, None, :, :],
                                   target[..., None].astype(jnp.int32),
                                   axis=-1)[..., 0]            # (B, S, N)
    return -jnp.mean(gathered.astype(jnp.float32), axis=-1)    # (B, S)


if __name__ == "__main__":
    key = jax.random.PRNGKey(0)
    # batch=6, points=1024, classes=16, symmetries=3
    # (fits the VMEM budget -> grid collapses to a single (1, 1) step)
    B, N, C, S = 6, 1024, 16, 3
    k1, k2, k3, k4 = jax.random.split(key, 4)

    logits = jax.random.normal(k1, (B, N, C), dtype=jnp.float32)
    pred = jax.nn.log_softmax(logits, axis=-1)                  # NLL expects log-probs
    target = jax.random.randint(k2, (B, S, N), 0, C, dtype=jnp.int32)
    cate_sym = jax.random.randint(k3, (B,), 0, 2, dtype=jnp.int32)
    cat_keys = jnp.array(list(CATE_DICT.keys()), dtype=jnp.int32)
    category = jax.random.choice(k4, cat_keys, (B,))

    # kernel vs pure-JAX reference
    per_sym, per_sample = jax.block_until_ready(
        nll_per_sym_and_sample(pred, target, cate_sym))
    ref_sym = _reference_per_sym(pred, target)
    ref_sample = jnp.where(cate_sym == 0, ref_sym[:, 0], jnp.min(ref_sym, axis=1))
    np.testing.assert_allclose(np.asarray(per_sym), np.asarray(ref_sym),
                               rtol=1e-5, atol=1e-5)
    np.testing.assert_allclose(np.asarray(per_sample), np.asarray(ref_sample),
                               rtol=1e-5, atol=1e-5)

    # bf16 input path: select stays bf16 (exact for one-hot), accumulation f32.
    sym_bf16, smp_bf16 = jax.block_until_ready(
        nll_per_sym_and_sample(pred.astype(jnp.bfloat16), target, cate_sym))
    np.testing.assert_allclose(np.asarray(sym_bf16), np.asarray(ref_sym),
                               rtol=2e-2, atol=2e-2)
    np.testing.assert_allclose(np.asarray(smp_bf16), np.asarray(ref_sample),
                               rtol=2e-2, atol=2e-2)

    losses = get_loss(pred, target, cate_sym, category)
    jax.block_until_ready(losses['loss'])
    print("KERNEL_OK")
</pallas_src>

<mosaic_0001>
module attributes {stable_mosaic.version = 11 : i64} {
  func.func @kernel(%arg0: i32, %arg1: i32, %arg2: memref<6x1x1xi32, #tpu.memory_space<vmem>>, %arg3: memref<6x16x1024xf32, #tpu.memory_space<vmem>>, %arg4: memref<6x3x1024xi32, #tpu.memory_space<vmem>>, %arg5: memref<6x1x3xf32, #tpu.memory_space<vmem>>, %arg6: memref<6x1x1xf32, #tpu.memory_space<vmem>>, %arg7: memref<6x1x3xf32, #tpu.memory_space<vmem>>) attributes {dimension_semantics = [#tpu.dimension_semantics<parallel>, #tpu.dimension_semantics<arbitrary>], iteration_bounds = array<i64: 1, 1>, scalar_prefetch = 0 : i64, scratch_operands = 1 : i64, tpu.core_type = #tpu.core_type<tc>, window_params = [{transform_indices = @transform_0, window_bounds = array<i64: 6, 1, 1>}, {transform_indices = @transform_1, window_bounds = array<i64: 6, 16, 1024>}, {transform_indices = @transform_2, window_bounds = array<i64: 6, 3, 1024>}, {transform_indices = @transform_3, window_bounds = array<i64: 6, 1, 3>}, {transform_indices = @transform_4, window_bounds = array<i64: 6, 1, 1>}]} {
    %c0_i32 = arith.constant 0 : i32
    %0 = arith.cmpi eq, %arg1, %c0_i32 : i32
    %1 = arith.extui %0 : i1 to i32
    %c0_i32_0 = arith.constant 0 : i32
    %2 = arith.cmpi ne, %1, %c0_i32_0 : i32
    scf.if %2 {
      %cst_46 = arith.constant 0.000000e+00 : f32
      %109 = vector.broadcast %cst_46 : f32 to vector<6x1x3xf32>
      %c0_47 = arith.constant 0 : index
      %c0_48 = arith.constant 0 : index
      %c0_49 = arith.constant 0 : index
      %110 = vector.load %arg7[%c0_47, %c0_48, %c0_49] : memref<6x1x3xf32, #tpu.memory_space<vmem>>, vector<6x1x3xf32>
      tpu.vector_store %arg7[%c0_47, %c0_48, %c0_49], %109 {strides = array<i32>} : memref<6x1x3xf32, #tpu.memory_space<vmem>>, vector<6x1x3xf32>,
    } else {
    }
    %c0 = arith.constant 0 : index
    %c0_1 = arith.constant 0 : index
    %c0_2 = arith.constant 0 : index
    %3 = vector.load %arg4[%c0, %c0_1, %c0_2] : memref<6x3x1024xi32, #tpu.memory_space<vmem>>, vector<6x3x1024xi32>
    %cst = arith.constant 0.000000e+00 : f32
    %4 = vector.broadcast %cst : f32 to vector<6x3x1024xf32>
    %c0_3 = arith.constant 0 : index
    %c0_4 = arith.constant 0 : index
    %c0_5 = arith.constant 0 : index
    %5 = vector.load %arg3[%c0_3, %c0_4, %c0_5] : memref<6x16x1024xf32, #tpu.memory_space<vmem>>, vector<6x1x1024xf32>
    %c0_i32_6 = arith.constant 0 : i32
    %6 = vector.broadcast %c0_i32_6 : i32 to vector<6x3x1024xi32>
    %7 = arith.cmpi eq, %3, %6 : vector<6x3x1024xi32>
    %8 = vector.shape_cast %5 : vector<6x1x1024xf32> to vector<6x1x1024xf32>
    %9 = vector.broadcast %8 : vector<6x1x1024xf32> to vector<6x3x1024xf32>
    %10 = arith.select %7, %9, %4 : vector<6x3x1024xi1>, vector<6x3x1024xf32>
    %c0_7 = arith.constant 0 : index
    %c1 = arith.constant 1 : index
    %c0_8 = arith.constant 0 : index
    %11 = vector.load %arg3[%c0_7, %c1, %c0_8] : memref<6x16x1024xf32, #tpu.memory_space<vmem>>, vector<6x1x1024xf32>
    %c1_i32 = arith.constant 1 : i32
    %12 = vector.broadcast %c1_i32 : i32 to vector<6x3x1024xi32>
    %13 = arith.cmpi eq, %3, %12 : vector<6x3x1024xi32>
    %14 = vector.shape_cast %11 : vector<6x1x1024xf32> to vector<6x1x1024xf32>
    %15 = vector.broadcast %14 : vector<6x1x1024xf32> to vector<6x3x1024xf32>
    %16 = arith.select %13, %15, %10 : vector<6x3x1024xi1>, vector<6x3x1024xf32>
    %c0_9 = arith.constant 0 : index
    %c2 = arith.constant 2 : index
    %c0_10 = arith.constant 0 : index
    %17 = vector.load %arg3[%c0_9, %c2, %c0_10] : memref<6x16x1024xf32, #tpu.memory_space<vmem>>, vector<6x1x1024xf32>
    %c2_i32 = arith.constant 2 : i32
    %18 = vector.broadcast %c2_i32 : i32 to vector<6x3x1024xi32>
    %19 = arith.cmpi eq, %3, %18 : vector<6x3x1024xi32>
    %20 = vector.shape_cast %17 : vector<6x1x1024xf32> to vector<6x1x1024xf32>
    %21 = vector.broadcast %20 : vector<6x1x1024xf32> to vector<6x3x1024xf32>
    %22 = arith.select %19, %21, %16 : vector<6x3x1024xi1>, vector<6x3x1024xf32>
    %c0_11 = arith.constant 0 : index
    %c3 = arith.constant 3 : index
    %c0_12 = arith.constant 0 : index
    %23 = vector.load %arg3[%c0_11, %c3, %c0_12] : memref<6x16x1024xf32, #tpu.memory_space<vmem>>, vector<6x1x1024xf32>
    %c3_i32 = arith.constant 3 : i32
    %24 = vector.broadcast %c3_i32 : i32 to vector<6x3x1024xi32>
    %25 = arith.cmpi eq, %3, %24 : vector<6x3x1024xi32>
    %26 = vector.shape_cast %23 : vector<6x1x1024xf32> to vector<6x1x1024xf32>
    %27 = vector.broadcast %26 : vector<6x1x1024xf32> to vector<6x3x1024xf32>
    %28 = arith.select %25, %27, %22 : vector<6x3x1024xi1>, vector<6x3x1024xf32>
    %c0_13 = arith.constant 0 : index
    %c4 = arith.constant 4 : index
    %c0_14 = arith.constant 0 : index
    %29 = vector.load %arg3[%c0_13, %c4, %c0_14] : memref<6x16x1024xf32, #tpu.memory_space<vmem>>, vector<6x1x1024xf32>
    %c4_i32 = arith.constant 4 : i32
    %30 = vector.broadcast %c4_i32 : i32 to vector<6x3x1024xi32>
    %31 = arith.cmpi eq, %3, %30 : vector<6x3x1024xi32>
    %32 = vector.shape_cast %29 : vector<6x1x1024xf32> to vector<6x1x1024xf32>
    %33 = vector.broadcast %32 : vector<6x1x1024xf32> to vector<6x3x1024xf32>
    %34 = arith.select %31, %33, %28 : vector<6x3x1024xi1>, vector<6x3x1024xf32>
    %c0_15 = arith.constant 0 : index
    %c5 = arith.constant 5 : index
    %c0_16 = arith.constant 0 : index
    %35 = vector.load %arg3[%c0_15, %c5, %c0_16] : memref<6x16x1024xf32, #tpu.memory_space<vmem>>, vector<6x1x1024xf32>
    %c5_i32 = arith.constant 5 : i32
    %36 = vector.broadcast %c5_i32 : i32 to vector<6x3x1024xi32>
    %37 = arith.cmpi eq, %3, %36 : vector<6x3x1024xi32>
    %38 = vector.shape_cast %35 : vector<6x1x1024xf32> to vector<6x1x1024xf32>
    %39 = vector.broadcast %38 : vector<6x1x1024xf32> to vector<6x3x1024xf32>
    %40 = arith.select %37, %39, %34 : vector<6x3x1024xi1>, vector<6x3x1024xf32>
    %c0_17 = arith.constant 0 : index
    %c6 = arith.constant 6 : index
    %c0_18 = arith.constant 0 : index
    %41 = vector.load %arg3[%c0_17, %c6, %c0_18] : memref<6x16x1024xf32, #tpu.memory_space<vmem>>, vector<6x1x1024xf32>
    %c6_i32 = arith.constant 6 : i32
    %42 = vector.broadcast %c6_i32 : i32 to vector<6x3x1024xi32>
    %43 = arith.cmpi eq, %3, %42 : vector<6x3x1024xi32>
    %44 = vector.shape_cast %41 : vector<6x1x1024xf32> to vector<6x1x1024xf32>
    %45 = vector.broadcast %44 : vector<6x1x1024xf32> to vector<6x3x1024xf32>
    %46 = arith.select %43, %45, %40 : vector<6x3x1024xi1>, vector<6x3x1024xf32>
    %c0_19 = arith.constant 0 : index
    %c7 = arith.constant 7 : index
    %c0_20 = arith.constant 0 : index
    %47 = vector.load %arg3[%c0_19, %c7, %c0_20] : memref<6x16x1024xf32, #tpu.memory_space<vmem>>, vector<6x1x1024xf32>
    %c7_i32 = arith.constant 7 : i32
    %48 = vector.broadcast %c7_i32 : i32 to vector<6x3x1024xi32>
    %49 = arith.cmpi eq, %3, %48 : vector<6x3x1024xi32>
    %50 = vector.shape_cast %47 : vector<6x1x1024xf32> to vector<6x1x1024xf32>
    %51 = vector.broadcast %50 : vector<6x1x1024xf32> to vector<6x3x1024xf32>
    %52 = arith.select %49, %51, %46 : vector<6x3x1024xi1>, vector<6x3x1024xf32>
    %c0_21 = arith.constant 0 : index
    %c8 = arith.constant 8 : index
    %c0_22 = arith.constant 0 : index
    %53 = vector.load %arg3[%c0_21, %c8, %c0_22] : memref<6x16x1024xf32, #tpu.memory_space<vmem>>, vector<6x1x1024xf32>
    %c8_i32 = arith.constant 8 : i32
    %54 = vector.broadcast %c8_i32 : i32 to vector<6x3x1024xi32>
    %55 = arith.cmpi eq, %3, %54 : vector<6x3x1024xi32>
    %56 = vector.shape_cast %53 : vector<6x1x1024xf32> to vector<6x1x1024xf32>
    %57 = vector.broadcast %56 : vector<6x1x1024xf32> to vector<6x3x1024xf32>
    %58 = arith.select %55, %57, %52 : vector<6x3x1024xi1>, vector<6x3x1024xf32>
    %c0_23 = arith.constant 0 : index
    %c9 = arith.constant 9 : index
    %c0_24 = arith.constant 0 : index
    %59 = vector.load %arg3[%c0_23, %c9, %c0_24] : memref<6x16x1024xf32, #tpu.memory_space<vmem>>, vector<6x1x1024xf32>
    %c9_i32 = arith.constant 9 : i32
    %60 = vector.broadcast %c9_i32 : i32 to vector<6x3x1024xi32>
    %61 = arith.cmpi eq, %3, %60 : vector<6x3x1024xi32>
    %62 = vector.shape_cast %59 : vector<6x1x1024xf32> to vector<6x1x1024xf32>
    %63 = vector.broadcast %62 : vector<6x1x1024xf32> to vector<6x3x1024xf32>
    %64 = arith.select %61, %63, %58 : vector<6x3x1024xi1>, vector<6x3x1024xf32>
    %c0_25 = arith.constant 0 : index
    %c10 = arith.constant 10 : index
    %c0_26 = arith.constant 0 : index
    %65 = vector.load %arg3[%c0_25, %c10, %c0_26] : memref<6x16x1024xf32, #tpu.memory_space<vmem>>, vector<6x1x1024xf32>
    %c10_i32 = arith.constant 10 : i32
    %66 = vector.broadcast %c10_i32 : i32 to vector<6x3x1024xi32>
    %67 = arith.cmpi eq, %3, %66 : vector<6x3x1024xi32>
    %68 = vector.shape_cast %65 : vector<6x1x1024xf32> to vector<6x1x1024xf32>
    %69 = vector.broadcast %68 : vector<6x1x1024xf32> to vector<6x3x1024xf32>
    %70 = arith.select %67, %69, %64 : vector<6x3x1024xi1>, vector<6x3x1024xf32>
    %c0_27 = arith.constant 0 : index
    %c11 = arith.constant 11 : index
    %c0_28 = arith.constant 0 : index
    %71 = vector.load %arg3[%c0_27, %c11, %c0_28] : memref<6x16x1024xf32, #tpu.memory_space<vmem>>, vector<6x1x1024xf32>
    %c11_i32 = arith.constant 11 : i32
    %72 = vector.broadcast %c11_i32 : i32 to vector<6x3x1024xi32>
    %73 = arith.cmpi eq, %3, %72 : vector<6x3x1024xi32>
    %74 = vector.shape_cast %71 : vector<6x1x1024xf32> to vector<6x1x1024xf32>
    %75 = vector.broadcast %74 : vector<6x1x1024xf32> to vector<6x3x1024xf32>
    %76 = arith.select %73, %75, %70 : vector<6x3x1024xi1>, vector<6x3x1024xf32>
    %c0_29 = arith.constant 0 : index
    %c12 = arith.constant 12 : index
    %c0_30 = arith.constant 0 : index
    %77 = vector.load %arg3[%c0_29, %c12, %c0_30] : memref<6x16x1024xf32, #tpu.memory_space<vmem>>, vector<6x1x1024xf32>
    %c12_i32 = arith.constant 12 : i32
    %78 = vector.broadcast %c12_i32 : i32 to vector<6x3x1024xi32>
    %79 = arith.cmpi eq, %3, %78 : vector<6x3x1024xi32>
    %80 = vector.shape_cast %77 : vector<6x1x1024xf32> to vector<6x1x1024xf32>
    %81 = vector.broadcast %80 : vector<6x1x1024xf32> to vector<6x3x1024xf32>
    %82 = arith.select %79, %81, %76 : vector<6x3x1024xi1>, vector<6x3x1024xf32>
    %c0_31 = arith.constant 0 : index
    %c13 = arith.constant 13 : index
    %c0_32 = arith.constant 0 : index
    %83 = vector.load %arg3[%c0_31, %c13, %c0_32] : memref<6x16x1024xf32, #tpu.memory_space<vmem>>, vector<6x1x1024xf32>
    %c13_i32 = arith.constant 13 : i32
    %84 = vector.broadcast %c13_i32 : i32 to vector<6x3x1024xi32>
    %85 = arith.cmpi eq, %3, %84 : vector<6x3x1024xi32>
    %86 = vector.shape_cast %83 : vector<6x1x1024xf32> to vector<6x1x1024xf32>
    %87 = vector.broadcast %86 : vector<6x1x1024xf32> to vector<6x3x1024xf32>
    %88 = arith.select %85, %87, %82 : vector<6x3x1024xi1>, vector<6x3x1024xf32>
    %c0_33 = arith.constant 0 : index
    %c14 = arith.constant 14 : index
    %c0_34 = arith.constant 0 : index
    %89 = vector.load %arg3[%c0_33, %c14, %c0_34] : memref<6x16x1024xf32, #tpu.memory_space<vmem>>, vector<6x1x1024xf32>
    %c14_i32 = arith.constant 14 : i32
    %90 = vector.broadcast %c14_i32 : i32 to vector<6x3x1024xi32>
    %91 = arith.cmpi eq, %3, %90 : vector<6x3x1024xi32>
    %92 = vector.shape_cast %89 : vector<6x1x1024xf32> to vector<6x1x1024xf32>
    %93 = vector.broadcast %92 : vector<6x1x1024xf32> to vector<6x3x1024xf32>
    %94 = arith.select %91, %93, %88 : vector<6x3x1024xi1>, vector<6x3x1024xf32>
    %c0_35 = arith.constant 0 : index
    %c15 = arith.constant 15 : index
    %c0_36 = arith.constant 0 : index
    %95 = vector.load %arg3[%c0_35, %c15, %c0_36] : memref<6x16x1024xf32, #tpu.memory_space<vmem>>, vector<6x1x1024xf32>
    %c15_i32 = arith.constant 15 : i32
    %96 = vector.broadcast %c15_i32 : i32 to vector<6x3x1024xi32>
    %97 = arith.cmpi eq, %3, %96 : vector<6x3x1024xi32>
    %98 = vector.shape_cast %95 : vector<6x1x1024xf32> to vector<6x1x1024xf32>
    %99 = vector.broadcast %98 : vector<6x1x1024xf32> to vector<6x3x1024xf32>
    %100 = arith.select %97, %99, %94 : vector<6x3x1024xi1>, vector<6x3x1024xf32>
    %c0_37 = arith.constant 0 : index
    %c0_38 = arith.constant 0 : index
    %c0_39 = arith.constant 0 : index
    %101 = vector.load %arg7[%c0_37, %c0_38, %c0_39] : memref<6x1x3xf32, #tpu.memory_space<vmem>>, vector<6x1x3xf32>
    %cst_40 = arith.constant dense<0.000000e+00> : vector<6x3xf32>
    %102 = vector.multi_reduction <add>, %100, %cst_40 [2] : vector<6x3x1024xf32> to vector<6x3xf32>
    %103 = vector.shape_cast %102 : vector<6x3xf32> to vector<6x1x3xf32>
    %104 = arith.addf %101, %103 : vector<6x1x3xf32>
    %c0_41 = arith.constant 0 : index
    %c0_42 = arith.constant 0 : index
    %c0_43 = arith.constant 0 : index
    %105 = vector.load %arg7[%c0_41, %c0_42, %c0_43] : memref<6x1x3xf32, #tpu.memory_space<vmem>>, vector<6x1x3xf32>
    tpu.vector_store %arg7[%c0_41, %c0_42, %c0_43], %104 {strides = array<i32>} : memref<6x1x3xf32, #tpu.memory_space<vmem>>, vector<6x1x3xf32>,
    %c0_i32_44 = arith.constant 0 : i32
    %106 = arith.cmpi eq, %arg1, %c0_i32_44 : i32
    %107 = arith.extui %106 : i1 to i32
    %c0_i32_45 = arith.constant 0 : i32
    %108 = arith.cmpi ne, %107, %c0_i32_45 : i32
    scf.if %108 {
      %c0_46 = arith.constant 0 : index
      %c0_47 = arith.constant 0 : index
      %c0_48 = arith.constant 0 : index
      %109 = vector.load %arg7[%c0_46, %c0_47, %c0_48] : memref<6x1x3xf32, #tpu.memory_space<vmem>>, vector<6x1x3xf32>
      %cst_49 = arith.constant -9.765625E-4 : f32
      %110 = vector.broadcast %cst_49 : f32 to vector<6x1x3xf32>
      %111 = arith.mulf %109, %110 : vector<6x1x3xf32>
      %c0_50 = arith.constant 0 : index
      %c0_51 = arith.constant 0 : index
      %c0_52 = arith.constant 0 : index
      %112 = vector.load %arg5[%c0_50, %c0_51, %c0_52] : memref<6x1x3xf32, #tpu.memory_space<vmem>>, vector<6x1x3xf32>
      tpu.vector_store %arg5[%c0_50, %c0_51, %c0_52], %111 {strides = array<i32>} : memref<6x1x3xf32, #tpu.memory_space<vmem>>, vector<6x1x3xf32>,
      %113 = vector.extract_strided_slice %111 {offsets = [0, 0, 0], sizes = [6, 1, 1], strides = [1, 1, 1]} : vector<6x1x3xf32> to vector<6x1x1xf32>
      %cst_53 = arith.constant dense<0x7F800000> : vector<6x1xf32>
      %114 = vector.multi_reduction <minimumf>, %111, %cst_53 [2] : vector<6x1x3xf32> to vector<6x1xf32>
      %115 = vector.shape_cast %114 : vector<6x1xf32> to vector<6x1x1xf32>
      %c0_54 = arith.constant 0 : index
      %c0_55 = arith.constant 0 : index
      %c0_56 = arith.constant 0 : index
      %116 = vector.load %arg2[%c0_54, %c0_55, %c0_56] : memref<6x1x1xi32, #tpu.memory_space<vmem>>, vector<6x1x1xi32>
      %c0_i32_57 = arith.constant 0 : i32
      %117 = vector.broadcast %c0_i32_57 : i32 to vector<6x1x1xi32>
      %118 = arith.cmpi eq, %116, %117 : vector<6x1x1xi32>
      %119 = arith.select %118, %113, %115 : vector<6x1x1xi1>, vector<6x1x1xf32>
      %c0_58 = arith.constant 0 : index
      %c0_59 = arith.constant 0 : index
      %c0_60 = arith.constant 0 : index
      %120 = vector.load %arg6[%c0_58, %c0_59, %c0_60] : memref<6x1x1xf32, #tpu.memory_space<vmem>>, vector<6x1x1xf32>
      tpu.vector_store %arg6[%c0_58, %c0_59, %c0_60], %119 {strides = array<i32>} : memref<6x1x1xf32, #tpu.memory_space<vmem>>, vector<6x1x1xf32>,
    } else {
    }
    return
  }
  func.func @transform_0(%arg0: i32, %arg1: i32) -> (i32, i32, i32) {
    %c0_i32 = arith.constant 0 : i32
    %c0_i32_0 = arith.constant 0 : i32
    %c0_i32_1 = arith.constant 0 : i32
    return %arg0, %c0_i32, %c0_i32_0 : i32, i32, i32
  }
  func.func @transform_1(%arg0: i32, %arg1: i32) -> (i32, i32, i32) {
    %c0_i32 = arith.constant 0 : i32
    %c0_i32_0 = arith.constant 0 : i32
    return %arg0, %c0_i32, %arg1 : i32, i32, i32
  }
  func.func @transform_2(%arg0: i32, %arg1: i32) -> (i32, i32, i32) {
    %c0_i32 = arith.constant 0 : i32
    %c0_i32_0 = arith.constant 0 : i32
    return %arg0, %c0_i32, %arg1 : i32, i32, i32
  }
  func.func @transform_3(%arg0: i32, %arg1: i32) -> (i32, i32, i32) {
    %c0_i32 = arith.constant 0 : i32
    %c0_i32_0 = arith.constant 0 : i32
    %c0_i32_1 = arith.constant 0 : i32
    return %arg0, %c0_i32, %c0_i32_0 : i32, i32, i32
  }
  func.func @transform_4(%arg0: i32, %arg1: i32) -> (i32, i32, i32) {
    %c0_i32 = arith.constant 0 : i32
    %c0_i32_0 = arith.constant 0 : i32
    %c0_i32_1 = arith.constant 0 : i32
    return %arg0, %c0_i32, %c0_i32_0 : i32, i32, i32
  }
}

</mosaic_0001>

<llo_original>
// kernel: tpu_custom_call.1
$region0: #{tpu_custom_call.1}
  #allocation0 [shape = 'u32[]', space=smem, size = 0x4, offset = 0x4, fixed_abs, tag = 'smem constant byte address 0x4 - core index']
  #allocation1 [shape = 'u32[144,128]{1,0:T(1,128)}', space=vmem, size = 0x12000, scoped, tag = 'internal scratch']
  #allocation2 [shape = 'f32[6,1,3]{2,1,0:T(1,128)}', space=vmem, size = 0xc00, scoped, tag = 'scratch operand']
  %s0 = inlined_call_operand.vmem [shape: s32[6,1,1], index: 0, kind: input, shape index: {}]
  %s1 = inlined_call_operand.hbm [shape: f32[6,16,1024], index: 1, kind: input, shape index: {}]
  %s2 = inlined_call_operand.hbm [shape: s32[6,3,1024], index: 2, kind: input, shape index: {}]
  %s3 = inlined_call_operand.vmem [shape: f32[6,1,3], index: 3, kind: output, shape index: {0}]
  %s4 = inlined_call_operand.vmem [shape: f32[6,1,1], index: 4, kind: output, shape index: {1}]
  %5 = xla_tuple %s3, %s4
  %s6 = sld [smem:[#allocation0]]
  $region46: #{tpu_custom_call.1} parent=0
    _
  %s8 = ssub.s32 1, %s6
  %s9 = scalar_select 0, %s8, %s6
  $region1: #{tpu_custom_call.1} parent=0
    #allocation3 [shape = 'u8[393216]{0}', space=vmem, size = 0x60000, scoped, tag = 'input window, operand 1, single buffered']
    #allocation4 [shape = 's32[1]{0}', space=sflag, size = 0x4, scoped, tag = 'scoped memory for tpu_custom_call.1']
    #allocation5 [shape = 'u8[98304]{0}', space=vmem, size = 0x18000, scoped, tag = 'input window, operand 2, single buffered']
    #allocation6 [shape = 's32[1]{0}', space=sflag, size = 0x4, scoped, tag = 'scoped memory for tpu_custom_call.1']
    %10 = vsyncpa [#allocation4], 0
    %11 = vsyncpa [#allocation6], 0
    // Predicated region
    $region2: #{tpu_custom_call.1} parent=1 // pred_check
      _
    $region3: #{tpu_custom_call.1} parent=1 // pred_check_branch
      %13 = sbr.rel (0) target = $region5
    $region4: #{tpu_custom_call.1} parent=1 // pred_region
      _
    $region5: #{tpu_custom_call.1} parent=1 // pred_fallthru
      _
    // Predicated region
    $region6: #{tpu_custom_call.1} parent=1 // pred_check
      _
    $region7: #{tpu_custom_call.1} parent=1 // pred_check_branch
      %15 = sbr.rel (0) target = $region9
    $region8: #{tpu_custom_call.1} parent=1 // pred_region
      %s17 = ssub.s32 12288, 12288
      %18 = vsyncadd [#allocation4], %s17
      %s19 = sshll.u32 [#allocation3], 4
      %s20 = int_to_ptr.vmem [resolvable:$true] %s19
      %25 = dma.hbm_to_vmem [thread:$0]  %s1, 12288, %s20, [#allocation4], 1024, 1024, 64
    $region9: #{tpu_custom_call.1} parent=1 // pred_fallthru
      _
    // Predicated region
    $region10: #{tpu_custom_call.1} parent=1 // pred_check
      _
    $region11: #{tpu_custom_call.1} parent=1 // pred_check_branch
      %27 = sbr.rel (0) target = $region13
    $region12: #{tpu_custom_call.1} parent=1 // pred_region
      %s29 = ssub.s32 3072, 3072
      %30 = vsyncadd [#allocation6], %s29
      %s31 = sshll.u32 [#allocation5], 4
      %s32 = int_to_ptr.vmem [resolvable:$true] %s31
      %37 = dma.hbm_to_vmem [thread:$0]  %s2, 3072, %s32, [#allocation6], 512, 512, 32
    $region13: #{tpu_custom_call.1} parent=1 // pred_fallthru
      _
    // Predicated region
    $region14: #{tpu_custom_call.1} parent=1 // pred_check
      _
    $region15: #{tpu_custom_call.1} parent=1 // pred_check_branch
      %39 = sbr.rel (0) target = $region17
    $region16: #{tpu_custom_call.1} parent=1 // pred_region
      %40 = dma.done [#allocation4], 12288
    $region17: #{tpu_custom_call.1} parent=1 // pred_fallthru
      _
    // Predicated region
    $region18: #{tpu_custom_call.1} parent=1 // pred_check
      _
    $region19: #{tpu_custom_call.1} parent=1 // pred_check_branch
      %42 = sbr.rel (0) target = $region21
    $region20: #{tpu_custom_call.1} parent=1 // pred_region
      %43 = dma.done [#allocation6], 3072
    $region21: #{tpu_custom_call.1} parent=1 // pred_fallthru
      _
    %p44 = scmp.eq.s32.totalorder 0, 0
    // Predicated region
    $region22: #{tpu_custom_call.1} parent=1 // pred_check
      %p45 = pneg %p44
    $region23: #{tpu_custom_call.1} parent=1 // pred_check_branch
      %47 = sbr.rel (%p45) target = $region25
    $region24: #{tpu_custom_call.1} parent=1 // pred_region
      %vm48 = vcmask 16384
      %49 = vst.msk [vmem:[#allocation2] sm:$0x1] %vm48, 0.0
      %50 = vst.msk [vmem:[#allocation2 + $0x1] sm:$0x1] %vm48, 0.0
      %51 = vst.msk [vmem:[#allocation2 + $0x2] sm:$0x1] %vm48, 0.0
      %52 = vst.msk [vmem:[#allocation2 + $0x3] sm:$0x1] %vm48, 0.0
      %53 = vst.msk [vmem:[#allocation2 + $0x4] sm:$0x1] %vm48, 0.0
      %54 = vst.msk [vmem:[#allocation2 + $0x5] sm:$0x1] %vm48, 0.0
    $region25: #{tpu_custom_call.1} parent=1 // pred_fallthru
      _
    %v55 = vld [vmem:[#allocation5] sm:$0x77]
    %v56 = vld [vmem:[#allocation5 + $0x8] sm:$0x77]
    %v57 = vld [vmem:[#allocation5 + $0x10] sm:$0x77]
    %v58 = vld [vmem:[#allocation5 + $0x18] sm:$0x77]
    %v59 = vld [vmem:[#allocation5 + $0x20] sm:$0x77]
    %v60 = vld [vmem:[#allocation5 + $0x28] sm:$0x77]
    %v61 = vld [vmem:[#allocation5 + $0x30] sm:$0x77]
    %v62 = vld [vmem:[#allocation5 + $0x38] sm:$0x77]
    %v63 = vld [vmem:[#allocation5 + $0x40] sm:$0x77]
    %v64 = vld [vmem:[#allocation5 + $0x48] sm:$0x77]
    %v65 = vld [vmem:[#allocation5 + $0x50] sm:$0x77]
    %v66 = vld [vmem:[#allocation5 + $0x58] sm:$0x77]
    %v67 = vld [vmem:[#allocation5 + $0x60] sm:$0x77]
    %v68 = vld [vmem:[#allocation5 + $0x68] sm:$0x77]
    %v69 = vld [vmem:[#allocation5 + $0x70] sm:$0x77]
    %v70 = vld [vmem:[#allocation5 + $0x78] sm:$0x77]
    %v71 = vld [vmem:[#allocation5 + $0x80] sm:$0x77]
    %v72 = vld [vmem:[#allocation5 + $0x88] sm:$0x77]
    %v73 = vld [vmem:[#allocation5 + $0x90] sm:$0x77]
    %v74 = vld [vmem:[#allocation5 + $0x98] sm:$0x77]
    %v75 = vld [vmem:[#allocation5 + $0xa0] sm:$0x77]
    %v76 = vld [vmem:[#allocation5 + $0xa8] sm:$0x77]
    %v77 = vld [vmem:[#allocation5 + $0xb0] sm:$0x77]
    %v78 = vld [vmem:[#allocation5 + $0xb8] sm:$0x77]
    %v79 = vld [vmem:[#allocation3] ss:$8 sm:$0xf]
    %v80 = vld [vmem:[#allocation3] ss:$8 sm:$0xf0]
    %v81 = vor.u32 %v79, %v80
    %s82 = scalar_lea.vmem [#allocation3], 128
    %v83 = vld [vmem:[%s82] ss:$8 sm:$0xf]
    %v84 = vld [vmem:[%s82] ss:$8 sm:$0xf0]
    %v85 = vor.u32 %v83, %v84
    %s86 = scalar_lea.vmem [#allocation3], 256
    %v87 = vld [vmem:[%s86] ss:$8 sm:$0xf]
    %v88 = vld [vmem:[%s86] ss:$8 sm:$0xf0]
    %v89 = vor.u32 %v87, %v88
    %s90 = scalar_lea.vmem [#allocation3], 384
    %v91 = vld [vmem:[%s90] ss:$8 sm:$0xf]
    %v92 = vld [vmem:[%s90] ss:$8 sm:$0xf0]
    %v93 = vor.u32 %v91, %v92
    %s94 = scalar_lea.vmem [#allocation3], 512
    %v95 = vld [vmem:[%s94] ss:$8 sm:$0xf]
    %v96 = vld [vmem:[%s94] ss:$8 sm:$0xf0]
    %v97 = vor.u32 %v95, %v96
    %s98 = scalar_lea.vmem [#allocation3], 640
    %v99 = vld [vmem:[%s98] ss:$8 sm:$0xf]
    %v100 = vld [vmem:[%s98] ss:$8 sm:$0xf0]
    %v101 = vor.u32 %v99, %v100
    %vm102 = vcmp.eq.s32.totalorder %v55, 0
    %vm103 = vcmp.eq.s32.totalorder %v56, 0
    %vm104 = vcmp.eq.s32.totalorder %v57, 0
    %vm105 = vcmp.eq.s32.totalorder %v58, 0
    %vm106 = vcmp.eq.s32.totalorder %v59, 0
    %vm107 = vcmp.eq.s32.totalorder %v60, 0
    %vm108 = vcmp.eq.s32.totalorder %v61, 0
    %vm109 = vcmp.eq.s32.totalorder %v62, 0
    %vm110 = vcmp.eq.s32.totalorder %v63, 0
    %vm111 = vcmp.eq.s32.totalorder %v64, 0
    %vm112 = vcmp.eq.s32.totalorder %v65, 0
    %vm113 = vcmp.eq.s32.totalorder %v66, 0
    %vm114 = vcmp.eq.s32.totalorder %v67, 0
    %vm115 = vcmp.eq.s32.totalorder %v68, 0
    %vm116 = vcmp.eq.s32.totalorder %v69, 0
    %vm117 = vcmp.eq.s32.totalorder %v70, 0
    %vm118 = vcmp.eq.s32.totalorder %v71, 0
    %vm119 = vcmp.eq.s32.totalorder %v72, 0
    %vm120 = vcmp.eq.s32.totalorder %v73, 0
    %vm121 = vcmp.eq.s32.totalorder %v74, 0
    %vm122 = vcmp.eq.s32.totalorder %v75, 0
    %vm123 = vcmp.eq.s32.totalorder %v76, 0
    %vm124 = vcmp.eq.s32.totalorder %v77, 0
    %vm125 = vcmp.eq.s32.totalorder %v78, 0
    %v132 = vlaneseq
    %v133 = vshrl.u32 %v132, 7
    %v134 = vsub.s32 0, %v133
    %v135 = vrot.slane %v81, %v134
    %v136 = vlaneseq
    %v137 = vshrl.u32 %v136, 7
    %v138 = vsub.s32 1, %v137
    %v139 = vrot.slane %v81, %v138
    %v140 = vlaneseq
    %v141 = vshrl.u32 %v140, 7
    %v142 = vsub.s32 2, %v141
    %v143 = vrot.slane %v81, %v142
    %v144 = vlaneseq
    %v145 = vshrl.u32 %v144, 7
    %v146 = vsub.s32 3, %v145
    %v147 = vrot.slane %v81, %v146
    %v148 = vlaneseq
    %v149 = vshrl.u32 %v148, 7
    %v150 = vsub.s32 4, %v149
    %v151 = vrot.slane %v81, %v150
    %v152 = vlaneseq
    %v153 = vshrl.u32 %v152, 7
    %v154 = vsub.s32 5, %v153
    %v155 = vrot.slane %v81, %v154
    %v156 = vlaneseq
    %v157 = vshrl.u32 %v156, 7
    %v158 = vsub.s32 6, %v157
    %v159 = vrot.slane %v81, %v158
    %v160 = vlaneseq
    %v161 = vshrl.u32 %v160, 7
    %v162 = vsub.s32 7, %v161
    %v163 = vrot.slane %v81, %v162
    %v164 = vlaneseq
    %v165 = vshrl.u32 %v164, 7
    %v166 = vsub.s32 0, %v165
    %v167 = vrot.slane %v85, %v166
    %v168 = vlaneseq
    %v169 = vshrl.u32 %v168, 7
    %v170 = vsub.s32 1, %v169
    %v171 = vrot.slane %v85, %v170
    %v172 = vlaneseq
    %v173 = vshrl.u32 %v172, 7
    %v174 = vsub.s32 2, %v173
    %v175 = vrot.slane %v85, %v174
    %v176 = vlaneseq
    %v177 = vshrl.u32 %v176, 7
    %v178 = vsub.s32 3, %v177
    %v179 = vrot.slane %v85, %v178
    %v180 = vlaneseq
    %v181 = vshrl.u32 %v180, 7
    %v182 = vsub.s32 4, %v181
    %v183 = vrot.slane %v85, %v182
    %v184 = vlaneseq
    %v185 = vshrl.u32 %v184, 7
    %v186 = vsub.s32 5, %v185
    %v187 = vrot.slane %v85, %v186
    %v188 = vlaneseq
    %v189 = vshrl.u32 %v188, 7
    %v190 = vsub.s32 6, %v189
    %v191 = vrot.slane %v85, %v190
    %v192 = vlaneseq
    %v193 = vshrl.u32 %v192, 7
    %v194 = vsub.s32 7, %v193
    %v195 = vrot.slane %v85, %v194
    %v196 = vlaneseq
    %v197 = vshrl.u32 %v196, 7
    %v198 = vsub.s32 0, %v197
    %v199 = vrot.slane %v89, %v198
    %v200 = vlaneseq
    %v201 = vshrl.u32 %v200, 7
    %v202 = vsub.s32 1, %v201
    %v203 = vrot.slane %v89, %v202
    %v204 = vlaneseq
    %v205 = vshrl.u32 %v204, 7
    %v206 = vsub.s32 2, %v205
    %v207 = vrot.slane %v89, %v206
    %v208 = vlaneseq
    %v209 = vshrl.u32 %v208, 7
    %v210 = vsub.s32 3, %v209
    %v211 = vrot.slane %v89, %v210
    %v212 = vlaneseq
    %v213 = vshrl.u32 %v212, 7
    %v214 = vsub.s32 4, %v213
    %v215 = vrot.slane %v89, %v214
    %v216 = vlaneseq
    %v217 = vshrl.u32 %v216, 7
    %v218 = vsub.s32 5, %v217
    %v219 = vrot.slane %v89, %v218
    %v220 = vlaneseq
    %v221 = vshrl.u32 %v220, 7
    %v222 = vsub.s32 6, %v221
    %v223 = vrot.slane %v89, %v222
    %v224 = vlaneseq
    %v225 = vshrl.u32 %v224, 7
    %v226 = vsub.s32 7, %v225
    %v227 = vrot.slane %v89, %v226
    %v228 = vlaneseq
    %v229 = vshrl.u32 %v228, 7
    %v230 = vsub.s32 0, %v229
    %v231 = vrot.slane %v93, %v230
    %v232 = vlaneseq
    %v233 = vshrl.u32 %v232, 7
    %v234 = vsub.s32 1, %v233
    %v235 = vrot.slane %v93, %v234
    %v236 = vlaneseq
    %v237 = vshrl.u32 %v236, 7
    %v238 = vsub.s32 2, %v237
    %v239 = vrot.slane %v93, %v238
    %v240 = vlaneseq
    %v241 = vshrl.u32 %v240, 7
    %v242 = vsub.s32 3, %v241
    %v243 = vrot.slane %v93, %v242
    %v244 = vlaneseq
    %v245 = vshrl.u32 %v244, 7
    %v246 = vsub.s32 4, %v245
    %v247 = vrot.slane %v93, %v246
    %v248 = vlaneseq
    %v249 = vshrl.u32 %v248, 7
    %v250 = vsub.s32 5, %v249
    %v251 = vrot.slane %v93, %v250
    %v252 = vlaneseq
    %v253 = vshrl.u32 %v252, 7
    %v254 = vsub.s32 6, %v253
    %v255 = vrot.slane %v93, %v254
    %v256 = vlaneseq
    %v257 = vshrl.u32 %v256, 7
    %v258 = vsub.s32 7, %v257
    %v259 = vrot.slane %v93, %v258
    %v260 = vlaneseq
    %v261 = vshrl.u32 %v260, 7
    %v262 = vsub.s32 0, %v261
    %v263 = vrot.slane %v97, %v262
    %v264 = vlaneseq
    %v265 = vshrl.u32 %v264, 7
    %v266 = vsub.s32 1, %v265
    %v267 = vrot.slane %v97, %v266
    %v268 = vlaneseq
    %v269 = vshrl.u32 %v268, 7
    %v270 = vsub.s32 2, %v269
    %v271 = vrot.slane %v97, %v270
    %v272 = vlaneseq
    %v273 = vshrl.u32 %v272, 7
    %v274 = vsub.s32 3, %v273
    %v275 = vrot.slane %v97, %v274
    %v276 = vlaneseq
    %v277 = vshrl.u32 %v276, 7
    %v278 = vsub.s32 4, %v277
    %v279 = vrot.slane %v97, %v278
    %v280 = vlaneseq
    %v281 = vshrl.u32 %v280, 7
    %v282 = vsub.s32 5, %v281
    %v283 = vrot.slane %v97, %v282
    %v284 = vlaneseq
    %v285 = vshrl.u32 %v284, 7
    %v286 = vsub.s32 6, %v285
    %v287 = vrot.slane %v97, %v286
    %v288 = vlaneseq
    %v289 = vshrl.u32 %v288, 7
    %v290 = vsub.s32 7, %v289
    %v291 = vrot.slane %v97, %v290
    %v292 = vlaneseq
    %v293 = vshrl.u32 %v292, 7
    %v294 = vsub.s32 0, %v293
    %v295 = vrot.slane %v101, %v294
    %v296 = vlaneseq
    %v297 = vshrl.u32 %v296, 7
    %v298 = vsub.s32 1, %v297
    %v299 = vrot.slane %v101, %v298
    %v300 = vlaneseq
    %v301 = vshrl.u32 %v300, 7
    %v302 = vsub.s32 2, %v301
    %v303 = vrot.slane %v101, %v302
    %v304 = vlaneseq
    %v305 = vshrl.u32 %v304, 7
    %v306 = vsub.s32 3, %v305
    %v307 = vrot.slane %v101, %v306
    %v308 = vlaneseq
    %v309 = vshrl.u32 %v308, 7
    %v310 = vsub.s32 4, %v309
    %v311 = vrot.slane %v101, %v310
    %v312 = vlaneseq
    %v313 = vshrl.u32 %v312, 7
    %v314 = vsub.s32 5, %v313
    %v315 = vrot.slane %v101, %v314
    %v316 = vlaneseq
    %v317 = vshrl.u32 %v316, 7
    %v318 = vsub.s32 6, %v317
    %v319 = vrot.slane %v101, %v318
    %v320 = vlaneseq
    %v321 = vshrl.u32 %v320, 7
    %v322 = vsub.s32 7, %v321
    %v323 = vrot.slane %v101, %v322
    %v324 = vcombine.low %v135, %v139
    %v325 = vcombine.low %v143, %v147
    %v326 = vcombine.low %v151, %v155
    %v327 = vcombine.low %v159, %v163
    %v328 = vcombine.low %v167, %v171
    %v329 = vcombine.low %v175, %v179
    %v330 = vcombine.low %v183, %v187
    %v331 = vcombine.low %v191, %v195
    %v332 = vcombine.low %v199, %v203
    %v333 = vcombine.low %v207, %v211
    %v334 = vcombine.low %v215, %v219
    %v335 = vcombine.low %v223, %v227
    %v336 = vcombine.low %v231, %v235
    %v337 = vcombine.low %v239, %v243
    %v338 = vcombine.low %v247, %v251
    %v339 = vcombine.low %v255, %v259
    %v340 = vcombine.low %v263, %v267
    %v341 = vcombine.low %v271, %v275
    %v342 = vcombine.low %v279, %v283
    %v343 = vcombine.low %v287, %v291
    %v344 = vcombine.low %v295, %v299
    %v345 = vcombine.low %v303, %v307
    %v346 = vcombine.low %v311, %v315
    %v347 = vcombine.low %v319, %v323
    %v372 = vsel %vm102, %v324, 0.0
    %v373 = vsel %vm103, %v325, 0.0
    %v374 = vsel %vm104, %v326, 0.0
    %v375 = vsel %vm105, %v327, 0.0
    %v376 = vsel %vm106, %v328, 0.0
    %v377 = vsel %vm107, %v329, 0.0
    %v378 = vsel %vm108, %v330, 0.0
    %v379 = vsel %vm109, %v331, 0.0
    %v380 = vsel %vm110, %v332, 0.0
    %v381 = vsel %vm111, %v333, 0.0
    %v382 = vsel %vm112, %v334, 0.0
    %v383 = vsel %vm113, %v335, 0.0
    %v384 = vsel %vm114, %v336, 0.0
    %v385 = vsel %vm115, %v337, 0.0
    %v386 = vsel %vm116, %v338, 0.0
    %v387 = vsel %vm117, %v339, 0.0
    %v388 = vsel %vm118, %v340, 0.0
    %v389 = vsel %vm119, %v341, 0.0
    %v390 = vsel %vm120, %v342, 0.0
    %v391 = vsel %vm121, %v343, 0.0
    %v392 = vsel %vm122, %v344, 0.0
    %v393 = vsel %vm123, %v345, 0.0
    %v394 = vsel %vm124, %v346, 0.0
    %v395 = vsel %vm125, %v347, 0.0
    %s396 = scalar_lea.vmem [#allocation3], 1
    %v397 = vld [vmem:[%s396] ss:$8 sm:$0xf]
    %v398 = vld [vmem:[%s396] ss:$8 sm:$0xf0]
    %v399 = vor.u32 %v397, %v398
    %s400 = scalar_lea.vmem [#allocation3], 129
    %v401 = vld [vmem:[%s400] ss:$8 sm:$0xf]
    %v402 = vld [vmem:[%s400] ss:$8 sm:$0xf0]
    %v403 = vor.u32 %v401, %v402
    %s404 = scalar_lea.vmem [#allocation3], 257
    %v405 = vld [vmem:[%s404] ss:$8 sm:$0xf]
    %v406 = vld [vmem:[%s404] ss:$8 sm:$0xf0]
    %v407 = vor.u32 %v405, %v406
    %s408 = scalar_lea.vmem [#allocation3], 385
    %v409 = vld [vmem:[%s408] ss:$8 sm:$0xf]
    %v410 = vld [vmem:[%s408] ss:$8 sm:$0xf0]
    %v411 = vor.u32 %v409, %v410
    %s412 = scalar_lea.vmem [#allocation3], 513
    %v413 = vld [vmem:[%s412] ss:$8 sm:$0xf]
    %v414 = vld [vmem:[%s412] ss:$8 sm:$0xf0]
    %v415 = vor.u32 %v413, %v414
    %s416 = scalar_lea.vmem [#allocation3], 641
    %v417 = vld [vmem:[%s416] ss:$8 sm:$0xf]
    %v418 = vld [vmem:[%s416] ss:$8 sm:$0xf0]
    %v419 = vor.u32 %v417, %v418
    %vm420 = vcmp.eq.s32.totalorder %v55, 1
    %vm421 = vcmp.eq.s32.totalorder %v56, 1
    %vm422 = vcmp.eq.s32.totalorder %v57, 1
    %vm423 = vcmp.eq.s32.totalorder %v58, 1
    %vm424 = vcmp.eq.s32.totalorder %v59, 1
    %vm425 = vcmp.eq.s32.totalorder %v60, 1
    %vm426 = vcmp.eq.s32.totalorder %v61, 1
    %vm427 = vcmp.eq.s32.totalorder %v62, 1
    %vm428 = vcmp.eq.s32.totalorder %v63, 1
    %vm429 = vcmp.eq.s32.totalorder %v64, 1
    %vm430 = vcmp.eq.s32.totalorder %v65, 1
    %vm431 = vcmp.eq.s32.totalorder %v66, 1
    %vm432 = vcmp.eq.s32.totalorder %v67, 1
    %vm433 = vcmp.eq.s32.totalorder %v68, 1
    %vm434 = vcmp.eq.s32.totalorder %v69, 1
    %vm435 = vcmp.eq.s32.totalorder %v70, 1
    %vm436 = vcmp.eq.s32.totalorder %v71, 1
    %vm437 = vcmp.eq.s32.totalorder %v72, 1
    %vm438 = vcmp.eq.s32.totalorder %v73, 1
    %vm439 = vcmp.eq.s32.totalorder %v74, 1
    %vm440 = vcmp.eq.s32.totalorder %v75, 1
    %vm441 = vcmp.eq.s32.totalorder %v76, 1
    %vm442 = vcmp.eq.s32.totalorder %v77, 1
    %vm443 = vcmp.eq.s32.totalorder %v78, 1
    %v450 = vlaneseq
    %v451 = vshrl.u32 %v450, 7
    %v452 = vsub.s32 0, %v451
    %v453 = vrot.slane %v399, %v452
    %v454 = vlaneseq
    %v455 = vshrl.u32 %v454, 7
    %v456 = vsub.s32 1, %v455
    %v457 = vrot.slane %v399, %v456
    %v458 = vlaneseq
    %v459 = vshrl.u32 %v458, 7
    %v460 = vsub.s32 2, %v459
    %v461 = vrot.slane %v399, %v460
    %v462 = vlaneseq
    %v463 = vshrl.u32 %v462, 7
    %v464 = vsub.s32 3, %v463
    %v465 = vrot.slane %v399, %v464
    %v466 = vlaneseq
    %v467 = vshrl.u32 %v466, 7
    %v468 = vsub.s32 4, %v467
    %v469 = vrot.slane %v399, %v468
    %v470 = vlaneseq
    %v471 = vshrl.u32 %v470, 7
    %v472 = vsub.s32 5, %v471
    %v473 = vrot.slane %v399, %v472
    %v474 = vlaneseq
    %v475 = vshrl.u32 %v474, 7
    %v476 = vsub.s32 6, %v475
    %v477 = vrot.slane %v399, %v476
    %v478 = vlaneseq
    %v479 = vshrl.u32 %v478, 7
    %v480 = vsub.s32 7, %v479
    %v481 = vrot.slane %v399, %v480
    %v482 = vlaneseq
    %v483 = vshrl.u32 %v482, 7
    %v484 = vsub.s32 0, %v483
    %v485 = vrot.slane %v403, %v484
    %v486 = vlaneseq
    %v487 = vshrl.u32 %v486, 7
    %v488 = vsub.s32 1, %v487
    %v489 = vrot.slane %v403, %v488
    %v490 = vlaneseq
    %v491 = vshrl.u32 %v490, 7
    %v492 = vsub.s32 2, %v491
    %v493 = vrot.slane %v403, %v492
    %v494 = vlaneseq
    %v495 = vshrl.u32 %v494, 7
    %v496 = vsub.s32 3, %v495
    %v497 = vrot.slane %v403, %v496
    %v498 = vlaneseq
    %v499 = vshrl.u32 %v498, 7
    %v500 = vsub.s32 4, %v499
    %v501 = vrot.slane %v403, %v500
    %v502 = vlaneseq
    %v503 = vshrl.u32 %v502, 7
    %v504 = vsub.s32 5, %v503
    %v505 = vrot.slane %v403, %v504
    %v506 = vlaneseq
    %v507 = vshrl.u32 %v506, 7
    %v508 = vsub.s32 6, %v507
    %v509 = vrot.slane %v403, %v508
    %v510 = vlaneseq
    %v511 = vshrl.u32 %v510, 7
    %v512 = vsub.s32 7, %v511
    %v513 = vrot.slane %v403, %v512
    %v514 = vlaneseq
    %v515 = vshrl.u32 %v514, 7
    %v516 = vsub.s32 0, %v515
    %v517 = vrot.slane %v407, %v516
    %v518 = vlaneseq
    %v519 = vshrl.u32 %v518, 7
    %v520 = vsub.s32 1, %v519
    %v521 = vrot.slane %v407, %v520
    %v522 = vlaneseq
    %v523 = vshrl.u32 %v522, 7
    %v524 = vsub.s32 2, %v523
    %v525 = vrot.slane %v407, %v524
    %v526 = vlaneseq
    %v527 = vshrl.u32 %v526, 7
    %v528 = vsub.s32 3, %v527
    %v529 = vrot.slane %v407, %v528
    %v530 = vlaneseq
    %v531 = vshrl.u32 %v530, 7
    %v532 = vsub.s32 4, %v531
    %v533 = vrot.slane %v407, %v532
    %v534 = vlaneseq
    %v535 = vshrl.u32 %v534, 7
    %v536 = vsub.s32 5, %v535
    %v537 = vrot.slane %v407, %v536
    %v538 = vlaneseq
    %v539 = vshrl.u32 %v538, 7
    %v540 = vsub.s32 6, %v539
    %v541 = vrot.slane %v407, %v540
    %v542 = vlaneseq
    %v543 = vshrl.u32 %v542, 7
    %v544 = vsub.s32 7, %v543
    %v545 = vrot.slane %v407, %v544
    %v546 = vlaneseq
    %v547 = vshrl.u32 %v546, 7
    %v548 = vsub.s32 0, %v547
    %v549 = vrot.slane %v411, %v548
    %v550 = vlaneseq
    %v551 = vshrl.u32 %v550, 7
    %v552 = vsub.s32 1, %v551
    %v553 = vrot.slane %v411, %v552
    %v554 = vlaneseq
    %v555 = vshrl.u32 %v554, 7
    %v556 = vsub.s32 2, %v555
    %v557 = vrot.slane %v411, %v556
    %v558 = vlaneseq
    %v559 = vshrl.u32 %v558, 7
    %v560 = vsub.s32 3, %v559
    %v561 = vrot.slane %v411, %v560
    %v562 = vlaneseq
    %v563 = vshrl.u32 %v562, 7
    %v564 = vsub.s32 4, %v563
    %v565 = vrot.slane %v411, %v564
    %v566 = vlaneseq
    %v567 = vshrl.u32 %v566, 7
    %v568 = vsub.s32 5, %v567
    %v569 = vrot.slane %v411, %v568
    %v570 = vlaneseq
    %v571 = vshrl.u32 %v570, 7
    %v572 = vsub.s32 6, %v571
    %v573 = vrot.slane %v411, %v572
    %v574 = vlaneseq
    %v575 = vshrl.u32 %v574, 7
    %v576 = vsub.s32 7, %v575
    %v577 = vrot.slane %v411, %v576
    %v578 = vlaneseq
    %v579 = vshrl.u32 %v578, 7
    %v580 = vsub.s32 0, %v579
    %v581 = vrot.slane %v415, %v580
    %v582 = vlaneseq
    %v583 = vshrl.u32 %v582, 7
    %v584 = vsub.s32 1, %v583
    %v585 = vrot.slane %v415, %v584
    %v586 = vlaneseq
    %v587 = vshrl.u32 %v586, 7
    %v588 = vsub.s32 2, %v587
    %v589 = vrot.slane %v415, %v588
    %v590 = vlaneseq
    %v591 = vshrl.u32 %v590, 7
    %v592 = vsub.s32 3, %v591
    %v593 = vrot.slane %v415, %v592
    %v594 = vlaneseq
    %v595 = vshrl.u32 %v594, 7
    %v596 = vsub.s32 4, %v595
    %v597 = vrot.slane %v415, %v596
    %v598 = vlaneseq
    %v599 = vshrl.u32 %v598, 7
    %v600 = vsub.s32 5, %v599
    %v601 = vrot.slane %v415, %v600
    %v602 = vlaneseq
    %v603 = vshrl.u32 %v602, 7
    %v604 = vsub.s32 6, %v603
    %v605 = vrot.slane %v415, %v604
    %v606 = vlaneseq
    %v607 = vshrl.u32 %v606, 7
    %v608 = vsub.s32 7, %v607
    %v609 = vrot.slane %v415, %v608
    %v610 = vlaneseq
    %v611 = vshrl.u32 %v610, 7
    %v612 = vsub.s32 0, %v611
    %v613 = vrot.slane %v419, %v612
    %v614 = vlaneseq
    %v615 = vshrl.u32 %v614, 7
    %v616 = vsub.s32 1, %v615
    %v617 = vrot.slane %v419, %v616
    %v618 = vlaneseq
    %v619 = vshrl.u32 %v618, 7
    %v620 = vsub.s32 2, %v619
    %v621 = vrot.slane %v419, %v620
    %v622 = vlaneseq
    %v623 = vshrl.u32 %v622, 7
    %v624 = vsub.s32 3, %v623
    %v625 = vrot.slane %v419, %v624
    %v626 = vlaneseq
    %v627 = vshrl.u32 %v626, 7
    %v628 = vsub.s32 4, %v627
    %v629 = vrot.slane %v419, %v628
    %v630 = vlaneseq
    %v631 = vshrl.u32 %v630, 7
    %v632 = vsub.s32 5, %v631
    %v633 = vrot.slane %v419, %v632
    %v634 = vlaneseq
    %v635 = vshrl.u32 %v634, 7
    %v636 = vsub.s32 6, %v635
    %v637 = vrot.slane %v419, %v636
    %v638 = vlaneseq
    %v639 = vshrl.u32 %v638, 7
    %v640 = vsub.s32 7, %v639
    %v641 = vrot.slane %v419, %v640
    %v642 = vcombine.low %v453, %v457
    %v643 = vcombine.low %v461, %v465
    %v644 = vcombine.low %v469, %v473
    %v645 = vcombine.low %v477, %v481
    %v646 = vcombine.low %v485, %v489
    %v647 = vcombine.low %v493, %v497
    %v648 = vcombine.low %v501, %v505
    %v649 = vcombine.low %v509, %v513
    %v650 = vcombine.low %v517, %v521
    %v651 = vcombine.low %v525, %v529
    %v652 = vcombine.low %v533, %v537
    %v653 = vcombine.low %v541, %v545
    %v654 = vcombine.low %v549, %v553
    %v655 = vcombine.low %v557, %v561
    %v656 = vcombine.low %v565, %v569
    %v657 = vcombine.low %v573, %v577
    %v658 = vcombine.low %v581, %v585
    %v659 = vcombine.low %v589, %v593
    %v660 = vcombine.low %v597, %v601
    %v661 = vcombine.low %v605, %v609
    %v662 = vcombine.low %v613, %v617
    %v663 = vcombine.low %v621, %v625
    %v664 = vcombine.low %v629, %v633
    %v665 = vcombine.low %v637, %v641
    %v690 = vsel %vm420, %v642, %v372
    %v691 = vsel %vm421, %v643, %v373
    %v692 = vsel %vm422, %v644, %v374
    %v693 = vsel %vm423, %v645, %v375
    %v694 = vsel %vm424, %v646, %v376
    %v695 = vsel %vm425, %v647, %v377
    %v696 = vsel %vm426, %v648, %v378
    %v697 = vsel %vm427, %v649, %v379
    %v698 = vsel %vm428, %v650, %v380
    %v699 = vsel %vm429, %v651, %v381
    %v700 = vsel %vm430, %v652, %v382
    %v701 = vsel %vm431, %v653, %v383
    %v702 = vsel %vm432, %v654, %v384
    %v703 = vsel %vm433, %v655, %v385
    %v704 = vsel %vm434, %v656, %v386
    %v705 = vsel %vm435, %v657, %v387
    %v706 = vsel %vm436, %v658, %v388
    %v707 = vsel %vm437, %v659, %v389
    %v708 = vsel %vm438, %v660, %v390
    %v709 = vsel %vm439, %v661, %v391
    %v710 = vsel %vm440, %v662, %v392
    %v711 = vsel %vm441, %v663, %v393
    %v712 = vsel %vm442, %v664, %v394
    %v713 = vsel %vm443, %v665, %v395
    %s714 = scalar_lea.vmem [#allocation3], 2
    %v715 = vld [vmem:[%s714] ss:$8 sm:$0xf]
    %v716 = vld [vmem:[%s714] ss:$8 sm:$0xf0]
    %v717 = vor.u32 %v715, %v716
    %s718 = scalar_lea.vmem [#allocation3], 130
    %v719 = vld [vmem:[%s718] ss:$8 sm:$0xf]
    %v720 = vld [vmem:[%s718] ss:$8 sm:$0xf0]
    %v721 = vor.u32 %v719, %v720
    %s722 = scalar_lea.vmem [#allocation3], 258
    %v723 = vld [vmem:[%s722] ss:$8 sm:$0xf]
    %v724 = vld [vmem:[%s722] ss:$8 sm:$0xf0]
    %v725 = vor.u32 %v723, %v724
    %s726 = scalar_lea.vmem [#allocation3], 386
    %v727 = vld [vmem:[%s726] ss:$8 sm:$0xf]
    %v728 = vld [vmem:[%s726] ss:$8 sm:$0xf0]
    %v729 = vor.u32 %v727, %v728
    %s730 = scalar_lea.vmem [#allocation3], 514
    %v731 = vld [vmem:[%s730] ss:$8 sm:$0xf]
    %v732 = vld [vmem:[%s730] ss:$8 sm:$0xf0]
    %v733 = vor.u32 %v731, %v732
    %s734 = scalar_lea.vmem [#allocation3], 642
    %v735 = vld [vmem:[%s734] ss:$8 sm:$0xf]
    %v736 = vld [vmem:[%s734] ss:$8 sm:$0xf0]
    %v737 = vor.u32 %v735, %v736
    %vm738 = vcmp.eq.s32.totalorder %v55, 2
    %vm739 = vcmp.eq.s32.totalorder %v56, 2
    %vm740 = vcmp.eq.s32.totalorder %v57, 2
    %vm741 = vcmp.eq.s32.totalorder %v58, 2
    %vm742 = vcmp.eq.s32.totalorder %v59, 2
    %vm743 = vcmp.eq.s32.totalorder %v60, 2
    %vm744 = vcmp.eq.s32.totalorder %v61, 2
    %vm745 = vcmp.eq.s32.totalorder %v62, 2
    %vm746 = vcmp.eq.s32.totalorder %v63, 2
    %vm747 = vcmp.eq.s32.totalorder %v64, 2
    %vm748 = vcmp.eq.s32.totalorder %v65, 2
    %vm749 = vcmp.eq.s32.totalorder %v66, 2
    %vm750 = vcmp.eq.s32.totalorder %v67, 2
    %vm751 = vcmp.eq.s32.totalorder %v68, 2
    %vm752 = vcmp.eq.s32.totalorder %v69, 2
    %vm753 = vcmp.eq.s32.totalorder %v70, 2
    %vm754 = vcmp.eq.s32.totalorder %v71, 2
    %vm755 = vcmp.eq.s32.totalorder %v72, 2
    %vm756 = vcmp.eq.s32.totalorder %v73, 2
    %vm757 = vcmp.eq.s32.totalorder %v74, 2
    %vm758 = vcmp.eq.s32.totalorder %v75, 2
    %vm759 = vcmp.eq.s32.totalorder %v76, 2
    %vm760 = vcmp.eq.s32.totalorder %v77, 2
    %vm761 = vcmp.eq.s32.totalorder %v78, 2
    %v768 = vlaneseq
    %v769 = vshrl.u32 %v768, 7
    %v770 = vsub.s32 0, %v769
    %v771 = vrot.slane %v717, %v770
    %v772 = vlaneseq
    %v773 = vshrl.u32 %v772, 7
    %v774 = vsub.s32 1, %v773
    %v775 = vrot.slane %v717, %v774
    %v776 = vlaneseq
    %v777 = vshrl.u32 %v776, 7
    %v778 = vsub.s32 2, %v777
    %v779 = vrot.slane %v717, %v778
    %v780 = vlaneseq
    %v781 = vshrl.u32 %v780, 7
    %v782 = vsub.s32 3, %v781
    %v783 = vrot.slane %v717, %v782
    %v784 = vlaneseq
    %v785 = vshrl.u32 %v784, 7
    %v786 = vsub.s32 4, %v785
    %v787 = vrot.slane %v717, %v786
    %v788 = vlaneseq
    %v789 = vshrl.u32 %v788, 7
    %v790 = vsub.s32 5, %v789
    %v791 = vrot.slane %v717, %v790
    %v792 = vlaneseq
    %v793 = vshrl.u32 %v792, 7
    %v794 = vsub.s32 6, %v793
    %v795 = vrot.slane %v717, %v794
    %v796 = vlaneseq
    %v797 = vshrl.u32 %v796, 7
    %v798 = vsub.s32 7, %v797
    %v799 = vrot.slane %v717, %v798
    %v800 = vlaneseq
    %v801 = vshrl.u32 %v800, 7
    %v802 = vsub.s32 0, %v801
    %v803 = vrot.slane %v721, %v802
    %v804 = vlaneseq
    %v805 = vshrl.u32 %v804, 7
    %v806 = vsub.s32 1, %v805
    %v807 = vrot.slane %v721, %v806
    %v808 = vlaneseq
    %v809 = vshrl.u32 %v808, 7
    %v810 = vsub.s32 2, %v809
    %v811 = vrot.slane %v721, %v810
    %v812 = vlaneseq
    %v813 = vshrl.u32 %v812, 7
    %v814 = vsub.s32 3, %v813
    %v815 = vrot.slane %v721, %v814
    %v816 = vlaneseq
    %v817 = vshrl.u32 %v816, 7
    %v818 = vsub.s32 4, %v817
    %v819 = vrot.slane %v721, %v818
    %v820 = vlaneseq
    %v821 = vshrl.u32 %v820, 7
    %v822 = vsub.s32 5, %v821
    %v823 = vrot.slane %v721, %v822
    %v824 = vlaneseq
    %v825 = vshrl.u32 %v824, 7
    %v826 = vsub.s32 6, %v825
    %v827 = vrot.slane %v721, %v826
    %v828 = vlaneseq
    %v829 = vshrl.u32 %v828, 7
    %v830 = vsub.s32 7, %v829
    %v831 = vrot.slane %v721, %v830
    %v832 = vlaneseq
    %v833 = vshrl.u32 %v832, 7
    %v834 = vsub.s32 0, %v833
    %v835 = vrot.slane %v725, %v834
    %v836 = vlaneseq
    %v837 = vshrl.u32 %v836, 7
    %v838 = vsub.s32 1, %v837
    %v839 = vrot.slane %v725, %v838
    %v840 = vlaneseq
    %v841 = vshrl.u32 %v840, 7
    %v842 = vsub.s32 2, %v841
    %v843 = vrot.slane %v725, %v842
    %v844 = vlaneseq
    %v845 = vshrl.u32 %v844, 7
    %v846 = vsub.s32 3, %v845
    %v847 = vrot.slane %v725, %v846
    %v848 = vlaneseq
    %v849 = vshrl.u32 %v848, 7
    %v850 = vsub.s32 4, %v849
    %v851 = vrot.slane %v725, %v850
    %v852 = vlaneseq
    %v853 = vshrl.u32 %v852, 7
    %v854 = vsub.s32 5, %v853
    %v855 = vrot.slane %v725, %v854
    %v856 = vlaneseq
    %v857 = vshrl.u32 %v856, 7
    %v858 = vsub.s32 6, %v857
    %v859 = vrot.slane %v725, %v858
    %v860 = vlaneseq
    %v861 = vshrl.u32 %v860, 7
    %v862 = vsub.s32 7, %v861
    %v863 = vrot.slane %v725, %v862
    %v864 = vlaneseq
    %v865 = vshrl.u32 %v864, 7
    %v866 = vsub.s32 0, %v865
    %v867 = vrot.slane %v729, %v866
    %v868 = vlaneseq
    %v869 = vshrl.u32 %v868, 7
    %v870 = vsub.s32 1, %v869
    %v871 = vrot.slane %v729, %v870
    %v872 = vlaneseq
    %v873 = vshrl.u32 %v872, 7
    %v874 = vsub.s32 2, %v873
    %v875 = vrot.slane %v729, %v874
    %v876 = vlaneseq
    %v877 = vshrl.u32 %v876, 7
    %v878 = vsub.s32 3, %v877
    %v879 = vrot.slane %v729, %v878
    %v880 = vlaneseq
    %v881 = vshrl.u32 %v880, 7
    %v882 = vsub.s32 4, %v881
    %v883 = vrot.slane %v729, %v882
    %v884 = vlaneseq
    %v885 = vshrl.u32 %v884, 7
    %v886 = vsub.s32 5, %v885
    %v887 = vrot.slane %v729, %v886
    %v888 = vlaneseq
    %v889 = vshrl.u32 %v888, 7
    %v890 = vsub.s32 6, %v889
    %v891 = vrot.slane %v729, %v890
    %v892 = vlaneseq
    %v893 = vshrl.u32 %v892, 7
    %v894 = vsub.s32 7, %v893
    %v895 = vrot.slane %v729, %v894
    %v896 = vlaneseq
    %v897 = vshrl.u32 %v896, 7
    %v898 = vsub.s32 0, %v897
    %v899 = vrot.slane %v733, %v898
    %v900 = vlaneseq
    %v901 = vshrl.u32 %v900, 7
    %v902 = vsub.s32 1, %v901
    %v903 = vrot.slane %v733, %v902
    %v904 = vlaneseq
    %v905 = vshrl.u32 %v904, 7
    %v906 = vsub.s32 2, %v905
    %v907 = vrot.slane %v733, %v906
    %v908 = vlaneseq
    %v909 = vshrl.u32 %v908, 7
    %v910 = vsub.s32 3, %v909
    %v911 = vrot.slane %v733, %v910
    %v912 = vlaneseq
    %v913 = vshrl.u32 %v912, 7
    %v914 = vsub.s32 4, %v913
    %v915 = vrot.slane %v733, %v914
    %v916 = vlaneseq
    %v917 = vshrl.u32 %v916, 7
    %v918 = vsub.s32 5, %v917
    %v919 = vrot.slane %v733, %v918
    %v920 = vlaneseq
    %v921 = vshrl.u32 %v920, 7
    %v922 = vsub.s32 6, %v921
    %v923 = vrot.slane %v733, %v922
    %v924 = vlaneseq
    %v925 = vshrl.u32 %v924, 7
    %v926 = vsub.s32 7, %v925
    %v927 = vrot.slane %v733, %v926
    %v928 = vlaneseq
    %v929 = vshrl.u32 %v928, 7
    %v930 = vsub.s32 0, %v929
    %v931 = vrot.slane %v737, %v930
    %v932 = vlaneseq
    %v933 = vshrl.u32 %v932, 7
    %v934 = vsub.s32 1, %v933
    %v935 = vrot.slane %v737, %v934
    %v936 = vlaneseq
    %v937 = vshrl.u32 %v936, 7
    %v938 = vsub.s32 2, %v937
    %v939 = vrot.slane %v737, %v938
    %v940 = vlaneseq
    %v941 = vshrl.u32 %v940, 7
    %v942 = vsub.s32 3, %v941
    %v943 = vrot.slane %v737, %v942
    %v944 = vlaneseq
    %v945 = vshrl.u32 %v944, 7
    %v946 = vsub.s32 4, %v945
    %v947 = vrot.slane %v737, %v946
    %v948 = vlaneseq
    %v949 = vshrl.u32 %v948, 7
    %v950 = vsub.s32 5, %v949
    %v951 = vrot.slane %v737, %v950
    %v952 = vlaneseq
    %v953 = vshrl.u32 %v952, 7
    %v954 = vsub.s32 6, %v953
    %v955 = vrot.slane %v737, %v954
    %v956 = vlaneseq
    %v957 = vshrl.u32 %v956, 7
    %v958 = vsub.s32 7, %v957
    %v959 = vrot.slane %v737, %v958
    %v960 = vcombine.low %v771, %v775
    %v961 = vcombine.low %v779, %v783
    %v962 = vcombine.low %v787, %v791
    %v963 = vcombine.low %v795, %v799
    %v964 = vcombine.low %v803, %v807
    %v965 = vcombine.low %v811, %v815
    %v966 = vcombine.low %v819, %v823
    %v967 = vcombine.low %v827, %v831
    %v968 = vcombine.low %v835, %v839
    %v969 = vcombine.low %v843, %v847
    %v970 = vcombine.low %v851, %v855
    %v971 = vcombine.low %v859, %v863
    %v972 = vcombine.low %v867, %v871
    %v973 = vcombine.low %v875, %v879
    %v974 = vcombine.low %v883, %v887
    %v975 = vcombine.low %v891, %v895
    %v976 = vcombine.low %v899, %v903
    %v977 = vcombine.low %v907, %v911
    %v978 = vcombine.low %v915, %v919
    %v979 = vcombine.low %v923, %v927
    %v980 = vcombine.low %v931, %v935
    %v981 = vcombine.low %v939, %v943
    %v982 = vcombine.low %v947, %v951
    %v983 = vcombine.low %v955, %v959
    %v1008 = vsel %vm738, %v960, %v690
    %v1009 = vsel %vm739, %v961, %v691
    %v1010 = vsel %vm740, %v962, %v692
    %v1011 = vsel %vm741, %v963, %v693
    %v1012 = vsel %vm742, %v964, %v694
    %v1013 = vsel %vm743, %v965, %v695
    %v1014 = vsel %vm744, %v966, %v696
    %v1015 = vsel %vm745, %v967, %v697
    %v1016 = vsel %vm746, %v968, %v698
    %v1017 = vsel %vm747, %v969, %v699
    %v1018 = vsel %vm748, %v970, %v700
    %v1019 = vsel %vm749, %v971, %v701
    %v1020 = vsel %vm750, %v972, %v702
    %v1021 = vsel %vm751, %v973, %v703
    %v1022 = vsel %vm752, %v974, %v704
    %v1023 = vsel %vm753, %v975, %v705
    %v1024 = vsel %vm754, %v976, %v706
    %v1025 = vsel %vm755, %v977, %v707
    %v1026 = vsel %vm756, %v978, %v708
    %v1027 = vsel %vm757, %v979, %v709
    %v1028 = vsel %vm758, %v980, %v710
    %v1029 = vsel %vm759, %v981, %v711
    %v1030 = vsel %vm760, %v982, %v712
    %v1031 = vsel %vm761, %v983, %v713
    %s1032 = scalar_lea.vmem [#allocation3], 3
    %v1033 = vld [vmem:[%s1032] ss:$8 sm:$0xf]
    %v1034 = vld [vmem:[%s1032] ss:$8 sm:$0xf0]
    %v1035 = vor.u32 %v1033, %v1034
    %s1036 = scalar_lea.vmem [#allocation3], 131
    %v1037 = vld [vmem:[%s1036] ss:$8 sm:$0xf]
    %v1038 = vld [vmem:[%s1036] ss:$8 sm:$0xf0]
    %v1039 = vor.u32 %v1037, %v1038
    %s1040 = scalar_lea.vmem [#allocation3], 259
    %v1041 = vld [vmem:[%s1040] ss:$8 sm:$0xf]
    %v1042 = vld [vmem:[%s1040] ss:$8 sm:$0xf0]
    %v1043 = vor.u32 %v1041, %v1042
    %s1044 = scalar_lea.vmem [#allocation3], 387
    %v1045 = vld [vmem:[%s1044] ss:$8 sm:$0xf]
    %v1046 = vld [vmem:[%s1044] ss:$8 sm:$0xf0]
    %v1047 = vor.u32 %v1045, %v1046
    %s1048 = scalar_lea.vmem [#allocation3], 515
    %v1049 = vld [vmem:[%s1048] ss:$8 sm:$0xf]
    %v1050 = vld [vmem:[%s1048] ss:$8 sm:$0xf0]
    %v1051 = vor.u32 %v1049, %v1050
    %s1052 = scalar_lea.vmem [#allocation3], 643
    %v1053 = vld [vmem:[%s1052] ss:$8 sm:$0xf]
    %v1054 = vld [vmem:[%s1052] ss:$8 sm:$0xf0]
    %v1055 = vor.u32 %v1053, %v1054
    %vm1056 = vcmp.eq.s32.totalorder %v55, 3
    %vm1057 = vcmp.eq.s32.totalorder %v56, 3
    %vm1058 = vcmp.eq.s32.totalorder %v57, 3
    %vm1059 = vcmp.eq.s32.totalorder %v58, 3
    %vm1060 = vcmp.eq.s32.totalorder %v59, 3
    %vm1061 = vcmp.eq.s32.totalorder %v60, 3
    %vm1062 = vcmp.eq.s32.totalorder %v61, 3
    %vm1063 = vcmp.eq.s32.totalorder %v62, 3
    %vm1064 = vcmp.eq.s32.totalorder %v63, 3
    %vm1065 = vcmp.eq.s32.totalorder %v64, 3
    %vm1066 = vcmp.eq.s32.totalorder %v65, 3
    %vm1067 = vcmp.eq.s32.totalorder %v66, 3
    %vm1068 = vcmp.eq.s32.totalorder %v67, 3
    %vm1069 = vcmp.eq.s32.totalorder %v68, 3
    %vm1070 = vcmp.eq.s32.totalorder %v69, 3
    %vm1071 = vcmp.eq.s32.totalorder %v70, 3
    %vm1072 = vcmp.eq.s32.totalorder %v71, 3
    %vm1073 = vcmp.eq.s32.totalorder %v72, 3
    %vm1074 = vcmp.eq.s32.totalorder %v73, 3
    %vm1075 = vcmp.eq.s32.totalorder %v74, 3
    %vm1076 = vcmp.eq.s32.totalorder %v75, 3
    %vm1077 = vcmp.eq.s32.totalorder %v76, 3
    %vm1078 = vcmp.eq.s32.totalorder %v77, 3
    %vm1079 = vcmp.eq.s32.totalorder %v78, 3
    %v1086 = vlaneseq
    %v1087 = vshrl.u32 %v1086, 7
    %v1088 = vsub.s32 0, %v1087
    %v1089 = vrot.slane %v1035, %v1088
    %v1090 = vlaneseq
    %v1091 = vshrl.u32 %v1090, 7
    %v1092 = vsub.s32 1, %v1091
    %v1093 = vrot.slane %v1035, %v1092
    %v1094 = vlaneseq
    %v1095 = vshrl.u32 %v1094, 7
    %v1096 = vsub.s32 2, %v1095
    %v1097 = vrot.slane %v1035, %v1096
    %v1098 = vlaneseq
    %v1099 = vshrl.u32 %v1098, 7
    %v1100 = vsub.s32 3, %v1099
    %v1101 = vrot.slane %v1035, %v1100
    %v1102 = vlaneseq
    %v1103 = vshrl.u32 %v1102, 7
    %v1104 = vsub.s32 4, %v1103
    %v1105 = vrot.slane %v1035, %v1104
    %v1106 = vlaneseq
    %v1107 = vshrl.u32 %v1106, 7
    %v1108 = vsub.s32 5, %v1107
    %v1109 = vrot.slane %v1035, %v1108
    %v1110 = vlaneseq
    %v1111 = vshrl.u32 %v1110, 7
    %v1112 = vsub.s32 6, %v1111
    %v1113 = vrot.slane %v1035, %v1112
    %v1114 = vlaneseq
    %v1115 = vshrl.u32 %v1114, 7
    %v1116 = vsub.s32 7, %v1115
    %v1117 = vrot.slane %v1035, %v1116
    %v1118 = vlaneseq
    %v1119 = vshrl.u32 %v1118, 7
    %v1120 = vsub.s32 0, %v1119
    %v1121 = vrot.slane %v1039, %v1120
    %v1122 = vlaneseq
    %v1123 = vshrl.u32 %v1122, 7
    %v1124 = vsub.s32 1, %v1123
    %v1125 = vrot.slane %v1039, %v1124
    %v1126 = vlaneseq
    %v1127 = vshrl.u32 %v1126, 7
    %v1128 = vsub.s32 2, %v1127
    %v1129 = vrot.slane %v1039, %v1128
    %v1130 = vlaneseq
    %v1131 = vshrl.u32 %v1130, 7
    %v1132 = vsub.s32 3, %v1131
    %v1133 = vrot.slane %v1039, %v1132
    %v1134 = vlaneseq
    %v1135 = vshrl.u32 %v1134, 7
    %v1136 = vsub.s32 4, %v1135
    %v1137 = vrot.slane %v1039, %v1136
    %v1138 = vlaneseq
    %v1139 = vshrl.u32 %v1138, 7
    %v1140 = vsub.s32 5, %v1139
    %v1141 = vrot.slane %v1039, %v1140
    %v1142 = vlaneseq
    %v1143 = vshrl.u32 %v1142, 7
    %v1144 = vsub.s32 6, %v1143
    %v1145 = vrot.slane %v1039, %v1144
    %v1146 = vlaneseq
    %v1147 = vshrl.u32 %v1146, 7
    %v1148 = vsub.s32 7, %v1147
    %v1149 = vrot.slane %v1039, %v1148
    %v1150 = vlaneseq
    %v1151 = vshrl.u32 %v1150, 7
    %v1152 = vsub.s32 0, %v1151
    %v1153 = vrot.slane %v1043, %v1152
    %v1154 = vlaneseq
    %v1155 = vshrl.u32 %v1154, 7
    %v1156 = vsub.s32 1, %v1155
    %v1157 = vrot.slane %v1043, %v1156
    %v1158 = vlaneseq
    %v1159 = vshrl.u32 %v1158, 7
    %v1160 = vsub.s32 2, %v1159
    %v1161 = vrot.slane %v1043, %v1160
    %v1162 = vlaneseq
    %v1163 = vshrl.u32 %v1162, 7
    %v1164 = vsub.s32 3, %v1163
    %v1165 = vrot.slane %v1043, %v1164
    %v1166 = vlaneseq
    %v1167 = vshrl.u32 %v1166, 7
    %v1168 = vsub.s32 4, %v1167
    %v1169 = vrot.slane %v1043, %v1168
    %v1170 = vlaneseq
    %v1171 = vshrl.u32 %v1170, 7
    %v1172 = vsub.s32 5, %v1171
    %v1173 = vrot.slane %v1043, %v1172
    %v1174 = vlaneseq
    %v1175 = vshrl.u32 %v1174, 7
    %v1176 = vsub.s32 6, %v1175
    %v1177 = vrot.slane %v1043, %v1176
    %v1178 = vlaneseq
    %v1179 = vshrl.u32 %v1178, 7
    %v1180 = vsub.s32 7, %v1179
    %v1181 = vrot.slane %v1043, %v1180
    %v1182 = vlaneseq
    %v1183 = vshrl.u32 %v1182, 7
    %v1184 = vsub.s32 0, %v1183
    %v1185 = vrot.slane %v1047, %v1184
    %v1186 = vlaneseq
    %v1187 = vshrl.u32 %v1186, 7
    %v1188 = vsub.s32 1, %v1187
    %v1189 = vrot.slane %v1047, %v1188
    %v1190 = vlaneseq
    %v1191 = vshrl.u32 %v1190, 7
    %v1192 = vsub.s32 2, %v1191
    %v1193 = vrot.slane %v1047, %v1192
    %v1194 = vlaneseq
    %v1195 = vshrl.u32 %v1194, 7
    %v1196 = vsub.s32 3, %v1195
    %v1197 = vrot.slane %v1047, %v1196
    %v1198 = vlaneseq
    %v1199 = vshrl.u32 %v1198, 7
    %v1200 = vsub.s32 4, %v1199
    %v1201 = vrot.slane %v1047, %v1200
    %v1202 = vlaneseq
    %v1203 = vshrl.u32 %v1202, 7
    %v1204 = vsub.s32 5, %v1203
    %v1205 = vrot.slane %v1047, %v1204
    %v1206 = vlaneseq
    %v1207 = vshrl.u32 %v1206, 7
    %v1208 = vsub.s32 6, %v1207
    %v1209 = vrot.slane %v1047, %v1208
    %v1210 = vlaneseq
    %v1211 = vshrl.u32 %v1210, 7
    %v1212 = vsub.s32 7, %v1211
    %v1213 = vrot.slane %v1047, %v1212
    %v1214 = vlaneseq
    %v1215 = vshrl.u32 %v1214, 7
    %v1216 = vsub.s32 0, %v1215
    %v1217 = vrot.slane %v1051, %v1216
    %v1218 = vlaneseq
    %v1219 = vshrl.u32 %v1218, 7
    %v1220 = vsub.s32 1, %v1219
    %v1221 = vrot.slane %v1051, %v1220
    %v1222 = vlaneseq
    %v1223 = vshrl.u32 %v1222, 7
    %v1224 = vsub.s32 2, %v1223
    %v1225 = vrot.slane %v1051, %v1224
    %v1226 = vlaneseq
    %v1227 = vshrl.u32 %v1226, 7
    %v1228 = vsub.s32 3, %v1227
    %v1229 = vrot.slane %v1051, %v1228
    %v1230 = vlaneseq
    %v1231 = vshrl.u32 %v1230, 7
    %v1232 = vsub.s32 4, %v1231
    %v1233 = vrot.slane %v1051, %v1232
    %v1234 = vlaneseq
    %v1235 = vshrl.u32 %v1234, 7
    %v1236 = vsub.s32 5, %v1235
    %v1237 = vrot.slane %v1051, %v1236
    %v1238 = vlaneseq
    %v1239 = vshrl.u32 %v1238, 7
    %v1240 = vsub.s32 6, %v1239
    %v1241 = vrot.slane %v1051, %v1240
    %v1242 = vlaneseq
    %v1243 = vshrl.u32 %v1242, 7
    %v1244 = vsub.s32 7, %v1243
    %v1245 = vrot.slane %v1051, %v1244
    %v1246 = vlaneseq
    %v1247 = vshrl.u32 %v1246, 7
    %v1248 = vsub.s32 0, %v1247
    %v1249 = vrot.slane %v1055, %v1248
    %v1250 = vlaneseq
    %v1251 = vshrl.u32 %v1250, 7
    %v1252 = vsub.s32 1, %v1251
    %v1253 = vrot.slane %v1055, %v1252
    %v1254 = vlaneseq
    %v1255 = vshrl.u32 %v1254, 7
    %v1256 = vsub.s32 2, %v1255
    %v1257 = vrot.slane %v1055, %v1256
    %v1258 = vlaneseq
    %v1259 = vshrl.u32 %v1258, 7
    %v1260 = vsub.s32 3, %v1259
    %v1261 = vrot.slane %v1055, %v1260
    %v1262 = vlaneseq
    %v1263 = vshrl.u32 %v1262, 7
    %v1264 = vsub.s32 4, %v1263
    %v1265 = vrot.slane %v1055, %v1264
    %v1266 = vlaneseq
    %v1267 = vshrl.u32 %v1266, 7
    %v1268 = vsub.s32 5, %v1267
    %v1269 = vrot.slane %v1055, %v1268
    %v1270 = vlaneseq
    %v1271 = vshrl.u32 %v1270, 7
    %v1272 = vsub.s32 6, %v1271
    %v1273 = vrot.slane %v1055, %v1272
    %v1274 = vlaneseq
    %v1275 = vshrl.u32 %v1274, 7
    %v1276 = vsub.s32 7, %v1275
    %v1277 = vrot.slane %v1055, %v1276
    %v1278 = vcombine.low %v1089, %v1093
    %v1279 = vcombine.low %v1097, %v1101
    %v1280 = vcombine.low %v1105, %v1109
    %v1281 = vcombine.low %v1113, %v1117
    %v1282 = vcombine.low %v1121, %v1125
    %v1283 = vcombine.low %v1129, %v1133
    %v1284 = vcombine.low %v1137, %v1141
    %v1285 = vcombine.low %v1145, %v1149
    %v1286 = vcombine.low %v1153, %v1157
    %v1287 = vcombine.low %v1161, %v1165
    %v1288 = vcombine.low %v1169, %v1173
    %v1289 = vcombine.low %v1177, %v1181
    %v1290 = vcombine.low %v1185, %v1189
    %v1291 = vcombine.low %v1193, %v1197
    %v1292 = vcombine.low %v1201, %v1205
    %v1293 = vcombine.low %v1209, %v1213
    %v1294 = vcombine.low %v1217, %v1221
    %v1295 = vcombine.low %v1225, %v1229
    %v1296 = vcombine.low %v1233, %v1237
    %v1297 = vcombine.low %v1241, %v1245
    %v1298 = vcombine.low %v1249, %v1253
    %v1299 = vcombine.low %v1257, %v1261
    %v1300 = vcombine.low %v1265, %v1269
    %v1301 = vcombine.low %v1273, %v1277
    %v1326 = vsel %vm1056, %v1278, %v1008
    %v1327 = vsel %vm1057, %v1279, %v1009
    %v1328 = vsel %vm1058, %v1280, %v1010
    %v1329 = vsel %vm1059, %v1281, %v1011
    %v1330 = vsel %vm1060, %v1282, %v1012
    %v1331 = vsel %vm1061, %v1283, %v1013
    %v1332 = vsel %vm1062, %v1284, %v1014
    %v1333 = vsel %vm1063, %v1285, %v1015
    %v1334 = vsel %vm1064, %v1286, %v1016
    %v1335 = vsel %vm1065, %v1287, %v1017
    %v1336 = vsel %vm1066, %v1288, %v1018
    %v1337 = vsel %vm1067, %v1289, %v1019
    %v1338 = vsel %vm1068, %v1290, %v1020
    %v1339 = vsel %vm1069, %v1291, %v1021
    %v1340 = vsel %vm1070, %v1292, %v1022
    %v1341 = vsel %vm1071, %v1293, %v1023
    %v1342 = vsel %vm1072, %v1294, %v1024
    %v1343 = vsel %vm1073, %v1295, %v1025
    %v1344 = vsel %vm1074, %v1296, %v1026
    %v1345 = vsel %vm1075, %v1297, %v1027
    %v1346 = vsel %vm1076, %v1298, %v1028
    %v1347 = vsel %vm1077, %v1299, %v1029
    %v1348 = vsel %vm1078, %v1300, %v1030
    %v1349 = vsel %vm1079, %v1301, %v1031
    %s1350 = scalar_lea.vmem [#allocation3], 4
    %v1351 = vld [vmem:[%s1350] ss:$8 sm:$0xf]
    %v1352 = vld [vmem:[%s1350] ss:$8 sm:$0xf0]
    %v1353 = vor.u32 %v1351, %v1352
    %s1354 = scalar_lea.vmem [#allocation3], 132
    %v1355 = vld [vmem:[%s1354] ss:$8 sm:$0xf]
    %v1356 = vld [vmem:[%s1354] ss:$8 sm:$0xf0]
    %v1357 = vor.u32 %v1355, %v1356
    %s1358 = scalar_lea.vmem [#allocation3], 260
    %v1359 = vld [vmem:[%s1358] ss:$8 sm:$0xf]
    %v1360 = vld [vmem:[%s1358] ss:$8 sm:$0xf0]
    %v1361 = vor.u32 %v1359, %v1360
    %s1362 = scalar_lea.vmem [#allocation3], 388
    %v1363 = vld [vmem:[%s1362] ss:$8 sm:$0xf]
    %v1364 = vld [vmem:[%s1362] ss:$8 sm:$0xf0]
    %v1365 = vor.u32 %v1363, %v1364
    %s1366 = scalar_lea.vmem [#allocation3], 516
    %v1367 = vld [vmem:[%s1366] ss:$8 sm:$0xf]
    %v1368 = vld [vmem:[%s1366] ss:$8 sm:$0xf0]
    %v1369 = vor.u32 %v1367, %v1368
    %s1370 = scalar_lea.vmem [#allocation3], 644
    %v1371 = vld [vmem:[%s1370] ss:$8 sm:$0xf]
    %v1372 = vld [vmem:[%s1370] ss:$8 sm:$0xf0]
    %v1373 = vor.u32 %v1371, %v1372
    %vm1374 = vcmp.eq.s32.totalorder %v55, 4
    %vm1375 = vcmp.eq.s32.totalorder %v56, 4
    %vm1376 = vcmp.eq.s32.totalorder %v57, 4
    %vm1377 = vcmp.eq.s32.totalorder %v58, 4
    %vm1378 = vcmp.eq.s32.totalorder %v59, 4
    %vm1379 = vcmp.eq.s32.totalorder %v60, 4
    %vm1380 = vcmp.eq.s32.totalorder %v61, 4
    %vm1381 = vcmp.eq.s32.totalorder %v62, 4
    %vm1382 = vcmp.eq.s32.totalorder %v63, 4
    %vm1383 = vcmp.eq.s32.totalorder %v64, 4
    %vm1384 = vcmp.eq.s32.totalorder %v65, 4
    %vm1385 = vcmp.eq.s32.totalorder %v66, 4
    %vm1386 = vcmp.eq.s32.totalorder %v67, 4
    %vm1387 = vcmp.eq.s32.totalorder %v68, 4
    %vm1388 = vcmp.eq.s32.totalorder %v69, 4
    %vm1389 = vcmp.eq.s32.totalorder %v70, 4
    %vm1390 = vcmp.eq.s32.totalorder %v71, 4
    %vm1391 = vcmp.eq.s32.totalorder %v72, 4
    %vm1392 = vcmp.eq.s32.totalorder %v73, 4
    %vm1393 = vcmp.eq.s32.totalorder %v74, 4
    %vm1394 = vcmp.eq.s32.totalorder %v75, 4
    %vm1395 = vcmp.eq.s32.totalorder %v76, 4
    %vm1396 = vcmp.eq.s32.totalorder %v77, 4
    %vm1397 = vcmp.eq.s32.totalorder %v78, 4
    %v1404 = vlaneseq
    %v1405 = vshrl.u32 %v1404, 7
    %v1406 = vsub.s32 0, %v1405
    %v1407 = vrot.slane %v1353, %v1406
    %v1408 = vlaneseq
    %v1409 = vshrl.u32 %v1408, 7
    %v1410 = vsub.s32 1, %v1409
    %v1411 = vrot.slane %v1353, %v1410
    %v1412 = vlaneseq
    %v1413 = vshrl.u32 %v1412, 7
    %v1414 = vsub.s32 2, %v1413
    %v1415 = vrot.slane %v1353, %v1414
    %v1416 = vlaneseq
    %v1417 = vshrl.u32 %v1416, 7
    %v1418 = vsub.s32 3, %v1417
    %v1419 = vrot.slane %v1353, %v1418
    %v1420 = vlaneseq
    %v1421 = vshrl.u32 %v1420, 7
    %v1422 = vsub.s32 4, %v1421
    %v1423 = vrot.slane %v1353, %v1422
    %v1424 = vlaneseq
    %v1425 = vshrl.u32 %v1424, 7
    %v1426 = vsub.s32 5, %v1425
    %v1427 = vrot.slane %v1353, %v1426
    %v1428 = vlaneseq
    %v1429 = vshrl.u32 %v1428, 7
    %v1430 = vsub.s32 6, %v1429
    %v1431 = vrot.slane %v1353, %v1430
    %v1432 = vlaneseq
    %v1433 = vshrl.u32 %v1432, 7
    %v1434 = vsub.s32 7, %v1433
    %v1435 = vrot.slane %v1353, %v1434
    %v1436 = vlaneseq
    %v1437 = vshrl.u32 %v1436, 7
    %v1438 = vsub.s32 0, %v1437
    %v1439 = vrot.slane %v1357, %v1438
    %v1440 = vlaneseq
    %v1441 = vshrl.u32 %v1440, 7
    %v1442 = vsub.s32 1, %v1441
    %v1443 = vrot.slane %v1357, %v1442
    %v1444 = vlaneseq
    %v1445 = vshrl.u32 %v1444, 7
    %v1446 = vsub.s32 2, %v1445
    %v1447 = vrot.slane %v1357, %v1446
    %v1448 = vlaneseq
    %v1449 = vshrl.u32 %v1448, 7
    %v1450 = vsub.s32 3, %v1449
    %v1451 = vrot.slane %v1357, %v1450
    %v1452 = vlaneseq
    %v1453 = vshrl.u32 %v1452, 7
    %v1454 = vsub.s32 4, %v1453
    %v1455 = vrot.slane %v1357, %v1454
    %v1456 = vlaneseq
    %v1457 = vshrl.u32 %v1456, 7
    %v1458 = vsub.s32 5, %v1457
    %v1459 = vrot.slane %v1357, %v1458
    %v1460 = vlaneseq
    %v1461 = vshrl.u32 %v1460, 7
    %v1462 = vsub.s32 6, %v1461
    %v1463 = vrot.slane %v1357, %v1462
    %v1464 = vlaneseq
    %v1465 = vshrl.u32 %v1464, 7
    %v1466 = vsub.s32 7, %v1465
    %v1467 = vrot.slane %v1357, %v1466
    %v1468 = vlaneseq
    %v1469 = vshrl.u32 %v1468, 7
    %v1470 = vsub.s32 0, %v1469
    %v1471 = vrot.slane %v1361, %v1470
    %v1472 = vlaneseq
    %v1473 = vshrl.u32 %v1472, 7
    %v1474 = vsub.s32 1, %v1473
    %v1475 = vrot.slane %v1361, %v1474
    %v1476 = vlaneseq
    %v1477 = vshrl.u32 %v1476, 7
    %v1478 = vsub.s32 2, %v1477
    %v1479 = vrot.slane %v1361, %v1478
    %v1480 = vlaneseq
    %v1481 = vshrl.u32 %v1480, 7
    %v1482 = vsub.s32 3, %v1481
    %v1483 = vrot.slane %v1361, %v1482
    %v1484 = vlaneseq
    %v1485 = vshrl.u32 %v1484, 7
    %v1486 = vsub.s32 4, %v1485
    %v1487 = vrot.slane %v1361, %v1486
    %v1488 = vlaneseq
    %v1489 = vshrl.u32 %v1488, 7
    %v1490 = vsub.s32 5, %v1489
    %v1491 = vrot.slane %v1361, %v1490
    %v1492 = vlaneseq
    %v1493 = vshrl.u32 %v1492, 7
    %v1494 = vsub.s32 6, %v1493
    %v1495 = vrot.slane %v1361, %v1494
    %v1496 = vlaneseq
    %v1497 = vshrl.u32 %v1496, 7
    %v1498 = vsub.s32 7, %v1497
    %v1499 = vrot.slane %v1361, %v1498
    %v1500 = vlaneseq
    %v1501 = vshrl.u32 %v1500, 7
    %v1502 = vsub.s32 0, %v1501
    %v1503 = vrot.slane %v1365, %v1502
    %v1504 = vlaneseq
    %v1505 = vshrl.u32 %v1504, 7
    %v1506 = vsub.s32 1, %v1505
    %v1507 = vrot.slane %v1365, %v1506
    %v1508 = vlaneseq
    %v1509 = vshrl.u32 %v1508, 7
    %v1510 = vsub.s32 2, %v1509
    %v1511 = vrot.slane %v1365, %v1510
    %v1512 = vlaneseq
    %v1513 = vshrl.u32 %v1512, 7
    %v1514 = vsub.s32 3, %v1513
    %v1515 = vrot.slane %v1365, %v1514
    %v1516 = vlaneseq
    %v1517 = vshrl.u32 %v1516, 7
    %v1518 = vsub.s32 4, %v1517
    %v1519 = vrot.slane %v1365, %v1518
    %v1520 = vlaneseq
    %v1521 = vshrl.u32 %v1520, 7
    %v1522 = vsub.s32 5, %v1521
    %v1523 = vrot.slane %v1365, %v1522
    %v1524 = vlaneseq
    %v1525 = vshrl.u32 %v1524, 7
    %v1526 = vsub.s32 6, %v1525
    %v1527 = vrot.slane %v1365, %v1526
    %v1528 = vlaneseq
    %v1529 = vshrl.u32 %v1528, 7
    %v1530 = vsub.s32 7, %v1529
    %v1531 = vrot.slane %v1365, %v1530
    %v1532 = vlaneseq
    %v1533 = vshrl.u32 %v1532, 7
    %v1534 = vsub.s32 0, %v1533
    %v1535 = vrot.slane %v1369, %v1534
    %v1536 = vlaneseq
    %v1537 = vshrl.u32 %v1536, 7
    %v1538 = vsub.s32 1, %v1537
    %v1539 = vrot.slane %v1369, %v1538
    %v1540 = vlaneseq
    %v1541 = vshrl.u32 %v1540, 7
    %v1542 = vsub.s32 2, %v1541
    %v1543 = vrot.slane %v1369, %v1542
    %v1544 = vlaneseq
    %v1545 = vshrl.u32 %v1544, 7
    %v1546 = vsub.s32 3, %v1545
    %v1547 = vrot.slane %v1369, %v1546
    %v1548 = vlaneseq
    %v1549 = vshrl.u32 %v1548, 7
    %v1550 = vsub.s32 4, %v1549
    %v1551 = vrot.slane %v1369, %v1550
    %v1552 = vlaneseq
    %v1553 = vshrl.u32 %v1552, 7
    %v1554 = vsub.s32 5, %v1553
    %v1555 = vrot.slane %v1369, %v1554
    %v1556 = vlaneseq
    %v1557 = vshrl.u32 %v1556, 7
    %v1558 = vsub.s32 6, %v1557
    %v1559 = vrot.slane %v1369, %v1558
    %v1560 = vlaneseq
    %v1561 = vshrl.u32 %v1560, 7
    %v1562 = vsub.s32 7, %v1561
    %v1563 = vrot.slane %v1369, %v1562
    %v1564 = vlaneseq
    %v1565 = vshrl.u32 %v1564, 7
    %v1566 = vsub.s32 0, %v1565
    %v1567 = vrot.slane %v1373, %v1566
    %v1568 = vlaneseq
    %v1569 = vshrl.u32 %v1568, 7
    %v1570 = vsub.s32 1, %v1569
    %v1571 = vrot.slane %v1373, %v1570
    %v1572 = vlaneseq
    %v1573 = vshrl.u32 %v1572, 7
    %v1574 = vsub.s32 2, %v1573
    %v1575 = vrot.slane %v1373, %v1574
    %v1576 = vlaneseq
    %v1577 = vshrl.u32 %v1576, 7
    %v1578 = vsub.s32 3, %v1577
    %v1579 = vrot.slane %v1373, %v1578
    %v1580 = vlaneseq
    %v1581 = vshrl.u32 %v1580, 7
    %v1582 = vsub.s32 4, %v1581
    %v1583 = vrot.slane %v1373, %v1582
    %v1584 = vlaneseq
    %v1585 = vshrl.u32 %v1584, 7
    %v1586 = vsub.s32 5, %v1585
    %v1587 = vrot.slane %v1373, %v1586
    %v1588 = vlaneseq
    %v1589 = vshrl.u32 %v1588, 7
    %v1590 = vsub.s32 6, %v1589
    %v1591 = vrot.slane %v1373, %v1590
    %v1592 = vlaneseq
    %v1593 = vshrl.u32 %v1592, 7
    %v1594 = vsub.s32 7, %v1593
    %v1595 = vrot.slane %v1373, %v1594
    %v1596 = vcombine.low %v1407, %v1411
    %v1597 = vcombine.low %v1415, %v1419
    %v1598 = vcombine.low %v1423, %v1427
    %v1599 = vcombine.low %v1431, %v1435
    %v1600 = vcombine.low %v1439, %v1443
    %v1601 = vcombine.low %v1447, %v1451
    %v1602 = vcombine.low %v1455, %v1459
    %v1603 = vcombine.low %v1463, %v1467
    %v1604 = vcombine.low %v1471, %v1475
    %v1605 = vcombine.low %v1479, %v1483
    %v1606 = vcombine.low %v1487, %v1491
    %v1607 = vcombine.low %v1495, %v1499
    %v1608 = vcombine.low %v1503, %v1507
    %v1609 = vcombine.low %v1511, %v1515
    %v1610 = vcombine.low %v1519, %v1523
    %v1611 = vcombine.low %v1527, %v1531
    %v1612 = vcombine.low %v1535, %v1539
    %v1613 = vcombine.low %v1543, %v1547
    %v1614 = vcombine.low %v1551, %v1555
    %v1615 = vcombine.low %v1559, %v1563
    %v1616 = vcombine.low %v1567, %v1571
    %v1617 = vcombine.low %v1575, %v1579
    %v1618 = vcombine.low %v1583, %v1587
    %v1619 = vcombine.low %v1591, %v1595
    %v1644 = vsel %vm1374, %v1596, %v1326
    %v1645 = vsel %vm1375, %v1597, %v1327
    %v1646 = vsel %vm1376, %v1598, %v1328
    %v1647 = vsel %vm1377, %v1599, %v1329
    %v1648 = vsel %vm1378, %v1600, %v1330
    %v1649 = vsel %vm1379, %v1601, %v1331
    %v1650 = vsel %vm1380, %v1602, %v1332
    %v1651 = vsel %vm1381, %v1603, %v1333
    %v1652 = vsel %vm1382, %v1604, %v1334
    %v1653 = vsel %vm1383, %v1605, %v1335
    %v1654 = vsel %vm1384, %v1606, %v1336
    %v1655 = vsel %vm1385, %v1607, %v1337
    %v1656 = vsel %vm1386, %v1608, %v1338
    %v1657 = vsel %vm1387, %v1609, %v1339
    %v1658 = vsel %vm1388, %v1610, %v1340
    %v1659 = vsel %vm1389, %v1611, %v1341
    %v1660 = vsel %vm1390, %v1612, %v1342
    %v1661 = vsel %vm1391, %v1613, %v1343
    %v1662 = vsel %vm1392, %v1614, %v1344
    %v1663 = vsel %vm1393, %v1615, %v1345
    %v1664 = vsel %vm1394, %v1616, %v1346
    %v1665 = vsel %vm1395, %v1617, %v1347
    %v1666 = vsel %vm1396, %v1618, %v1348
    %v1667 = vsel %vm1397, %v1619, %v1349
    %s1668 = scalar_lea.vmem [#allocation3], 5
    %v1669 = vld [vmem:[%s1668] ss:$8 sm:$0xf]
    %v1670 = vld [vmem:[%s1668] ss:$8 sm:$0xf0]
    %v1671 = vor.u32 %v1669, %v1670
    %s1672 = scalar_lea.vmem [#allocation3], 133
    %v1673 = vld [vmem:[%s1672] ss:$8 sm:$0xf]
    %v1674 = vld [vmem:[%s1672] ss:$8 sm:$0xf0]
    %v1675 = vor.u32 %v1673, %v1674
    %s1676 = scalar_lea.vmem [#allocation3], 261
    %v1677 = vld [vmem:[%s1676] ss:$8 sm:$0xf]
    %v1678 = vld [vmem:[%s1676] ss:$8 sm:$0xf0]
    %v1679 = vor.u32 %v1677, %v1678
    %s1680 = scalar_lea.vmem [#allocation3], 389
    %v1681 = vld [vmem:[%s1680] ss:$8 sm:$0xf]
    %v1682 = vld [vmem:[%s1680] ss:$8 sm:$0xf0]
    %v1683 = vor.u32 %v1681, %v1682
    %s1684 = scalar_lea.vmem [#allocation3], 517
    %v1685 = vld [vmem:[%s1684] ss:$8 sm:$0xf]
    %v1686 = vld [vmem:[%s1684] ss:$8 sm:$0xf0]
    %v1687 = vor.u32 %v1685, %v1686
    %s1688 = scalar_lea.vmem [#allocation3], 645
    %v1689 = vld [vmem:[%s1688] ss:$8 sm:$0xf]
    %v1690 = vld [vmem:[%s1688] ss:$8 sm:$0xf0]
    %v1691 = vor.u32 %v1689, %v1690
    %vm1692 = vcmp.eq.s32.totalorder %v55, 5
    %vm1693 = vcmp.eq.s32.totalorder %v56, 5
    %vm1694 = vcmp.eq.s32.totalorder %v57, 5
    %vm1695 = vcmp.eq.s32.totalorder %v58, 5
    %vm1696 = vcmp.eq.s32.totalorder %v59, 5
    %vm1697 = vcmp.eq.s32.totalorder %v60, 5
    %vm1698 = vcmp.eq.s32.totalorder %v61, 5
    %vm1699 = vcmp.eq.s32.totalorder %v62, 5
    %vm1700 = vcmp.eq.s32.totalorder %v63, 5
    %vm1701 = vcmp.eq.s32.totalorder %v64, 5
    %vm1702 = vcmp.eq.s32.totalorder %v65, 5
    %vm1703 = vcmp.eq.s32.totalorder %v66, 5
    %vm1704 = vcmp.eq.s32.totalorder %v67, 5
    %vm1705 = vcmp.eq.s32.totalorder %v68, 5
    %vm1706 = vcmp.eq.s32.totalorder %v69, 5
    %vm1707 = vcmp.eq.s32.totalorder %v70, 5
    %vm1708 = vcmp.eq.s32.totalorder %v71, 5
    %vm1709 = vcmp.eq.s32.totalorder %v72, 5
    %vm1710 = vcmp.eq.s32.totalorder %v73, 5
    %vm1711 = vcmp.eq.s32.totalorder %v74, 5
    %vm1712 = vcmp.eq.s32.totalorder %v75, 5
    %vm1713 = vcmp.eq.s32.totalorder %v76, 5
    %vm1714 = vcmp.eq.s32.totalorder %v77, 5
    %vm1715 = vcmp.eq.s32.totalorder %v78, 5
    %v1722 = vlaneseq
    %v1723 = vshrl.u32 %v1722, 7
    %v1724 = vsub.s32 0, %v1723
    %v1725 = vrot.slane %v1671, %v1724
    %v1726 = vlaneseq
    %v1727 = vshrl.u32 %v1726, 7
    %v1728 = vsub.s32 1, %v1727
    %v1729 = vrot.slane %v1671, %v1728
    %v1730 = vlaneseq
    %v1731 = vshrl.u32 %v1730, 7
    %v1732 = vsub.s32 2, %v1731
    %v1733 = vrot.slane %v1671, %v1732
    %v1734 = vlaneseq
    %v1735 = vshrl.u32 %v1734, 7
    %v1736 = vsub.s32 3, %v1735
    %v1737 = vrot.slane %v1671, %v1736
    %v1738 = vlaneseq
    %v1739 = vshrl.u32 %v1738, 7
    %v1740 = vsub.s32 4, %v1739
    %v1741 = vrot.slane %v1671, %v1740
    %v1742 = vlaneseq
    %v1743 = vshrl.u32 %v1742, 7
    %v1744 = vsub.s32 5, %v1743
    %v1745 = vrot.slane %v1671, %v1744
    %v1746 = vlaneseq
    %v1747 = vshrl.u32 %v1746, 7
    %v1748 = vsub.s32 6, %v1747
    %v1749 = vrot.slane %v1671, %v1748
    %v1750 = vlaneseq
    %v1751 = vshrl.u32 %v1750, 7
    %v1752 = vsub.s32 7, %v1751
    %v1753 = vrot.slane %v1671, %v1752
    %v1754 = vlaneseq
    %v1755 = vshrl.u32 %v1754, 7
    %v1756 = vsub.s32 0, %v1755
    %v1757 = vrot.slane %v1675, %v1756
    %v1758 = vlaneseq
    %v1759 = vshrl.u32 %v1758, 7
    %v1760 = vsub.s32 1, %v1759
    %v1761 = vrot.slane %v1675, %v1760
    %v1762 = vlaneseq
    %v1763 = vshrl.u32 %v1762, 7
    %v1764 = vsub.s32 2, %v1763
    %v1765 = vrot.slane %v1675, %v1764
    %v1766 = vlaneseq
    %v1767 = vshrl.u32 %v1766, 7
    %v1768 = vsub.s32 3, %v1767
    %v1769 = vrot.slane %v1675, %v1768
    %v1770 = vlaneseq
    %v1771 = vshrl.u32 %v1770, 7
    %v1772 = vsub.s32 4, %v1771
    %v1773 = vrot.slane %v1675, %v1772
    %v1774 = vlaneseq
    %v1775 = vshrl.u32 %v1774, 7
    %v1776 = vsub.s32 5, %v1775
    %v1777 = vrot.slane %v1675, %v1776
    %v1778 = vlaneseq
    %v1779 = vshrl.u32 %v1778, 7
    %v1780 = vsub.s32 6, %v1779
    %v1781 = vrot.slane %v1675, %v1780
    %v1782 = vlaneseq
    %v1783 = vshrl.u32 %v1782, 7
    %v1784 = vsub.s32 7, %v1783
    %v1785 = vrot.slane %v1675, %v1784
    %v1786 = vlaneseq
    %v1787 = vshrl.u32 %v1786, 7
    %v1788 = vsub.s32 0, %v1787
    %v1789 = vrot.slane %v1679, %v1788
    %v1790 = vlaneseq
    %v1791 = vshrl.u32 %v1790, 7
    %v1792 = vsub.s32 1, %v1791
    %v1793 = vrot.slane %v1679, %v1792
    %v1794 = vlaneseq
    %v1795 = vshrl.u32 %v1794, 7
    %v1796 = vsub.s32 2, %v1795
    %v1797 = vrot.slane %v1679, %v1796
    %v1798 = vlaneseq
    %v1799 = vshrl.u32 %v1798, 7
    %v1800 = vsub.s32 3, %v1799
    %v1801 = vrot.slane %v1679, %v1800
    %v1802 = vlaneseq
    %v1803 = vshrl.u32 %v1802, 7
    %v1804 = vsub.s32 4, %v1803
    %v1805 = vrot.slane %v1679, %v1804
    %v1806 = vlaneseq
    %v1807 = vshrl.u32 %v1806, 7
    %v1808 = vsub.s32 5, %v1807
    %v1809 = vrot.slane %v1679, %v1808
    %v1810 = vlaneseq
    %v1811 = vshrl.u32 %v1810, 7
    %v1812 = vsub.s32 6, %v1811
    %v1813 = vrot.slane %v1679, %v1812
    %v1814 = vlaneseq
    %v1815 = vshrl.u32 %v1814, 7
    %v1816 = vsub.s32 7, %v1815
    %v1817 = vrot.slane %v1679, %v1816
    %v1818 = vlaneseq
    %v1819 = vshrl.u32 %v1818, 7
    %v1820 = vsub.s32 0, %v1819
    %v1821 = vrot.slane %v1683, %v1820
    %v1822 = vlaneseq
    %v1823 = vshrl.u32 %v1822, 7
    %v1824 = vsub.s32 1, %v1823
    %v1825 = vrot.slane %v1683, %v1824
    %v1826 = vlaneseq
    %v1827 = vshrl.u32 %v1826, 7
    %v1828 = vsub.s32 2, %v1827
    %v1829 = vrot.slane %v1683, %v1828
    %v1830 = vlaneseq
    %v1831 = vshrl.u32 %v1830, 7
    %v1832 = vsub.s32 3, %v1831
    %v1833 = vrot.slane %v1683, %v1832
    %v1834 = vlaneseq
    %v1835 = vshrl.u32 %v1834, 7
    %v1836 = vsub.s32 4, %v1835
    %v1837 = vrot.slane %v1683, %v1836
    %v1838 = vlaneseq
    %v1839 = vshrl.u32 %v1838, 7
    %v1840 = vsub.s32 5, %v1839
    %v1841 = vrot.slane %v1683, %v1840
    %v1842 = vlaneseq
    %v1843 = vshrl.u32 %v1842, 7
    %v1844 = vsub.s32 6, %v1843
    %v1845 = vrot.slane %v1683, %v1844
    %v1846 = vlaneseq
    %v1847 = vshrl.u32 %v1846, 7
    %v1848 = vsub.s32 7, %v1847
    %v1849 = vrot.slane %v1683, %v1848
    %v1850 = vlaneseq
    %v1851 = vshrl.u32 %v1850, 7
    %v1852 = vsub.s32 0, %v1851
    %v1853 = vrot.slane %v1687, %v1852
    %v1854 = vlaneseq
    %v1855 = vshrl.u32 %v1854, 7
    %v1856 = vsub.s32 1, %v1855
    %v1857 = vrot.slane %v1687, %v1856
    %v1858 = vlaneseq
    %v1859 = vshrl.u32 %v1858, 7
    %v1860 = vsub.s32 2, %v1859
    %v1861 = vrot.slane %v1687, %v1860
    %v1862 = vlaneseq
    %v1863 = vshrl.u32 %v1862, 7
    %v1864 = vsub.s32 3, %v1863
    %v1865 = vrot.slane %v1687, %v1864
    %v1866 = vlaneseq
    %v1867 = vshrl.u32 %v1866, 7
    %v1868 = vsub.s32 4, %v1867
    %v1869 = vrot.slane %v1687, %v1868
    %v1870 = vlaneseq
    %v1871 = vshrl.u32 %v1870, 7
    %v1872 = vsub.s32 5, %v1871
    %v1873 = vrot.slane %v1687, %v1872
    %v1874 = vlaneseq
    %v1875 = vshrl.u32 %v1874, 7
    %v1876 = vsub.s32 6, %v1875
    %v1877 = vrot.slane %v1687, %v1876
    %v1878 = vlaneseq
    %v1879 = vshrl.u32 %v1878, 7
    %v1880 = vsub.s32 7, %v1879
    %v1881 = vrot.slane %v1687, %v1880
    %v1882 = vlaneseq
    %v1883 = vshrl.u32 %v1882, 7
    %v1884 = vsub.s32 0, %v1883
    %v1885 = vrot.slane %v1691, %v1884
    %v1886 = vlaneseq
    %v1887 = vshrl.u32 %v1886, 7
    %v1888 = vsub.s32 1, %v1887
    %v1889 = vrot.slane %v1691, %v1888
    %v1890 = vlaneseq
    %v1891 = vshrl.u32 %v1890, 7
    %v1892 = vsub.s32 2, %v1891
    %v1893 = vrot.slane %v1691, %v1892
    %v1894 = vlaneseq
    %v1895 = vshrl.u32 %v1894, 7
    %v1896 = vsub.s32 3, %v1895
    %v1897 = vrot.slane %v1691, %v1896
    %v1898 = vlaneseq
    %v1899 = vshrl.u32 %v1898, 7
    %v1900 = vsub.s32 4, %v1899
    %v1901 = vrot.slane %v1691, %v1900
    %v1902 = vlaneseq
    %v1903 = vshrl.u32 %v1902, 7
    %v1904 = vsub.s32 5, %v1903
    %v1905 = vrot.slane %v1691, %v1904
    %v1906 = vlaneseq
    %v1907 = vshrl.u32 %v1906, 7
    %v1908 = vsub.s32 6, %v1907
    %v1909 = vrot.slane %v1691, %v1908
    %v1910 = vlaneseq
    %v1911 = vshrl.u32 %v1910, 7
    %v1912 = vsub.s32 7, %v1911
    %v1913 = vrot.slane %v1691, %v1912
    %v1914 = vcombine.low %v1725, %v1729
    %v1915 = vcombine.low %v1733, %v1737
    %v1916 = vcombine.low %v1741, %v1745
    %v1917 = vcombine.low %v1749, %v1753
    %v1918 = vcombine.low %v1757, %v1761
    %v1919 = vcombine.low %v1765, %v1769
    %v1920 = vcombine.low %v1773, %v1777
    %v1921 = vcombine.low %v1781, %v1785
    %v1922 = vcombine.low %v1789, %v1793
    %v1923 = vcombine.low %v1797, %v1801
    %v1924 = vcombine.low %v1805, %v1809
    %v1925 = vcombine.low %v1813, %v1817
    %v1926 = vcombine.low %v1821, %v1825
    %v1927 = vcombine.low %v1829, %v1833
    %v1928 = vcombine.low %v1837, %v1841
    %v1929 = vcombine.low %v1845, %v1849
    %v1930 = vcombine.low %v1853, %v1857
    %v1931 = vcombine.low %v1861, %v1865
    %v1932 = vcombine.low %v1869, %v1873
    %v1933 = vcombine.low %v1877, %v1881
    %v1934 = vcombine.low %v1885, %v1889
    %v1935 = vcombine.low %v1893, %v1897
    %v1936 = vcombine.low %v1901, %v1905
    %v1937 = vcombine.low %v1909, %v1913
    %v1962 = vsel %vm1692, %v1914, %v1644
    %v1963 = vsel %vm1693, %v1915, %v1645
    %v1964 = vsel %vm1694, %v1916, %v1646
    %v1965 = vsel %vm1695, %v1917, %v1647
    %v1966 = vsel %vm1696, %v1918, %v1648
    %v1967 = vsel %vm1697, %v1919, %v1649
    %v1968 = vsel %vm1698, %v1920, %v1650
    %v1969 = vsel %vm1699, %v1921, %v1651
    %v1970 = vsel %vm1700, %v1922, %v1652
    %v1971 = vsel %vm1701, %v1923, %v1653
    %v1972 = vsel %vm1702, %v1924, %v1654
    %v1973 = vsel %vm1703, %v1925, %v1655
    %v1974 = vsel %vm1704, %v1926, %v1656
    %v1975 = vsel %vm1705, %v1927, %v1657
    %v1976 = vsel %vm1706, %v1928, %v1658
    %v1977 = vsel %vm1707, %v1929, %v1659
    %v1978 = vsel %vm1708, %v1930, %v1660
    %v1979 = vsel %vm1709, %v1931, %v1661
    %v1980 = vsel %vm1710, %v1932, %v1662
    %v1981 = vsel %vm1711, %v1933, %v1663
    %v1982 = vsel %vm1712, %v1934, %v1664
    %v1983 = vsel %vm1713, %v1935, %v1665
    %v1984 = vsel %vm1714, %v1936, %v1666
    %v1985 = vsel %vm1715, %v1937, %v1667
    %s1986 = scalar_lea.vmem [#allocation3], 6
    %v1987 = vld [vmem:[%s1986] ss:$8 sm:$0xf]
    %v1988 = vld [vmem:[%s1986] ss:$8 sm:$0xf0]
    %v1989 = vor.u32 %v1987, %v1988
    %s1990 = scalar_lea.vmem [#allocation3], 134
    %v1991 = vld [vmem:[%s1990] ss:$8 sm:$0xf]
    %v1992 = vld [vmem:[%s1990] ss:$8 sm:$0xf0]
    %v1993 = vor.u32 %v1991, %v1992
    %s1994 = scalar_lea.vmem [#allocation3], 262
    %v1995 = vld [vmem:[%s1994] ss:$8 sm:$0xf]
    %v1996 = vld [vmem:[%s1994] ss:$8 sm:$0xf0]
    %v1997 = vor.u32 %v1995, %v1996
    %s1998 = scalar_lea.vmem [#allocation3], 390
    %v1999 = vld [vmem:[%s1998] ss:$8 sm:$0xf]
    %v2000 = vld [vmem:[%s1998] ss:$8 sm:$0xf0]
    %v2001 = vor.u32 %v1999, %v2000
    %s2002 = scalar_lea.vmem [#allocation3], 518
    %v2003 = vld [vmem:[%s2002] ss:$8 sm:$0xf]
    %v2004 = vld [vmem:[%s2002] ss:$8 sm:$0xf0]
    %v2005 = vor.u32 %v2003, %v2004
    %s2006 = scalar_lea.vmem [#allocation3], 646
    %v2007 = vld [vmem:[%s2006] ss:$8 sm:$0xf]
    %v2008 = vld [vmem:[%s2006] ss:$8 sm:$0xf0]
    %v2009 = vor.u32 %v2007, %v2008
    %vm2010 = vcmp.eq.s32.totalorder %v55, 6
    %vm2011 = vcmp.eq.s32.totalorder %v56, 6
    %vm2012 = vcmp.eq.s32.totalorder %v57, 6
    %vm2013 = vcmp.eq.s32.totalorder %v58, 6
    %vm2014 = vcmp.eq.s32.totalorder %v59, 6
    %vm2015 = vcmp.eq.s32.totalorder %v60, 6
    %vm2016 = vcmp.eq.s32.totalorder %v61, 6
    %vm2017 = vcmp.eq.s32.totalorder %v62, 6
    %vm2018 = vcmp.eq.s32.totalorder %v63, 6
    %vm2019 = vcmp.eq.s32.totalorder %v64, 6
    %vm2020 = vcmp.eq.s32.totalorder %v65, 6
    %vm2021 = vcmp.eq.s32.totalorder %v66, 6
    %vm2022 = vcmp.eq.s32.totalorder %v67, 6
    %vm2023 = vcmp.eq.s32.totalorder %v68, 6
    %vm2024 = vcmp.eq.s32.totalorder %v69, 6
    %vm2025 = vcmp.eq.s32.totalorder %v70, 6
    %vm2026 = vcmp.eq.s32.totalorder %v71, 6
    %vm2027 = vcmp.eq.s32.totalorder %v72, 6
    %vm2028 = vcmp.eq.s32.totalorder %v73, 6
    %vm2029 = vcmp.eq.s32.totalorder %v74, 6
    %vm2030 = vcmp.eq.s32.totalorder %v75, 6
    %vm2031 = vcmp.eq.s32.totalorder %v76, 6
    %vm2032 = vcmp.eq.s32.totalorder %v77, 6
    %vm2033 = vcmp.eq.s32.totalorder %v78, 6
    %v2040 = vlaneseq
    %v2041 = vshrl.u32 %v2040, 7
    %v2042 = vsub.s32 0, %v2041
    %v2043 = vrot.slane %v1989, %v2042
    %v2044 = vlaneseq
    %v2045 = vshrl.u32 %v2044, 7
    %v2046 = vsub.s32 1, %v2045
    %v2047 = vrot.slane %v1989, %v2046
    %v2048 = vlaneseq
    %v2049 = vshrl.u32 %v2048, 7
    %v2050 = vsub.s32 2, %v2049
    %v2051 = vrot.slane %v1989, %v2050
    %v2052 = vlaneseq
    %v2053 = vshrl.u32 %v2052, 7
    %v2054 = vsub.s32 3, %v2053
    %v2055 = vrot.slane %v1989, %v2054
    %v2056 = vlaneseq
    %v2057 = vshrl.u32 %v2056, 7
    %v2058 = vsub.s32 4, %v2057
    %v2059 = vrot.slane %v1989, %v2058
    %v2060 = vlaneseq
    %v2061 = vshrl.u32 %v2060, 7
    %v2062 = vsub.s32 5, %v2061
    %v2063 = vrot.slane %v1989, %v2062
    %v2064 = vlaneseq
    %v2065 = vshrl.u32 %v2064, 7
    %v2066 = vsub.s32 6, %v2065
    %v2067 = vrot.slane %v1989, %v2066
    %v2068 = vlaneseq
    %v2069 = vshrl.u32 %v2068, 7
    %v2070 = vsub.s32 7, %v2069
    %v2071 = vrot.slane %v1989, %v2070
    %v2072 = vlaneseq
    %v2073 = vshrl.u32 %v2072, 7
    %v2074 = vsub.s32 0, %v2073
    %v2075 = vrot.slane %v1993, %v2074
    %v2076 = vlaneseq
    %v2077 = vshrl.u32 %v2076, 7
    %v2078 = vsub.s32 1, %v2077
    %v2079 = vrot.slane %v1993, %v2078
    %v2080 = vlaneseq
    %v2081 = vshrl.u32 %v2080, 7
    %v2082 = vsub.s32 2, %v2081
    %v2083 = vrot.slane %v1993, %v2082
    %v2084 = vlaneseq
    %v2085 = vshrl.u32 %v2084, 7
    %v2086 = vsub.s32 3, %v2085
    %v2087 = vrot.slane %v1993, %v2086
    %v2088 = vlaneseq
    %v2089 = vshrl.u32 %v2088, 7
    %v2090 = vsub.s32 4, %v2089
    %v2091 = vrot.slane %v1993, %v2090
    %v2092 = vlaneseq
    %v2093 = vshrl.u32 %v2092, 7
    %v2094 = vsub.s32 5, %v2093
    %v2095 = vrot.slane %v1993, %v2094
    %v2096 = vlaneseq
    %v2097 = vshrl.u32 %v2096, 7
    %v2098 = vsub.s32 6, %v2097
    %v2099 = vrot.slane %v1993, %v2098
    %v2100 = vlaneseq
    %v2101 = vshrl.u32 %v2100, 7
    %v2102 = vsub.s32 7, %v2101
    %v2103 = vrot.slane %v1993, %v2102
    %v2104 = vlaneseq
    %v2105 = vshrl.u32 %v2104, 7
    %v2106 = vsub.s32 0, %v2105
    %v2107 = vrot.slane %v1997, %v2106
    %v2108 = vlaneseq
    %v2109 = vshrl.u32 %v2108, 7
    %v2110 = vsub.s32 1, %v2109
    %v2111 = vrot.slane %v1997, %v2110
    %v2112 = vlaneseq
    %v2113 = vshrl.u32 %v2112, 7
    %v2114 = vsub.s32 2, %v2113
    %v2115 = vrot.slane %v1997, %v2114
    %v2116 = vlaneseq
    %v2117 = vshrl.u32 %v2116, 7
    %v2118 = vsub.s32 3, %v2117
    %v2119 = vrot.slane %v1997, %v2118
    %v2120 = vlaneseq
    %v2121 = vshrl.u32 %v2120, 7
    %v2122 = vsub.s32 4, %v2121
    %v2123 = vrot.slane %v1997, %v2122
    %v2124 = vlaneseq
    %v2125 = vshrl.u32 %v2124, 7
    %v2126 = vsub.s32 5, %v2125
    %v2127 = vrot.slane %v1997, %v2126
    %v2128 = vlaneseq
    %v2129 = vshrl.u32 %v2128, 7
    %v2130 = vsub.s32 6, %v2129
    %v2131 = vrot.slane %v1997, %v2130
    %v2132 = vlaneseq
    %v2133 = vshrl.u32 %v2132, 7
    %v2134 = vsub.s32 7, %v2133
    %v2135 = vrot.slane %v1997, %v2134
    %v2136 = vlaneseq
    %v2137 = vshrl.u32 %v2136, 7
    %v2138 = vsub.s32 0, %v2137
    %v2139 = vrot.slane %v2001, %v2138
    %v2140 = vlaneseq
    %v2141 = vshrl.u32 %v2140, 7
    %v2142 = vsub.s32 1, %v2141
    %v2143 = vrot.slane %v2001, %v2142
    %v2144 = vlaneseq
    %v2145 = vshrl.u32 %v2144, 7
    %v2146 = vsub.s32 2, %v2145
    %v2147 = vrot.slane %v2001, %v2146
    %v2148 = vlaneseq
    %v2149 = vshrl.u32 %v2148, 7
    %v2150 = vsub.s32 3, %v2149
    %v2151 = vrot.slane %v2001, %v2150
    %v2152 = vlaneseq
    %v2153 = vshrl.u32 %v2152, 7
    %v2154 = vsub.s32 4, %v2153
    %v2155 = vrot.slane %v2001, %v2154
    %v2156 = vlaneseq
    %v2157 = vshrl.u32 %v2156, 7
    %v2158 = vsub.s32 5, %v2157
    %v2159 = vrot.slane %v2001, %v2158
    %v2160 = vlaneseq
    %v2161 = vshrl.u32 %v2160, 7
    %v2162 = vsub.s32 6, %v2161
    %v2163 = vrot.slane %v2001, %v2162
    %v2164 = vlaneseq
    %v2165 = vshrl.u32 %v2164, 7
    %v2166 = vsub.s32 7, %v2165
    %v2167 = vrot.slane %v2001, %v2166
    %v2168 = vlaneseq
    %v2169 = vshrl.u32 %v2168, 7
    %v2170 = vsub.s32 0, %v2169
    %v2171 = vrot.slane %v2005, %v2170
    %v2172 = vlaneseq
    %v2173 = vshrl.u32 %v2172, 7
    %v2174 = vsub.s32 1, %v2173
    %v2175 = vrot.slane %v2005, %v2174
    %v2176 = vlaneseq
    %v2177 = vshrl.u32 %v2176, 7
    %v2178 = vsub.s32 2, %v2177
    %v2179 = vrot.slane %v2005, %v2178
    %v2180 = vlaneseq
    %v2181 = vshrl.u32 %v2180, 7
    %v2182 = vsub.s32 3, %v2181
    %v2183 = vrot.slane %v2005, %v2182
    %v2184 = vlaneseq
    %v2185 = vshrl.u32 %v2184, 7
    %v2186 = vsub.s32 4, %v2185
    %v2187 = vrot.slane %v2005, %v2186
    %v2188 = vlaneseq
    %v2189 = vshrl.u32 %v2188, 7
    %v2190 = vsub.s32 5, %v2189
    %v2191 = vrot.slane %v2005, %v2190
    %v2192 = vlaneseq
    %v2193 = vshrl.u32 %v2192, 7
    %v2194 = vsub.s32 6, %v2193
    %v2195 = vrot.slane %v2005, %v2194
    %v2196 = vlaneseq
    %v2197 = vshrl.u32 %v2196, 7
    %v2198 = vsub.s32 7, %v2197
    %v2199 = vrot.slane %v2005, %v2198
    %v2200 = vlaneseq
    %v2201 = vshrl.u32 %v2200, 7
    %v2202 = vsub.s32 0, %v2201
    %v2203 = vrot.slane %v2009, %v2202
    %v2204 = vlaneseq
    %v2205 = vshrl.u32 %v2204, 7
    %v2206 = vsub.s32 1, %v2205
    %v2207 = vrot.slane %v2009, %v2206
    %v2208 = vlaneseq
    %v2209 = vshrl.u32 %v2208, 7
    %v2210 = vsub.s32 2, %v2209
    %v2211 = vrot.slane %v2009, %v2210
    %v2212 = vlaneseq
    %v2213 = vshrl.u32 %v2212, 7
    %v2214 = vsub.s32 3, %v2213
    %v2215 = vrot.slane %v2009, %v2214
    %v2216 = vlaneseq
    %v2217 = vshrl.u32 %v2216, 7
    %v2218 = vsub.s32 4, %v2217
    %v2219 = vrot.slane %v2009, %v2218
    %v2220 = vlaneseq
    %v2221 = vshrl.u32 %v2220, 7
    %v2222 = vsub.s32 5, %v2221
    %v2223 = vrot.slane %v2009, %v2222
    %v2224 = vlaneseq
    %v2225 = vshrl.u32 %v2224, 7
    %v2226 = vsub.s32 6, %v2225
    %v2227 = vrot.slane %v2009, %v2226
    %v2228 = vlaneseq
    %v2229 = vshrl.u32 %v2228, 7
    %v2230 = vsub.s32 7, %v2229
    %v2231 = vrot.slane %v2009, %v2230
    %v2232 = vcombine.low %v2043, %v2047
    %v2233 = vcombine.low %v2051, %v2055
    %v2234 = vcombine.low %v2059, %v2063
    %v2235 = vcombine.low %v2067, %v2071
    %v2236 = vcombine.low %v2075, %v2079
    %v2237 = vcombine.low %v2083, %v2087
    %v2238 = vcombine.low %v2091, %v2095
    %v2239 = vcombine.low %v2099, %v2103
    %v2240 = vcombine.low %v2107, %v2111
    %v2241 = vcombine.low %v2115, %v2119
    %v2242 = vcombine.low %v2123, %v2127
    %v2243 = vcombine.low %v2131, %v2135
    %v2244 = vcombine.low %v2139, %v2143
    %v2245 = vcombine.low %v2147, %v2151
    %v2246 = vcombine.low %v2155, %v2159
    %v2247 = vcombine.low %v2163, %v2167
    %v2248 = vcombine.low %v2171, %v2175
    %v2249 = vcombine.low %v2179, %v2183
    %v2250 = vcombine.low %v2187, %v2191
    %v2251 = vcombine.low %v2195, %v2199
    %v2252 = vcombine.low %v2203, %v2207
    %v2253 = vcombine.low %v2211, %v2215
    %v2254 = vcombine.low %v2219, %v2223
    %v2255 = vcombine.low %v2227, %v2231
    %v2280 = vsel %vm2010, %v2232, %v1962
    %v2281 = vsel %vm2011, %v2233, %v1963
    %v2282 = vsel %vm2012, %v2234, %v1964
    %v2283 = vsel %vm2013, %v2235, %v1965
    %v2284 = vsel %vm2014, %v2236, %v1966
    %v2285 = vsel %vm2015, %v2237, %v1967
    %v2286 = vsel %vm2016, %v2238, %v1968
    %v2287 = vsel %vm2017, %v2239, %v1969
    %v2288 = vsel %vm2018, %v2240, %v1970
    %v2289 = vsel %vm2019, %v2241, %v1971
    %v2290 = vsel %vm2020, %v2242, %v1972
    %v2291 = vsel %vm2021, %v2243, %v1973
    %v2292 = vsel %vm2022, %v2244, %v1974
    %v2293 = vsel %vm2023, %v2245, %v1975
    %v2294 = vsel %vm2024, %v2246, %v1976
    %v2295 = vsel %vm2025, %v2247, %v1977
    %v2296 = vsel %vm2026, %v2248, %v1978
    %v2297 = vsel %vm2027, %v2249, %v1979
    %v2298 = vsel %vm2028, %v2250, %v1980
    %v2299 = vsel %vm2029, %v2251, %v1981
    %v2300 = vsel %vm2030, %v2252, %v1982
    %v2301 = vsel %vm2031, %v2253, %v1983
    %v2302 = vsel %vm2032, %v2254, %v1984
    %v2303 = vsel %vm2033, %v2255, %v1985
    %s2304 = scalar_lea.vmem [#allocation3], 7
    %v2305 = vld [vmem:[%s2304] ss:$8 sm:$0xf]
    %v2306 = vld [vmem:[%s2304] ss:$8 sm:$0xf0]
    %v2307 = vor.u32 %v2305, %v2306
    %s2308 = scalar_lea.vmem [#allocation3], 135
    %v2309 = vld [vmem:[%s2308] ss:$8 sm:$0xf]
    %v2310 = vld [vmem:[%s2308] ss:$8 sm:$0xf0]
    %v2311 = vor.u32 %v2309, %v2310
    %s2312 = scalar_lea.vmem [#allocation3], 263
    %v2313 = vld [vmem:[%s2312] ss:$8 sm:$0xf]
    %v2314 = vld [vmem:[%s2312] ss:$8 sm:$0xf0]
    %v2315 = vor.u32 %v2313, %v2314
    %s2316 = scalar_lea.vmem [#allocation3], 391
    %v2317 = vld [vmem:[%s2316] ss:$8 sm:$0xf]
    %v2318 = vld [vmem:[%s2316] ss:$8 sm:$0xf0]
    %v2319 = vor.u32 %v2317, %v2318
    %s2320 = scalar_lea.vmem [#allocation3], 519
    %v2321 = vld [vmem:[%s2320] ss:$8 sm:$0xf]
    %v2322 = vld [vmem:[%s2320] ss:$8 sm:$0xf0]
    %v2323 = vor.u32 %v2321, %v2322
    %s2324 = scalar_lea.vmem [#allocation3], 647
    %v2325 = vld [vmem:[%s2324] ss:$8 sm:$0xf]
    %v2326 = vld [vmem:[%s2324] ss:$8 sm:$0xf0]
    %v2327 = vor.u32 %v2325, %v2326
    %vm2328 = vcmp.eq.s32.totalorder %v55, 7
    %vm2329 = vcmp.eq.s32.totalorder %v56, 7
    %vm2330 = vcmp.eq.s32.totalorder %v57, 7
    %vm2331 = vcmp.eq.s32.totalorder %v58, 7
    %vm2332 = vcmp.eq.s32.totalorder %v59, 7
    %vm2333 = vcmp.eq.s32.totalorder %v60, 7
    %vm2334 = vcmp.eq.s32.totalorder %v61, 7
    %vm2335 = vcmp.eq.s32.totalorder %v62, 7
    %vm2336 = vcmp.eq.s32.totalorder %v63, 7
    %vm2337 = vcmp.eq.s32.totalorder %v64, 7
    %vm2338 = vcmp.eq.s32.totalorder %v65, 7
    %vm2339 = vcmp.eq.s32.totalorder %v66, 7
    %vm2340 = vcmp.eq.s32.totalorder %v67, 7
    %vm2341 = vcmp.eq.s32.totalorder %v68, 7
    %vm2342 = vcmp.eq.s32.totalorder %v69, 7
    %vm2343 = vcmp.eq.s32.totalorder %v70, 7
    %vm2344 = vcmp.eq.s32.totalorder %v71, 7
    %vm2345 = vcmp.eq.s32.totalorder %v72, 7
    %vm2346 = vcmp.eq.s32.totalorder %v73, 7
    %vm2347 = vcmp.eq.s32.totalorder %v74, 7
    %vm2348 = vcmp.eq.s32.totalorder %v75, 7
    %vm2349 = vcmp.eq.s32.totalorder %v76, 7
    %vm2350 = vcmp.eq.s32.totalorder %v77, 7
    %vm2351 = vcmp.eq.s32.totalorder %v78, 7
    %v2358 = vlaneseq
    %v2359 = vshrl.u32 %v2358, 7
    %v2360 = vsub.s32 0, %v2359
    %v2361 = vrot.slane %v2307, %v2360
    %v2362 = vlaneseq
    %v2363 = vshrl.u32 %v2362, 7
    %v2364 = vsub.s32 1, %v2363
    %v2365 = vrot.slane %v2307, %v2364
    %v2366 = vlaneseq
    %v2367 = vshrl.u32 %v2366, 7
    %v2368 = vsub.s32 2, %v2367
    %v2369 = vrot.slane %v2307, %v2368
    %v2370 = vlaneseq
    %v2371 = vshrl.u32 %v2370, 7
    %v2372 = vsub.s32 3, %v2371
    %v2373 = vrot.slane %v2307, %v2372
    %v2374 = vlaneseq
    %v2375 = vshrl.u32 %v2374, 7
    %v2376 = vsub.s32 4, %v2375
    %v2377 = vrot.slane %v2307, %v2376
    %v2378 = vlaneseq
    %v2379 = vshrl.u32 %v2378, 7
    %v2380 = vsub.s32 5, %v2379
    %v2381 = vrot.slane %v2307, %v2380
    %v2382 = vlaneseq
    %v2383 = vshrl.u32 %v2382, 7
    %v2384 = vsub.s32 6, %v2383
    %v2385 = vrot.slane %v2307, %v2384
    %v2386 = vlaneseq
    %v2387 = vshrl.u32 %v2386, 7
    %v2388 = vsub.s32 7, %v2387
    %v2389 = vrot.slane %v2307, %v2388
    %v2390 = vlaneseq
    %v2391 = vshrl.u32 %v2390, 7
    %v2392 = vsub.s32 0, %v2391
    %v2393 = vrot.slane %v2311, %v2392
    %v2394 = vlaneseq
    %v2395 = vshrl.u32 %v2394, 7
    %v2396 = vsub.s32 1, %v2395
    %v2397 = vrot.slane %v2311, %v2396
    %v2398 = vlaneseq
    %v2399 = vshrl.u32 %v2398, 7
    %v2400 = vsub.s32 2, %v2399
    %v2401 = vrot.slane %v2311, %v2400
    %v2402 = vlaneseq
    %v2403 = vshrl.u32 %v2402, 7
    %v2404 = vsub.s32 3, %v2403
    %v2405 = vrot.slane %v2311, %v2404
    %v2406 = vlaneseq
    %v2407 = vshrl.u32 %v2406, 7
    %v2408 = vsub.s32 4, %v2407
    %v2409 = vrot.slane %v2311, %v2408
    %v2410 = vlaneseq
    %v2411 = vshrl.u32 %v2410, 7
    %v2412 = vsub.s32 5, %v2411
    %v2413 = vrot.slane %v2311, %v2412
    %v2414 = vlaneseq
    %v2415 = vshrl.u32 %v2414, 7
    %v2416 = vsub.s32 6, %v2415
    %v2417 = vrot.slane %v2311, %v2416
    %v2418 = vlaneseq
    %v2419 = vshrl.u32 %v2418, 7
    %v2420 = vsub.s32 7, %v2419
    %v2421 = vrot.slane %v2311, %v2420
    %v2422 = vlaneseq
    %v2423 = vshrl.u32 %v2422, 7
    %v2424 = vsub.s32 0, %v2423
    %v2425 = vrot.slane %v2315, %v2424
    %v2426 = vlaneseq
    %v2427 = vshrl.u32 %v2426, 7
    %v2428 = vsub.s32 1, %v2427
    %v2429 = vrot.slane %v2315, %v2428
    %v2430 = vlaneseq
    %v2431 = vshrl.u32 %v2430, 7
    %v2432 = vsub.s32 2, %v2431
    %v2433 = vrot.slane %v2315, %v2432
    %v2434 = vlaneseq
    %v2435 = vshrl.u32 %v2434, 7
    %v2436 = vsub.s32 3, %v2435
    %v2437 = vrot.slane %v2315, %v2436
    %v2438 = vlaneseq
    %v2439 = vshrl.u32 %v2438, 7
    %v2440 = vsub.s32 4, %v2439
    %v2441 = vrot.slane %v2315, %v2440
    %v2442 = vlaneseq
    %v2443 = vshrl.u32 %v2442, 7
    %v2444 = vsub.s32 5, %v2443
    %v2445 = vrot.slane %v2315, %v2444
    %v2446 = vlaneseq
    %v2447 = vshrl.u32 %v2446, 7
    %v2448 = vsub.s32 6, %v2447
    %v2449 = vrot.slane %v2315, %v2448
    %v2450 = vlaneseq
    %v2451 = vshrl.u32 %v2450, 7
    %v2452 = vsub.s32 7, %v2451
    %v2453 = vrot.slane %v2315, %v2452
    %v2454 = vlaneseq
    %v2455 = vshrl.u32 %v2454, 7
    %v2456 = vsub.s32 0, %v2455
    %v2457 = vrot.slane %v2319, %v2456
    %v2458 = vlaneseq
    %v2459 = vshrl.u32 %v2458, 7
    %v2460 = vsub.s32 1, %v2459
    %v2461 = vrot.slane %v2319, %v2460
    %v2462 = vlaneseq
    %v2463 = vshrl.u32 %v2462, 7
    %v2464 = vsub.s32 2, %v2463
    %v2465 = vrot.slane %v2319, %v2464
    %v2466 = vlaneseq
    %v2467 = vshrl.u32 %v2466, 7
    %v2468 = vsub.s32 3, %v2467
    %v2469 = vrot.slane %v2319, %v2468
    %v2470 = vlaneseq
    %v2471 = vshrl.u32 %v2470, 7
    %v2472 = vsub.s32 4, %v2471
    %v2473 = vrot.slane %v2319, %v2472
    %v2474 = vlaneseq
    %v2475 = vshrl.u32 %v2474, 7
    %v2476 = vsub.s32 5, %v2475
    %v2477 = vrot.slane %v2319, %v2476
    %v2478 = vlaneseq
    %v2479 = vshrl.u32 %v2478, 7
    %v2480 = vsub.s32 6, %v2479
    %v2481 = vrot.slane %v2319, %v2480
    %v2482 = vlaneseq
    %v2483 = vshrl.u32 %v2482, 7
    %v2484 = vsub.s32 7, %v2483
    %v2485 = vrot.slane %v2319, %v2484
    %v2486 = vlaneseq
    %v2487 = vshrl.u32 %v2486, 7
    %v2488 = vsub.s32 0, %v2487
    %v2489 = vrot.slane %v2323, %v2488
    %v2490 = vlaneseq
    %v2491 = vshrl.u32 %v2490, 7
    %v2492 = vsub.s32 1, %v2491
    %v2493 = vrot.slane %v2323, %v2492
    %v2494 = vlaneseq
    %v2495 = vshrl.u32 %v2494, 7
    %v2496 = vsub.s32 2, %v2495
    %v2497 = vrot.slane %v2323, %v2496
    %v2498 = vlaneseq
    %v2499 = vshrl.u32 %v2498, 7
    %v2500 = vsub.s32 3, %v2499
    %v2501 = vrot.slane %v2323, %v2500
    %v2502 = vlaneseq
    %v2503 = vshrl.u32 %v2502, 7
    %v2504 = vsub.s32 4, %v2503
    %v2505 = vrot.slane %v2323, %v2504
    %v2506 = vlaneseq
    %v2507 = vshrl.u32 %v2506, 7
    %v2508 = vsub.s32 5, %v2507
    %v2509 = vrot.slane %v2323, %v2508
    %v2510 = vlaneseq
    %v2511 = vshrl.u32 %v2510, 7
    %v2512 = vsub.s32 6, %v2511
    %v2513 = vrot.slane %v2323, %v2512
    %v2514 = vlaneseq
    %v2515 = vshrl.u32 %v2514, 7
    %v2516 = vsub.s32 7, %v2515
    %v2517 = vrot.slane %v2323, %v2516
    %v2518 = vlaneseq
    %v2519 = vshrl.u32 %v2518, 7
    %v2520 = vsub.s32 0, %v2519
    %v2521 = vrot.slane %v2327, %v2520
    %v2522 = vlaneseq
    %v2523 = vshrl.u32 %v2522, 7
    %v2524 = vsub.s32 1, %v2523
    %v2525 = vrot.slane %v2327, %v2524
    %v2526 = vlaneseq
    %v2527 = vshrl.u32 %v2526, 7
    %v2528 = vsub.s32 2, %v2527
    %v2529 = vrot.slane %v2327, %v2528
    %v2530 = vlaneseq
    %v2531 = vshrl.u32 %v2530, 7
    %v2532 = vsub.s32 3, %v2531
    %v2533 = vrot.slane %v2327, %v2532
    %v2534 = vlaneseq
    %v2535 = vshrl.u32 %v2534, 7
    %v2536 = vsub.s32 4, %v2535
    %v2537 = vrot.slane %v2327, %v2536
    %v2538 = vlaneseq
    %v2539 = vshrl.u32 %v2538, 7
    %v2540 = vsub.s32 5, %v2539
    %v2541 = vrot.slane %v2327, %v2540
    %v2542 = vlaneseq
    %v2543 = vshrl.u32 %v2542, 7
    %v2544 = vsub.s32 6, %v2543
    %v2545 = vrot.slane %v2327, %v2544
    %v2546 = vlaneseq
    %v2547 = vshrl.u32 %v2546, 7
    %v2548 = vsub.s32 7, %v2547
    %v2549 = vrot.slane %v2327, %v2548
    %v2550 = vcombine.low %v2361, %v2365
    %v2551 = vcombine.low %v2369, %v2373
    %v2552 = vcombine.low %v2377, %v2381
    %v2553 = vcombine.low %v2385, %v2389
    %v2554 = vcombine.low %v2393, %v2397
    %v2555 = vcombine.low %v2401, %v2405
    %v2556 = vcombine.low %v2409, %v2413
    %v2557 = vcombine.low %v2417, %v2421
    %v2558 = vcombine.low %v2425, %v2429
    %v2559 = vcombine.low %v2433, %v2437
    %v2560 = vcombine.low %v2441, %v2445
    %v2561 = vcombine.low %v2449, %v2453
    %v2562 = vcombine.low %v2457, %v2461
    %v2563 = vcombine.low %v2465, %v2469
    %v2564 = vcombine.low %v2473, %v2477
    %v2565 = vcombine.low %v2481, %v2485
    %v2566 = vcombine.low %v2489, %v2493
    %v2567 = vcombine.low %v2497, %v2501
    %v2568 = vcombine.low %v2505, %v2509
    %v2569 = vcombine.low %v2513, %v2517
    %v2570 = vcombine.low %v2521, %v2525
    %v2571 = vcombine.low %v2529, %v2533
    %v2572 = vcombine.low %v2537, %v2541
    %v2573 = vcombine.low %v2545, %v2549
    %v2598 = vsel %vm2328, %v2550, %v2280
    %v2599 = vsel %vm2329, %v2551, %v2281
    %v2600 = vsel %vm2330, %v2552, %v2282
    %v2601 = vsel %vm2331, %v2553, %v2283
    %v2602 = vsel %vm2332, %v2554, %v2284
    %v2603 = vsel %vm2333, %v2555, %v2285
    %v2604 = vsel %vm2334, %v2556, %v2286
    %v2605 = vsel %vm2335, %v2557, %v2287
    %v2606 = vsel %vm2336, %v2558, %v2288
    %v2607 = vsel %vm2337, %v2559, %v2289
    %v2608 = vsel %vm2338, %v2560, %v2290
    %v2609 = vsel %vm2339, %v2561, %v2291
    %v2610 = vsel %vm2340, %v2562, %v2292
    %v2611 = vsel %vm2341, %v2563, %v2293
    %v2612 = vsel %vm2342, %v2564, %v2294
    %v2613 = vsel %vm2343, %v2565, %v2295
    %v2614 = vsel %vm2344, %v2566, %v2296
    %v2615 = vsel %vm2345, %v2567, %v2297
    %v2616 = vsel %vm2346, %v2568, %v2298
    %v2617 = vsel %vm2347, %v2569, %v2299
    %v2618 = vsel %vm2348, %v2570, %v2300
    %v2619 = vsel %vm2349, %v2571, %v2301
    %v2620 = vsel %vm2350, %v2572, %v2302
    %v2621 = vsel %vm2351, %v2573, %v2303
    %s2622 = scalar_lea.vmem [#allocation3], 64
    %v2623 = vld [vmem:[%s2622] ss:$8 sm:$0xf]
    %v2624 = vld [vmem:[%s2622] ss:$8 sm:$0xf0]
    %v2625 = vor.u32 %v2623, %v2624
    %s2626 = scalar_lea.vmem [#allocation3], 192
    %v2627 = vld [vmem:[%s2626] ss:$8 sm:$0xf]
    %v2628 = vld [vmem:[%s2626] ss:$8 sm:$0xf0]
    %v2629 = vor.u32 %v2627, %v2628
    %s2630 = scalar_lea.vmem [#allocation3], 320
    %v2631 = vld [vmem:[%s2630] ss:$8 sm:$0xf]
    %v2632 = vld [vmem:[%s2630] ss:$8 sm:$0xf0]
    %v2633 = vor.u32 %v2631, %v2632
    %s2634 = scalar_lea.vmem [#allocation3], 448
    %v2635 = vld [vmem:[%s2634] ss:$8 sm:$0xf]
    %v2636 = vld [vmem:[%s2634] ss:$8 sm:$0xf0]
    %v2637 = vor.u32 %v2635, %v2636
    %s2638 = scalar_lea.vmem [#allocation3], 576
    %v2639 = vld [vmem:[%s2638] ss:$8 sm:$0xf]
    %v2640 = vld [vmem:[%s2638] ss:$8 sm:$0xf0]
    %v2641 = vor.u32 %v2639, %v2640
    %s2642 = scalar_lea.vmem [#allocation3], 704
    %v2643 = vld [vmem:[%s2642] ss:$8 sm:$0xf]
    %v2644 = vld [vmem:[%s2642] ss:$8 sm:$0xf0]
    %v2645 = vor.u32 %v2643, %v2644
    %vm2646 = vcmp.eq.s32.totalorder %v55, 8
    %vm2647 = vcmp.eq.s32.totalorder %v56, 8
    %vm2648 = vcmp.eq.s32.totalorder %v57, 8
    %vm2649 = vcmp.eq.s32.totalorder %v58, 8
    %vm2650 = vcmp.eq.s32.totalorder %v59, 8
    %vm2651 = vcmp.eq.s32.totalorder %v60, 8
    %vm2652 = vcmp.eq.s32.totalorder %v61, 8
    %vm2653 = vcmp.eq.s32.totalorder %v62, 8
    %vm2654 = vcmp.eq.s32.totalorder %v63, 8
    %vm2655 = vcmp.eq.s32.totalorder %v64, 8
    %vm2656 = vcmp.eq.s32.totalorder %v65, 8
    %vm2657 = vcmp.eq.s32.totalorder %v66, 8
    %vm2658 = vcmp.eq.s32.totalorder %v67, 8
    %vm2659 = vcmp.eq.s32.totalorder %v68, 8
    %vm2660 = vcmp.eq.s32.totalorder %v69, 8
    %vm2661 = vcmp.eq.s32.totalorder %v70, 8
    %vm2662 = vcmp.eq.s32.totalorder %v71, 8
    %vm2663 = vcmp.eq.s32.totalorder %v72, 8
    %vm2664 = vcmp.eq.s32.totalorder %v73, 8
    %vm2665 = vcmp.eq.s32.totalorder %v74, 8
    %vm2666 = vcmp.eq.s32.totalorder %v75, 8
    %vm2667 = vcmp.eq.s32.totalorder %v76, 8
    %vm2668 = vcmp.eq.s32.totalorder %v77, 8
    %vm2669 = vcmp.eq.s32.totalorder %v78, 8
    %v2676 = vlaneseq
    %v2677 = vshrl.u32 %v2676, 7
    %v2678 = vsub.s32 0, %v2677
    %v2679 = vrot.slane %v2625, %v2678
    %v2680 = vlaneseq
    %v2681 = vshrl.u32 %v2680, 7
    %v2682 = vsub.s32 1, %v2681
    %v2683 = vrot.slane %v2625, %v2682
    %v2684 = vlaneseq
    %v2685 = vshrl.u32 %v2684, 7
    %v2686 = vsub.s32 2, %v2685
    %v2687 = vrot.slane %v2625, %v2686
    %v2688 = vlaneseq
    %v2689 = vshrl.u32 %v2688, 7
    %v2690 = vsub.s32 3, %v2689
    %v2691 = vrot.slane %v2625, %v2690
    %v2692 = vlaneseq
    %v2693 = vshrl.u32 %v2692, 7
    %v2694 = vsub.s32 4, %v2693
    %v2695 = vrot.slane %v2625, %v2694
    %v2696 = vlaneseq
    %v2697 = vshrl.u32 %v2696, 7
    %v2698 = vsub.s32 5, %v2697
    %v2699 = vrot.slane %v2625, %v2698
    %v2700 = vlaneseq
    %v2701 = vshrl.u32 %v2700, 7
    %v2702 = vsub.s32 6, %v2701
    %v2703 = vrot.slane %v2625, %v2702
    %v2704 = vlaneseq
    %v2705 = vshrl.u32 %v2704, 7
    %v2706 = vsub.s32 7, %v2705
    %v2707 = vrot.slane %v2625, %v2706
    %v2708 = vlaneseq
    %v2709 = vshrl.u32 %v2708, 7
    %v2710 = vsub.s32 0, %v2709
    %v2711 = vrot.slane %v2629, %v2710
    %v2712 = vlaneseq
    %v2713 = vshrl.u32 %v2712, 7
    %v2714 = vsub.s32 1, %v2713
    %v2715 = vrot.slane %v2629, %v2714
    %v2716 = vlaneseq
    %v2717 = vshrl.u32 %v2716, 7
    %v2718 = vsub.s32 2, %v2717
    %v2719 = vrot.slane %v2629, %v2718
    %v2720 = vlaneseq
    %v2721 = vshrl.u32 %v2720, 7
    %v2722 = vsub.s32 3, %v2721
    %v2723 = vrot.slane %v2629, %v2722
    %v2724 = vlaneseq
    %v2725 = vshrl.u32 %v2724, 7
    %v2726 = vsub.s32 4, %v2725
    %v2727 = vrot.slane %v2629, %v2726
    %v2728 = vlaneseq
    %v2729 = vshrl.u32 %v2728, 7
    %v2730 = vsub.s32 5, %v2729
    %v2731 = vrot.slane %v2629, %v2730
    %v2732 = vlaneseq
    %v2733 = vshrl.u32 %v2732, 7
    %v2734 = vsub.s32 6, %v2733
    %v2735 = vrot.slane %v2629, %v2734
    %v2736 = vlaneseq
    %v2737 = vshrl.u32 %v2736, 7
    %v2738 = vsub.s32 7, %v2737
    %v2739 = vrot.slane %v2629, %v2738
    %v2740 = vlaneseq
    %v2741 = vshrl.u32 %v2740, 7
    %v2742 = vsub.s32 0, %v2741
    %v2743 = vrot.slane %v2633, %v2742
    %v2744 = vlaneseq
    %v2745 = vshrl.u32 %v2744, 7
    %v2746 = vsub.s32 1, %v2745
    %v2747 = vrot.slane %v2633, %v2746
    %v2748 = vlaneseq
    %v2749 = vshrl.u32 %v2748, 7
    %v2750 = vsub.s32 2, %v2749
    %v2751 = vrot.slane %v2633, %v2750
    %v2752 = vlaneseq
    %v2753 = vshrl.u32 %v2752, 7
    %v2754 = vsub.s32 3, %v2753
    %v2755 = vrot.slane %v2633, %v2754
    %v2756 = vlaneseq
    %v2757 = vshrl.u32 %v2756, 7
    %v2758 = vsub.s32 4, %v2757
    %v2759 = vrot.slane %v2633, %v2758
    %v2760 = vlaneseq
    %v2761 = vshrl.u32 %v2760, 7
    %v2762 = vsub.s32 5, %v2761
    %v2763 = vrot.slane %v2633, %v2762
    %v2764 = vlaneseq
    %v2765 = vshrl.u32 %v2764, 7
    %v2766 = vsub.s32 6, %v2765
    %v2767 = vrot.slane %v2633, %v2766
    %v2768 = vlaneseq
    %v2769 = vshrl.u32 %v2768, 7
    %v2770 = vsub.s32 7, %v2769
    %v2771 = vrot.slane %v2633, %v2770
    %v2772 = vlaneseq
    %v2773 = vshrl.u32 %v2772, 7
    %v2774 = vsub.s32 0, %v2773
    %v2775 = vrot.slane %v2637, %v2774
    %v2776 = vlaneseq
    %v2777 = vshrl.u32 %v2776, 7
    %v2778 = vsub.s32 1, %v2777
    %v2779 = vrot.slane %v2637, %v2778
    %v2780 = vlaneseq
    %v2781 = vshrl.u32 %v2780, 7
    %v2782 = vsub.s32 2, %v2781
    %v2783 = vrot.slane %v2637, %v2782
    %v2784 = vlaneseq
    %v2785 = vshrl.u32 %v2784, 7
    %v2786 = vsub.s32 3, %v2785
    %v2787 = vrot.slane %v2637, %v2786
    %v2788 = vlaneseq
    %v2789 = vshrl.u32 %v2788, 7
    %v2790 = vsub.s32 4, %v2789
    %v2791 = vrot.slane %v2637, %v2790
    %v2792 = vlaneseq
    %v2793 = vshrl.u32 %v2792, 7
    %v2794 = vsub.s32 5, %v2793
    %v2795 = vrot.slane %v2637, %v2794
    %v2796 = vlaneseq
    %v2797 = vshrl.u32 %v2796, 7
    %v2798 = vsub.s32 6, %v2797
    %v2799 = vrot.slane %v2637, %v2798
    %v2800 = vlaneseq
    %v2801 = vshrl.u32 %v2800, 7
    %v2802 = vsub.s32 7, %v2801
    %v2803 = vrot.slane %v2637, %v2802
    %v2804 = vlaneseq
    %v2805 = vshrl.u32 %v2804, 7
    %v2806 = vsub.s32 0, %v2805
    %v2807 = vrot.slane %v2641, %v2806
    %v2808 = vlaneseq
    %v2809 = vshrl.u32 %v2808, 7
    %v2810 = vsub.s32 1, %v2809
    %v2811 = vrot.slane %v2641, %v2810
    %v2812 = vlaneseq
    %v2813 = vshrl.u32 %v2812, 7
    %v2814 = vsub.s32 2, %v2813
    %v2815 = vrot.slane %v2641, %v2814
    %v2816 = vlaneseq
    %v2817 = vshrl.u32 %v2816, 7
    %v2818 = vsub.s32 3, %v2817
    %v2819 = vrot.slane %v2641, %v2818
    %v2820 = vlaneseq
    %v2821 = vshrl.u32 %v2820, 7
    %v2822 = vsub.s32 4, %v2821
    %v2823 = vrot.slane %v2641, %v2822
    %v2824 = vlaneseq
    %v2825 = vshrl.u32 %v2824, 7
    %v2826 = vsub.s32 5, %v2825
    %v2827 = vrot.slane %v2641, %v2826
    %v2828 = vlaneseq
    %v2829 = vshrl.u32 %v2828, 7
    %v2830 = vsub.s32 6, %v2829
    %v2831 = vrot.slane %v2641, %v2830
    %v2832 = vlaneseq
    %v2833 = vshrl.u32 %v2832, 7
    %v2834 = vsub.s32 7, %v2833
    %v2835 = vrot.slane %v2641, %v2834
    %v2836 = vlaneseq
    %v2837 = vshrl.u32 %v2836, 7
    %v2838 = vsub.s32 0, %v2837
    %v2839 = vrot.slane %v2645, %v2838
    %v2840 = vlaneseq
    %v2841 = vshrl.u32 %v2840, 7
    %v2842 = vsub.s32 1, %v2841
    %v2843 = vrot.slane %v2645, %v2842
    %v2844 = vlaneseq
    %v2845 = vshrl.u32 %v2844, 7
    %v2846 = vsub.s32 2, %v2845
    %v2847 = vrot.slane %v2645, %v2846
    %v2848 = vlaneseq
    %v2849 = vshrl.u32 %v2848, 7
    %v2850 = vsub.s32 3, %v2849
    %v2851 = vrot.slane %v2645, %v2850
    %v2852 = vlaneseq
    %v2853 = vshrl.u32 %v2852, 7
    %v2854 = vsub.s32 4, %v2853
    %v2855 = vrot.slane %v2645, %v2854
    %v2856 = vlaneseq
    %v2857 = vshrl.u32 %v2856, 7
    %v2858 = vsub.s32 5, %v2857
    %v2859 = vrot.slane %v2645, %v2858
    %v2860 = vlaneseq
    %v2861 = vshrl.u32 %v2860, 7
    %v2862 = vsub.s32 6, %v2861
    %v2863 = vrot.slane %v2645, %v2862
    %v2864 = vlaneseq
    %v2865 = vshrl.u32 %v2864, 7
    %v2866 = vsub.s32 7, %v2865
    %v2867 = vrot.slane %v2645, %v2866
    %v2868 = vcombine.low %v2679, %v2683
    %v2869 = vcombine.low %v2687, %v2691
    %v2870 = vcombine.low %v2695, %v2699
    %v2871 = vcombine.low %v2703, %v2707
    %v2872 = vcombine.low %v2711, %v2715
    %v2873 = vcombine.low %v2719, %v2723
    %v2874 = vcombine.low %v2727, %v2731
    %v2875 = vcombine.low %v2735, %v2739
    %v2876 = vcombine.low %v2743, %v2747
    %v2877 = vcombine.low %v2751, %v2755
    %v2878 = vcombine.low %v2759, %v2763
    %v2879 = vcombine.low %v2767, %v2771
    %v2880 = vcombine.low %v2775, %v2779
    %v2881 = vcombine.low %v2783, %v2787
    %v2882 = vcombine.low %v2791, %v2795
    %v2883 = vcombine.low %v2799, %v2803
    %v2884 = vcombine.low %v2807, %v2811
    %v2885 = vcombine.low %v2815, %v2819
    %v2886 = vcombine.low %v2823, %v2827
    %v2887 = vcombine.low %v2831, %v2835
    %v2888 = vcombine.low %v2839, %v2843
    %v2889 = vcombine.low %v2847, %v2851
    %v2890 = vcombine.low %v2855, %v2859
    %v2891 = vcombine.low %v2863, %v2867
    %v2916 = vsel %vm2646, %v2868, %v2598
    %v2917 = vsel %vm2647, %v2869, %v2599
    %v2918 = vsel %vm2648, %v2870, %v2600
    %v2919 = vsel %vm2649, %v2871, %v2601
    %v2920 = vsel %vm2650, %v2872, %v2602
    %v2921 = vsel %vm2651, %v2873, %v2603
    %v2922 = vsel %vm2652, %v2874, %v2604
    %v2923 = vsel %vm2653, %v2875, %v2605
    %v2924 = vsel %vm2654, %v2876, %v2606
    %v2925 = vsel %vm2655, %v2877, %v2607
    %v2926 = vsel %vm2656, %v2878, %v2608
    %v2927 = vsel %vm2657, %v2879, %v2609
    %v2928 = vsel %vm2658, %v2880, %v2610
    %v2929 = vsel %vm2659, %v2881, %v2611
    %v2930 = vsel %vm2660, %v2882, %v2612
    %v2931 = vsel %vm2661, %v2883, %v2613
    %v2932 = vsel %vm2662, %v2884, %v2614
    %v2933 = vsel %vm2663, %v2885, %v2615
    %v2934 = vsel %vm2664, %v2886, %v2616
    %v2935 = vsel %vm2665, %v2887, %v2617
    %v2936 = vsel %vm2666, %v2888, %v2618
    %v2937 = vsel %vm2667, %v2889, %v2619
    %v2938 = vsel %vm2668, %v2890, %v2620
    %v2939 = vsel %vm2669, %v2891, %v2621
    %s2940 = scalar_lea.vmem [#allocation3], 65
    %v2941 = vld [vmem:[%s2940] ss:$8 sm:$0xf]
    %v2942 = vld [vmem:[%s2940] ss:$8 sm:$0xf0]
    %v2943 = vor.u32 %v2941, %v2942
    %s2944 = scalar_lea.vmem [#allocation3], 193
    %v2945 = vld [vmem:[%s2944] ss:$8 sm:$0xf]
    %v2946 = vld [vmem:[%s2944] ss:$8 sm:$0xf0]
    %v2947 = vor.u32 %v2945, %v2946
    %s2948 = scalar_lea.vmem [#allocation3], 321
    %v2949 = vld [vmem:[%s2948] ss:$8 sm:$0xf]
    %v2950 = vld [vmem:[%s2948] ss:$8 sm:$0xf0]
    %v2951 = vor.u32 %v2949, %v2950
    %s2952 = scalar_lea.vmem [#allocation3], 449
    %v2953 = vld [vmem:[%s2952] ss:$8 sm:$0xf]
    %v2954 = vld [vmem:[%s2952] ss:$8 sm:$0xf0]
    %v2955 = vor.u32 %v2953, %v2954
    %s2956 = scalar_lea.vmem [#allocation3], 577
    %v2957 = vld [vmem:[%s2956] ss:$8 sm:$0xf]
    %v2958 = vld [vmem:[%s2956] ss:$8 sm:$0xf0]
    %v2959 = vor.u32 %v2957, %v2958
    %s2960 = scalar_lea.vmem [#allocation3], 705
    %v2961 = vld [vmem:[%s2960] ss:$8 sm:$0xf]
    %v2962 = vld [vmem:[%s2960] ss:$8 sm:$0xf0]
    %v2963 = vor.u32 %v2961, %v2962
    %vm2964 = vcmp.eq.s32.totalorder %v55, 9
    %vm2965 = vcmp.eq.s32.totalorder %v56, 9
    %vm2966 = vcmp.eq.s32.totalorder %v57, 9
    %vm2967 = vcmp.eq.s32.totalorder %v58, 9
    %vm2968 = vcmp.eq.s32.totalorder %v59, 9
    %vm2969 = vcmp.eq.s32.totalorder %v60, 9
    %vm2970 = vcmp.eq.s32.totalorder %v61, 9
    %vm2971 = vcmp.eq.s32.totalorder %v62, 9
    %vm2972 = vcmp.eq.s32.totalorder %v63, 9
    %vm2973 = vcmp.eq.s32.totalorder %v64, 9
    %vm2974 = vcmp.eq.s32.totalorder %v65, 9
    %vm2975 = vcmp.eq.s32.totalorder %v66, 9
    %vm2976 = vcmp.eq.s32.totalorder %v67, 9
    %vm2977 = vcmp.eq.s32.totalorder %v68, 9
    %vm2978 = vcmp.eq.s32.totalorder %v69, 9
    %vm2979 = vcmp.eq.s32.totalorder %v70, 9
    %vm2980 = vcmp.eq.s32.totalorder %v71, 9
    %vm2981 = vcmp.eq.s32.totalorder %v72, 9
    %vm2982 = vcmp.eq.s32.totalorder %v73, 9
    %vm2983 = vcmp.eq.s32.totalorder %v74, 9
    %vm2984 = vcmp.eq.s32.totalorder %v75, 9
    %vm2985 = vcmp.eq.s32.totalorder %v76, 9
    %vm2986 = vcmp.eq.s32.totalorder %v77, 9
    %vm2987 = vcmp.eq.s32.totalorder %v78, 9
    %v2994 = vlaneseq
    %v2995 = vshrl.u32 %v2994, 7
    %v2996 = vsub.s32 0, %v2995
    %v2997 = vrot.slane %v2943, %v2996
    %v2998 = vlaneseq
    %v2999 = vshrl.u32 %v2998, 7
    %v3000 = vsub.s32 1, %v2999
    %v3001 = vrot.slane %v2943, %v3000
    %v3002 = vlaneseq
    %v3003 = vshrl.u32 %v3002, 7
    %v3004 = vsub.s32 2, %v3003
    %v3005 = vrot.slane %v2943, %v3004
    %v3006 = vlaneseq
    %v3007 = vshrl.u32 %v3006, 7
    %v3008 = vsub.s32 3, %v3007
    %v3009 = vrot.slane %v2943, %v3008
    %v3010 = vlaneseq
    %v3011 = vshrl.u32 %v3010, 7
    %v3012 = vsub.s32 4, %v3011
    %v3013 = vrot.slane %v2943, %v3012
    %v3014 = vlaneseq
    %v3015 = vshrl.u32 %v3014, 7
    %v3016 = vsub.s32 5, %v3015
    %v3017 = vrot.slane %v2943, %v3016
    %v3018 = vlaneseq
    %v3019 = vshrl.u32 %v3018, 7
    %v3020 = vsub.s32 6, %v3019
    %v3021 = vrot.slane %v2943, %v3020
    %v3022 = vlaneseq
    %v3023 = vshrl.u32 %v3022, 7
    %v3024 = vsub.s32 7, %v3023
    %v3025 = vrot.slane %v2943, %v3024
    %v3026 = vlaneseq
    %v3027 = vshrl.u32 %v3026, 7
    %v3028 = vsub.s32 0, %v3027
    %v3029 = vrot.slane %v2947, %v3028
    %v3030 = vlaneseq
    %v3031 = vshrl.u32 %v3030, 7
    %v3032 = vsub.s32 1, %v3031
    %v3033 = vrot.slane %v2947, %v3032
    %v3034 = vlaneseq
    %v3035 = vshrl.u32 %v3034, 7
    %v3036 = vsub.s32 2, %v3035
    %v3037 = vrot.slane %v2947, %v3036
    %v3038 = vlaneseq
    %v3039 = vshrl.u32 %v3038, 7
    %v3040 = vsub.s32 3, %v3039
    %v3041 = vrot.slane %v2947, %v3040
    %v3042 = vlaneseq
    %v3043 = vshrl.u32 %v3042, 7
    %v3044 = vsub.s32 4, %v3043
    %v3045 = vrot.slane %v2947, %v3044
    %v3046 = vlaneseq
    %v3047 = vshrl.u32 %v3046, 7
    %v3048 = vsub.s32 5, %v3047
    %v3049 = vrot.slane %v2947, %v3048
    %v3050 = vlaneseq
    %v3051 = vshrl.u32 %v3050, 7
    %v3052 = vsub.s32 6, %v3051
    %v3053 = vrot.slane %v2947, %v3052
    %v3054 = vlaneseq
    %v3055 = vshrl.u32 %v3054, 7
    %v3056 = vsub.s32 7, %v3055
    %v3057 = vrot.slane %v2947, %v3056
    %v3058 = vlaneseq
    %v3059 = vshrl.u32 %v3058, 7
    %v3060 = vsub.s32 0, %v3059
    %v3061 = vrot.slane %v2951, %v3060
    %v3062 = vlaneseq
    %v3063 = vshrl.u32 %v3062, 7
    %v3064 = vsub.s32 1, %v3063
    %v3065 = vrot.slane %v2951, %v3064
    %v3066 = vlaneseq
    %v3067 = vshrl.u32 %v3066, 7
    %v3068 = vsub.s32 2, %v3067
    %v3069 = vrot.slane %v2951, %v3068
    %v3070 = vlaneseq
    %v3071 = vshrl.u32 %v3070, 7
    %v3072 = vsub.s32 3, %v3071
    %v3073 = vrot.slane %v2951, %v3072
    %v3074 = vlaneseq
    %v3075 = vshrl.u32 %v3074, 7
    %v3076 = vsub.s32 4, %v3075
    %v3077 = vrot.slane %v2951, %v3076
    %v3078 = vlaneseq
    %v3079 = vshrl.u32 %v3078, 7
    %v3080 = vsub.s32 5, %v3079
    %v3081 = vrot.slane %v2951, %v3080
    %v3082 = vlaneseq
    %v3083 = vshrl.u32 %v3082, 7
    %v3084 = vsub.s32 6, %v3083
    %v3085 = vrot.slane %v2951, %v3084
    %v3086 = vlaneseq
    %v3087 = vshrl.u32 %v3086, 7
    %v3088 = vsub.s32 7, %v3087
    %v3089 = vrot.slane %v2951, %v3088
    %v3090 = vlaneseq
    %v3091 = vshrl.u32 %v3090, 7
    %v3092 = vsub.s32 0, %v3091
    %v3093 = vrot.slane %v2955, %v3092
    %v3094 = vlaneseq
    %v3095 = vshrl.u32 %v3094, 7
    %v3096 = vsub.s32 1, %v3095
    %v3097 = vrot.slane %v2955, %v3096
    %v3098 = vlaneseq
    %v3099 = vshrl.u32 %v3098, 7
    %v3100 = vsub.s32 2, %v3099
    %v3101 = vrot.slane %v2955, %v3100
    %v3102 = vlaneseq
    %v3103 = vshrl.u32 %v3102, 7
    %v3104 = vsub.s32 3, %v3103
    %v3105 = vrot.slane %v2955, %v3104
    %v3106 = vlaneseq
    %v3107 = vshrl.u32 %v3106, 7
    %v3108 = vsub.s32 4, %v3107
    %v3109 = vrot.slane %v2955, %v3108
    %v3110 = vlaneseq
    %v3111 = vshrl.u32 %v3110, 7
    %v3112 = vsub.s32 5, %v3111
    %v3113 = vrot.slane %v2955, %v3112
    %v3114 = vlaneseq
    %v3115 = vshrl.u32 %v3114, 7
    %v3116 = vsub.s32 6, %v3115
    %v3117 = vrot.slane %v2955, %v3116
    %v3118 = vlaneseq
    %v3119 = vshrl.u32 %v3118, 7
    %v3120 = vsub.s32 7, %v3119
    %v3121 = vrot.slane %v2955, %v3120
    %v3122 = vlaneseq
    %v3123 = vshrl.u32 %v3122, 7
    %v3124 = vsub.s32 0, %v3123
    %v3125 = vrot.slane %v2959, %v3124
    %v3126 = vlaneseq
    %v3127 = vshrl.u32 %v3126, 7
    %v3128 = vsub.s32 1, %v3127
    %v3129 = vrot.slane %v2959, %v3128
    %v3130 = vlaneseq
    %v3131 = vshrl.u32 %v3130, 7
    %v3132 = vsub.s32 2, %v3131
    %v3133 = vrot.slane %v2959, %v3132
    %v3134 = vlaneseq
    %v3135 = vshrl.u32 %v3134, 7
    %v3136 = vsub.s32 3, %v3135
    %v3137 = vrot.slane %v2959, %v3136
    %v3138 = vlaneseq
    %v3139 = vshrl.u32 %v3138, 7
    %v3140 = vsub.s32 4, %v3139
    %v3141 = vrot.slane %v2959, %v3140
    %v3142 = vlaneseq
    %v3143 = vshrl.u32 %v3142, 7
    %v3144 = vsub.s32 5, %v3143
    %v3145 = vrot.slane %v2959, %v3144
    %v3146 = vlaneseq
    %v3147 = vshrl.u32 %v3146, 7
    %v3148 = vsub.s32 6, %v3147
    %v3149 = vrot.slane %v2959, %v3148
    %v3150 = vlaneseq
    %v3151 = vshrl.u32 %v3150, 7
    %v3152 = vsub.s32 7, %v3151
    %v3153 = vrot.slane %v2959, %v3152
    %v3154 = vlaneseq
    %v3155 = vshrl.u32 %v3154, 7
    %v3156 = vsub.s32 0, %v3155
    %v3157 = vrot.slane %v2963, %v3156
    %v3158 = vlaneseq
    %v3159 = vshrl.u32 %v3158, 7
    %v3160 = vsub.s32 1, %v3159
    %v3161 = vrot.slane %v2963, %v3160
    %v3162 = vlaneseq
    %v3163 = vshrl.u32 %v3162, 7
    %v3164 = vsub.s32 2, %v3163
    %v3165 = vrot.slane %v2963, %v3164
    %v3166 = vlaneseq
    %v3167 = vshrl.u32 %v3166, 7
    %v3168 = vsub.s32 3, %v3167
    %v3169 = vrot.slane %v2963, %v3168
    %v3170 = vlaneseq
    %v3171 = vshrl.u32 %v3170, 7
    %v3172 = vsub.s32 4, %v3171
    %v3173 = vrot.slane %v2963, %v3172
    %v3174 = vlaneseq
    %v3175 = vshrl.u32 %v3174, 7
    %v3176 = vsub.s32 5, %v3175
    %v3177 = vrot.slane %v2963, %v3176
    %v3178 = vlaneseq
    %v3179 = vshrl.u32 %v3178, 7
    %v3180 = vsub.s32 6, %v3179
    %v3181 = vrot.slane %v2963, %v3180
    %v3182 = vlaneseq
    %v3183 = vshrl.u32 %v3182, 7
    %v3184 = vsub.s32 7, %v3183
    %v3185 = vrot.slane %v2963, %v3184
    %v3186 = vcombine.low %v2997, %v3001
    %v3187 = vcombine.low %v3005, %v3009
    %v3188 = vcombine.low %v3013, %v3017
    %v3189 = vcombine.low %v3021, %v3025
    %v3190 = vcombine.low %v3029, %v3033
    %v3191 = vcombine.low %v3037, %v3041
    %v3192 = vcombine.low %v3045, %v3049
    %v3193 = vcombine.low %v3053, %v3057
    %v3194 = vcombine.low %v3061, %v3065
    %v3195 = vcombine.low %v3069, %v3073
    %v3196 = vcombine.low %v3077, %v3081
    %v3197 = vcombine.low %v3085, %v3089
    %v3198 = vcombine.low %v3093, %v3097
    %v3199 = vcombine.low %v3101, %v3105
    %v3200 = vcombine.low %v3109, %v3113
    %v3201 = vcombine.low %v3117, %v3121
    %v3202 = vcombine.low %v3125, %v3129
    %v3203 = vcombine.low %v3133, %v3137
    %v3204 = vcombine.low %v3141, %v3145
    %v3205 = vcombine.low %v3149, %v3153
    %v3206 = vcombine.low %v3157, %v3161
    %v3207 = vcombine.low %v3165, %v3169
    %v3208 = vcombine.low %v3173, %v3177
    %v3209 = vcombine.low %v3181, %v3185
    %v3234 = vsel %vm2964, %v3186, %v2916
    %v3235 = vsel %vm2965, %v3187, %v2917
    %v3236 = vsel %vm2966, %v3188, %v2918
    %v3237 = vsel %vm2967, %v3189, %v2919
    %v3238 = vsel %vm2968, %v3190, %v2920
    %v3239 = vsel %vm2969, %v3191, %v2921
    %v3240 = vsel %vm2970, %v3192, %v2922
    %v3241 = vsel %vm2971, %v3193, %v2923
    %v3242 = vsel %vm2972, %v3194, %v2924
    %v3243 = vsel %vm2973, %v3195, %v2925
    %v3244 = vsel %vm2974, %v3196, %v2926
    %v3245 = vsel %vm2975, %v3197, %v2927
    %v3246 = vsel %vm2976, %v3198, %v2928
    %v3247 = vsel %vm2977, %v3199, %v2929
    %v3248 = vsel %vm2978, %v3200, %v2930
    %v3249 = vsel %vm2979, %v3201, %v2931
    %v3250 = vsel %vm2980, %v3202, %v2932
    %v3251 = vsel %vm2981, %v3203, %v2933
    %v3252 = vsel %vm2982, %v3204, %v2934
    %v3253 = vsel %vm2983, %v3205, %v2935
    %v3254 = vsel %vm2984, %v3206, %v2936
    %v3255 = vsel %vm2985, %v3207, %v2937
    %v3256 = vsel %vm2986, %v3208, %v2938
    %v3257 = vsel %vm2987, %v3209, %v2939
    %s3258 = scalar_lea.vmem [#allocation3], 66
    %v3259 = vld [vmem:[%s3258] ss:$8 sm:$0xf]
    %v3260 = vld [vmem:[%s3258] ss:$8 sm:$0xf0]
    %v3261 = vor.u32 %v3259, %v3260
    %s3262 = scalar_lea.vmem [#allocation3], 194
    %v3263 = vld [vmem:[%s3262] ss:$8 sm:$0xf]
    %v3264 = vld [vmem:[%s3262] ss:$8 sm:$0xf0]
    %v3265 = vor.u32 %v3263, %v3264
    %s3266 = scalar_lea.vmem [#allocation3], 322
    %v3267 = vld [vmem:[%s3266] ss:$8 sm:$0xf]
    %v3268 = vld [vmem:[%s3266] ss:$8 sm:$0xf0]
    %v3269 = vor.u32 %v3267, %v3268
    %s3270 = scalar_lea.vmem [#allocation3], 450
    %v3271 = vld [vmem:[%s3270] ss:$8 sm:$0xf]
    %v3272 = vld [vmem:[%s3270] ss:$8 sm:$0xf0]
    %v3273 = vor.u32 %v3271, %v3272
    %s3274 = scalar_lea.vmem [#allocation3], 578
    %v3275 = vld [vmem:[%s3274] ss:$8 sm:$0xf]
    %v3276 = vld [vmem:[%s3274] ss:$8 sm:$0xf0]
    %v3277 = vor.u32 %v3275, %v3276
    %s3278 = scalar_lea.vmem [#allocation3], 706
    %v3279 = vld [vmem:[%s3278] ss:$8 sm:$0xf]
    %v3280 = vld [vmem:[%s3278] ss:$8 sm:$0xf0]
    %v3281 = vor.u32 %v3279, %v3280
    %vm3282 = vcmp.eq.s32.totalorder %v55, 10
    %vm3283 = vcmp.eq.s32.totalorder %v56, 10
    %vm3284 = vcmp.eq.s32.totalorder %v57, 10
    %vm3285 = vcmp.eq.s32.totalorder %v58, 10
    %vm3286 = vcmp.eq.s32.totalorder %v59, 10
    %vm3287 = vcmp.eq.s32.totalorder %v60, 10
    %vm3288 = vcmp.eq.s32.totalorder %v61, 10
    %vm3289 = vcmp.eq.s32.totalorder %v62, 10
    %vm3290 = vcmp.eq.s32.totalorder %v63, 10
    %vm3291 = vcmp.eq.s32.totalorder %v64, 10
    %vm3292 = vcmp.eq.s32.totalorder %v65, 10
    %vm3293 = vcmp.eq.s32.totalorder %v66, 10
    %vm3294 = vcmp.eq.s32.totalorder %v67, 10
    %vm3295 = vcmp.eq.s32.totalorder %v68, 10
    %vm3296 = vcmp.eq.s32.totalorder %v69, 10
    %vm3297 = vcmp.eq.s32.totalorder %v70, 10
    %vm3298 = vcmp.eq.s32.totalorder %v71, 10
    %vm3299 = vcmp.eq.s32.totalorder %v72, 10
    %vm3300 = vcmp.eq.s32.totalorder %v73, 10
    %vm3301 = vcmp.eq.s32.totalorder %v74, 10
    %vm3302 = vcmp.eq.s32.totalorder %v75, 10
    %vm3303 = vcmp.eq.s32.totalorder %v76, 10
    %vm3304 = vcmp.eq.s32.totalorder %v77, 10
    %vm3305 = vcmp.eq.s32.totalorder %v78, 10
    %v3312 = vlaneseq
    %v3313 = vshrl.u32 %v3312, 7
    %v3314 = vsub.s32 0, %v3313
    %v3315 = vrot.slane %v3261, %v3314
    %v3316 = vlaneseq
    %v3317 = vshrl.u32 %v3316, 7
    %v3318 = vsub.s32 1, %v3317
    %v3319 = vrot.slane %v3261, %v3318
    %v3320 = vlaneseq
    %v3321 = vshrl.u32 %v3320, 7
    %v3322 = vsub.s32 2, %v3321
    %v3323 = vrot.slane %v3261, %v3322
    %v3324 = vlaneseq
    %v3325 = vshrl.u32 %v3324, 7
    %v3326 = vsub.s32 3, %v3325
    %v3327 = vrot.slane %v3261, %v3326
    %v3328 = vlaneseq
    %v3329 = vshrl.u32 %v3328, 7
    %v3330 = vsub.s32 4, %v3329
    %v3331 = vrot.slane %v3261, %v3330
    %v3332 = vlaneseq
    %v3333 = vshrl.u32 %v3332, 7
    %v3334 = vsub.s32 5, %v3333
    %v3335 = vrot.slane %v3261, %v3334
    %v3336 = vlaneseq
    %v3337 = vshrl.u32 %v3336, 7
    %v3338 = vsub.s32 6, %v3337
    %v3339 = vrot.slane %v3261, %v3338
    %v3340 = vlaneseq
    %v3341 = vshrl.u32 %v3340, 7
    %v3342 = vsub.s32 7, %v3341
    %v3343 = vrot.slane %v3261, %v3342
    %v3344 = vlaneseq
    %v3345 = vshrl.u32 %v3344, 7
    %v3346 = vsub.s32 0, %v3345
    %v3347 = vrot.slane %v3265, %v3346
    %v3348 = vlaneseq
    %v3349 = vshrl.u32 %v3348, 7
    %v3350 = vsub.s32 1, %v3349
    %v3351 = vrot.slane %v3265, %v3350
    %v3352 = vlaneseq
    %v3353 = vshrl.u32 %v3352, 7
    %v3354 = vsub.s32 2, %v3353
    %v3355 = vrot.slane %v3265, %v3354
    %v3356 = vlaneseq
    %v3357 = vshrl.u32 %v3356, 7
    %v3358 = vsub.s32 3, %v3357
    %v3359 = vrot.slane %v3265, %v3358
    %v3360 = vlaneseq
    %v3361 = vshrl.u32 %v3360, 7
    %v3362 = vsub.s32 4, %v3361
    %v3363 = vrot.slane %v3265, %v3362
    %v3364 = vlaneseq
    %v3365 = vshrl.u32 %v3364, 7
    %v3366 = vsub.s32 5, %v3365
    %v3367 = vrot.slane %v3265, %v3366
    %v3368 = vlaneseq
    %v3369 = vshrl.u32 %v3368, 7
    %v3370 = vsub.s32 6, %v3369
    %v3371 = vrot.slane %v3265, %v3370
    %v3372 = vlaneseq
    %v3373 = vshrl.u32 %v3372, 7
    %v3374 = vsub.s32 7, %v3373
    %v3375 = vrot.slane %v3265, %v3374
    %v3376 = vlaneseq
    %v3377 = vshrl.u32 %v3376, 7
    %v3378 = vsub.s32 0, %v3377
    %v3379 = vrot.slane %v3269, %v3378
    %v3380 = vlaneseq
    %v3381 = vshrl.u32 %v3380, 7
    %v3382 = vsub.s32 1, %v3381
    %v3383 = vrot.slane %v3269, %v3382
    %v3384 = vlaneseq
    %v3385 = vshrl.u32 %v3384, 7
    %v3386 = vsub.s32 2, %v3385
    %v3387 = vrot.slane %v3269, %v3386
    %v3388 = vlaneseq
    %v3389 = vshrl.u32 %v3388, 7
    %v3390 = vsub.s32 3, %v3389
    %v3391 = vrot.slane %v3269, %v3390
    %v3392 = vlaneseq
    %v3393 = vshrl.u32 %v3392, 7
    %v3394 = vsub.s32 4, %v3393
    %v3395 = vrot.slane %v3269, %v3394
    %v3396 = vlaneseq
    %v3397 = vshrl.u32 %v3396, 7
    %v3398 = vsub.s32 5, %v3397
    %v3399 = vrot.slane %v3269, %v3398
    %v3400 = vlaneseq
    %v3401 = vshrl.u32 %v3400, 7
    %v3402 = vsub.s32 6, %v3401
    %v3403 = vrot.slane %v3269, %v3402
    %v3404 = vlaneseq
    %v3405 = vshrl.u32 %v3404, 7
    %v3406 = vsub.s32 7, %v3405
    %v3407 = vrot.slane %v3269, %v3406
    %v3408 = vlaneseq
    %v3409 = vshrl.u32 %v3408, 7
    %v3410 = vsub.s32 0, %v3409
    %v3411 = vrot.slane %v3273, %v3410
    %v3412 = vlaneseq
    %v3413 = vshrl.u32 %v3412, 7
    %v3414 = vsub.s32 1, %v3413
    %v3415 = vrot.slane %v3273, %v3414
    %v3416 = vlaneseq
    %v3417 = vshrl.u32 %v3416, 7
    %v3418 = vsub.s32 2, %v3417
    %v3419 = vrot.slane %v3273, %v3418
    %v3420 = vlaneseq
    %v3421 = vshrl.u32 %v3420, 7
    %v3422 = vsub.s32 3, %v3421
    %v3423 = vrot.slane %v3273, %v3422
    %v3424 = vlaneseq
    %v3425 = vshrl.u32 %v3424, 7
    %v3426 = vsub.s32 4, %v3425
    %v3427 = vrot.slane %v3273, %v3426
    %v3428 = vlaneseq
    %v3429 = vshrl.u32 %v3428, 7
    %v3430 = vsub.s32 5, %v3429
    %v3431 = vrot.slane %v3273, %v3430
    %v3432 = vlaneseq
    %v3433 = vshrl.u32 %v3432, 7
    %v3434 = vsub.s32 6, %v3433
    %v3435 = vrot.slane %v3273, %v3434
    %v3436 = vlaneseq
    %v3437 = vshrl.u32 %v3436, 7
    %v3438 = vsub.s32 7, %v3437
    %v3439 = vrot.slane %v3273, %v3438
    %v3440 = vlaneseq
    %v3441 = vshrl.u32 %v3440, 7
    %v3442 = vsub.s32 0, %v3441
    %v3443 = vrot.slane %v3277, %v3442
    %v3444 = vlaneseq
    %v3445 = vshrl.u32 %v3444, 7
    %v3446 = vsub.s32 1, %v3445
    %v3447 = vrot.slane %v3277, %v3446
    %v3448 = vlaneseq
    %v3449 = vshrl.u32 %v3448, 7
    %v3450 = vsub.s32 2, %v3449
    %v3451 = vrot.slane %v3277, %v3450
    %v3452 = vlaneseq
    %v3453 = vshrl.u32 %v3452, 7
    %v3454 = vsub.s32 3, %v3453
    %v3455 = vrot.slane %v3277, %v3454
    %v3456 = vlaneseq
    %v3457 = vshrl.u32 %v3456, 7
    %v3458 = vsub.s32 4, %v3457
    %v3459 = vrot.slane %v3277, %v3458
    %v3460 = vlaneseq
    %v3461 = vshrl.u32 %v3460, 7
    %v3462 = vsub.s32 5, %v3461
    %v3463 = vrot.slane %v3277, %v3462
    %v3464 = vlaneseq
    %v3465 = vshrl.u32 %v3464, 7
    %v3466 = vsub.s32 6, %v3465
    %v3467 = vrot.slane %v3277, %v3466
    %v3468 = vlaneseq
    %v3469 = vshrl.u32 %v3468, 7
    %v3470 = vsub.s32 7, %v3469
    %v3471 = vrot.slane %v3277, %v3470
    %v3472 = vlaneseq
    %v3473 = vshrl.u32 %v3472, 7
    %v3474 = vsub.s32 0, %v3473
    %v3475 = vrot.slane %v3281, %v3474
    %v3476 = vlaneseq
    %v3477 = vshrl.u32 %v3476, 7
    %v3478 = vsub.s32 1, %v3477
    %v3479 = vrot.slane %v3281, %v3478
    %v3480 = vlaneseq
    %v3481 = vshrl.u32 %v3480, 7
    %v3482 = vsub.s32 2, %v3481
    %v3483 = vrot.slane %v3281, %v3482
    %v3484 = vlaneseq
    %v3485 = vshrl.u32 %v3484, 7
    %v3486 = vsub.s32 3, %v3485
    %v3487 = vrot.slane %v3281, %v3486
    %v3488 = vlaneseq
    %v3489 = vshrl.u32 %v3488, 7
    %v3490 = vsub.s32 4, %v3489
    %v3491 = vrot.slane %v3281, %v3490
    %v3492 = vlaneseq
    %v3493 = vshrl.u32 %v3492, 7
    %v3494 = vsub.s32 5, %v3493
    %v3495 = vrot.slane %v3281, %v3494
    %v3496 = vlaneseq
    %v3497 = vshrl.u32 %v3496, 7
    %v3498 = vsub.s32 6, %v3497
    %v3499 = vrot.slane %v3281, %v3498
    %v3500 = vlaneseq
    %v3501 = vshrl.u32 %v3500, 7
    %v3502 = vsub.s32 7, %v3501
    %v3503 = vrot.slane %v3281, %v3502
    %v3504 = vcombine.low %v3315, %v3319
    %v3505 = vcombine.low %v3323, %v3327
    %v3506 = vcombine.low %v3331, %v3335
    %v3507 = vcombine.low %v3339, %v3343
    %v3508 = vcombine.low %v3347, %v3351
    %v3509 = vcombine.low %v3355, %v3359
    %v3510 = vcombine.low %v3363, %v3367
    %v3511 = vcombine.low %v3371, %v3375
    %v3512 = vcombine.low %v3379, %v3383
    %v3513 = vcombine.low %v3387, %v3391
    %v3514 = vcombine.low %v3395, %v3399
    %v3515 = vcombine.low %v3403, %v3407
    %v3516 = vcombine.low %v3411, %v3415
    %v3517 = vcombine.low %v3419, %v3423
    %v3518 = vcombine.low %v3427, %v3431
    %v3519 = vcombine.low %v3435, %v3439
    %v3520 = vcombine.low %v3443, %v3447
    %v3521 = vcombine.low %v3451, %v3455
    %v3522 = vcombine.low %v3459, %v3463
    %v3523 = vcombine.low %v3467, %v3471
    %v3524 = vcombine.low %v3475, %v3479
    %v3525 = vcombine.low %v3483, %v3487
    %v3526 = vcombine.low %v3491, %v3495
    %v3527 = vcombine.low %v3499, %v3503
    %v3552 = vsel %vm3282, %v3504, %v3234
    %v3553 = vsel %vm3283, %v3505, %v3235
    %v3554 = vsel %vm3284, %v3506, %v3236
    %v3555 = vsel %vm3285, %v3507, %v3237
    %v3556 = vsel %vm3286, %v3508, %v3238
    %v3557 = vsel %vm3287, %v3509, %v3239
    %v3558 = vsel %vm3288, %v3510, %v3240
    %v3559 = vsel %vm3289, %v3511, %v3241
    %v3560 = vsel %vm3290, %v3512, %v3242
    %v3561 = vsel %vm3291, %v3513, %v3243
    %v3562 = vsel %vm3292, %v3514, %v3244
    %v3563 = vsel %vm3293, %v3515, %v3245
    %v3564 = vsel %vm3294, %v3516, %v3246
    %v3565 = vsel %vm3295, %v3517, %v3247
    %v3566 = vsel %vm3296, %v3518, %v3248
    %v3567 = vsel %vm3297, %v3519, %v3249
    %v3568 = vsel %vm3298, %v3520, %v3250
    %v3569 = vsel %vm3299, %v3521, %v3251
    %v3570 = vsel %vm3300, %v3522, %v3252
    %v3571 = vsel %vm3301, %v3523, %v3253
    %v3572 = vsel %vm3302, %v3524, %v3254
    %v3573 = vsel %vm3303, %v3525, %v3255
    %v3574 = vsel %vm3304, %v3526, %v3256
    %v3575 = vsel %vm3305, %v3527, %v3257
    %s3576 = scalar_lea.vmem [#allocation3], 67
    %v3577 = vld [vmem:[%s3576] ss:$8 sm:$0xf]
    %v3578 = vld [vmem:[%s3576] ss:$8 sm:$0xf0]
    %v3579 = vor.u32 %v3577, %v3578
    %s3580 = scalar_lea.vmem [#allocation3], 195
    %v3581 = vld [vmem:[%s3580] ss:$8 sm:$0xf]
    %v3582 = vld [vmem:[%s3580] ss:$8 sm:$0xf0]
    %v3583 = vor.u32 %v3581, %v3582
    %s3584 = scalar_lea.vmem [#allocation3], 323
    %v3585 = vld [vmem:[%s3584] ss:$8 sm:$0xf]
    %v3586 = vld [vmem:[%s3584] ss:$8 sm:$0xf0]
    %v3587 = vor.u32 %v3585, %v3586
    %s3588 = scalar_lea.vmem [#allocation3], 451
    %v3589 = vld [vmem:[%s3588] ss:$8 sm:$0xf]
    %v3590 = vld [vmem:[%s3588] ss:$8 sm:$0xf0]
    %v3591 = vor.u32 %v3589, %v3590
    %s3592 = scalar_lea.vmem [#allocation3], 579
    %v3593 = vld [vmem:[%s3592] ss:$8 sm:$0xf]
    %v3594 = vld [vmem:[%s3592] ss:$8 sm:$0xf0]
    %v3595 = vor.u32 %v3593, %v3594
    %s3596 = scalar_lea.vmem [#allocation3], 707
    %v3597 = vld [vmem:[%s3596] ss:$8 sm:$0xf]
    %v3598 = vld [vmem:[%s3596] ss:$8 sm:$0xf0]
    %v3599 = vor.u32 %v3597, %v3598
    %vm3600 = vcmp.eq.s32.totalorder %v55, 11
    %vm3601 = vcmp.eq.s32.totalorder %v56, 11
    %vm3602 = vcmp.eq.s32.totalorder %v57, 11
    %vm3603 = vcmp.eq.s32.totalorder %v58, 11
    %vm3604 = vcmp.eq.s32.totalorder %v59, 11
    %vm3605 = vcmp.eq.s32.totalorder %v60, 11
    %vm3606 = vcmp.eq.s32.totalorder %v61, 11
    %vm3607 = vcmp.eq.s32.totalorder %v62, 11
    %vm3608 = vcmp.eq.s32.totalorder %v63, 11
    %vm3609 = vcmp.eq.s32.totalorder %v64, 11
    %vm3610 = vcmp.eq.s32.totalorder %v65, 11
    %vm3611 = vcmp.eq.s32.totalorder %v66, 11
    %vm3612 = vcmp.eq.s32.totalorder %v67, 11
    %vm3613 = vcmp.eq.s32.totalorder %v68, 11
    %vm3614 = vcmp.eq.s32.totalorder %v69, 11
    %vm3615 = vcmp.eq.s32.totalorder %v70, 11
    %vm3616 = vcmp.eq.s32.totalorder %v71, 11
    %vm3617 = vcmp.eq.s32.totalorder %v72, 11
    %vm3618 = vcmp.eq.s32.totalorder %v73, 11
    %vm3619 = vcmp.eq.s32.totalorder %v74, 11
    %vm3620 = vcmp.eq.s32.totalorder %v75, 11
    %vm3621 = vcmp.eq.s32.totalorder %v76, 11
    %vm3622 = vcmp.eq.s32.totalorder %v77, 11
    %vm3623 = vcmp.eq.s32.totalorder %v78, 11
    %v3630 = vlaneseq
    %v3631 = vshrl.u32 %v3630, 7
    %v3632 = vsub.s32 0, %v3631
    %v3633 = vrot.slane %v3579, %v3632
    %v3634 = vlaneseq
    %v3635 = vshrl.u32 %v3634, 7
    %v3636 = vsub.s32 1, %v3635
    %v3637 = vrot.slane %v3579, %v3636
    %v3638 = vlaneseq
    %v3639 = vshrl.u32 %v3638, 7
    %v3640 = vsub.s32 2, %v3639
    %v3641 = vrot.slane %v3579, %v3640
    %v3642 = vlaneseq
    %v3643 = vshrl.u32 %v3642, 7
    %v3644 = vsub.s32 3, %v3643
    %v3645 = vrot.slane %v3579, %v3644
    %v3646 = vlaneseq
    %v3647 = vshrl.u32 %v3646, 7
    %v3648 = vsub.s32 4, %v3647
    %v3649 = vrot.slane %v3579, %v3648
    %v3650 = vlaneseq
    %v3651 = vshrl.u32 %v3650, 7
    %v3652 = vsub.s32 5, %v3651
    %v3653 = vrot.slane %v3579, %v3652
    %v3654 = vlaneseq
    %v3655 = vshrl.u32 %v3654, 7
    %v3656 = vsub.s32 6, %v3655
    %v3657 = vrot.slane %v3579, %v3656
    %v3658 = vlaneseq
    %v3659 = vshrl.u32 %v3658, 7
    %v3660 = vsub.s32 7, %v3659
    %v3661 = vrot.slane %v3579, %v3660
    %v3662 = vlaneseq
    %v3663 = vshrl.u32 %v3662, 7
    %v3664 = vsub.s32 0, %v3663
    %v3665 = vrot.slane %v3583, %v3664
    %v3666 = vlaneseq
    %v3667 = vshrl.u32 %v3666, 7
    %v3668 = vsub.s32 1, %v3667
    %v3669 = vrot.slane %v3583, %v3668
    %v3670 = vlaneseq
    %v3671 = vshrl.u32 %v3670, 7
    %v3672 = vsub.s32 2, %v3671
    %v3673 = vrot.slane %v3583, %v3672
    %v3674 = vlaneseq
    %v3675 = vshrl.u32 %v3674, 7
    %v3676 = vsub.s32 3, %v3675
    %v3677 = vrot.slane %v3583, %v3676
    %v3678 = vlaneseq
    %v3679 = vshrl.u32 %v3678, 7
    %v3680 = vsub.s32 4, %v3679
    %v3681 = vrot.slane %v3583, %v3680
    %v3682 = vlaneseq
    %v3683 = vshrl.u32 %v3682, 7
    %v3684 = vsub.s32 5, %v3683
    %v3685 = vrot.slane %v3583, %v3684
    %v3686 = vlaneseq
    %v3687 = vshrl.u32 %v3686, 7
    %v3688 = vsub.s32 6, %v3687
    %v3689 = vrot.slane %v3583, %v3688
    %v3690 = vlaneseq
    %v3691 = vshrl.u32 %v3690, 7
    %v3692 = vsub.s32 7, %v3691
    %v3693 = vrot.slane %v3583, %v3692
    %v3694 = vlaneseq
    %v3695 = vshrl.u32 %v3694, 7
    %v3696 = vsub.s32 0, %v3695
    %v3697 = vrot.slane %v3587, %v3696
    %v3698 = vlaneseq
    %v3699 = vshrl.u32 %v3698, 7
    %v3700 = vsub.s32 1, %v3699
    %v3701 = vrot.slane %v3587, %v3700
    %v3702 = vlaneseq
    %v3703 = vshrl.u32 %v3702, 7
    %v3704 = vsub.s32 2, %v3703
    %v3705 = vrot.slane %v3587, %v3704
    %v3706 = vlaneseq
    %v3707 = vshrl.u32 %v3706, 7
    %v3708 = vsub.s32 3, %v3707
    %v3709 = vrot.slane %v3587, %v3708
    %v3710 = vlaneseq
    %v3711 = vshrl.u32 %v3710, 7
    %v3712 = vsub.s32 4, %v3711
    %v3713 = vrot.slane %v3587, %v3712
    %v3714 = vlaneseq
    %v3715 = vshrl.u32 %v3714, 7
    %v3716 = vsub.s32 5, %v3715
    %v3717 = vrot.slane %v3587, %v3716
    %v3718 = vlaneseq
    %v3719 = vshrl.u32 %v3718, 7
    %v3720 = vsub.s32 6, %v3719
    %v3721 = vrot.slane %v3587, %v3720
    %v3722 = vlaneseq
    %v3723 = vshrl.u32 %v3722, 7
    %v3724 = vsub.s32 7, %v3723
    %v3725 = vrot.slane %v3587, %v3724
    %v3726 = vlaneseq
    %v3727 = vshrl.u32 %v3726, 7
    %v3728 = vsub.s32 0, %v3727
    %v3729 = vrot.slane %v3591, %v3728
    %v3730 = vlaneseq
    %v3731 = vshrl.u32 %v3730, 7
    %v3732 = vsub.s32 1, %v3731
    %v3733 = vrot.slane %v3591, %v3732
    %v3734 = vlaneseq
    %v3735 = vshrl.u32 %v3734, 7
    %v3736 = vsub.s32 2, %v3735
    %v3737 = vrot.slane %v3591, %v3736
    %v3738 = vlaneseq
    %v3739 = vshrl.u32 %v3738, 7
    %v3740 = vsub.s32 3, %v3739
    %v3741 = vrot.slane %v3591, %v3740
    %v3742 = vlaneseq
    %v3743 = vshrl.u32 %v3742, 7
    %v3744 = vsub.s32 4, %v3743
    %v3745 = vrot.slane %v3591, %v3744
    %v3746 = vlaneseq
    %v3747 = vshrl.u32 %v3746, 7
    %v3748 = vsub.s32 5, %v3747
    %v3749 = vrot.slane %v3591, %v3748
    %v3750 = vlaneseq
    %v3751 = vshrl.u32 %v3750, 7
    %v3752 = vsub.s32 6, %v3751
    %v3753 = vrot.slane %v3591, %v3752
    %v3754 = vlaneseq
    %v3755 = vshrl.u32 %v3754, 7
    %v3756 = vsub.s32 7, %v3755
    %v3757 = vrot.slane %v3591, %v3756
    %v3758 = vlaneseq
    %v3759 = vshrl.u32 %v3758, 7
    %v3760 = vsub.s32 0, %v3759
    %v3761 = vrot.slane %v3595, %v3760
    %v3762 = vlaneseq
    %v3763 = vshrl.u32 %v3762, 7
    %v3764 = vsub.s32 1, %v3763
    %v3765 = vrot.slane %v3595, %v3764
    %v3766 = vlaneseq
    %v3767 = vshrl.u32 %v3766, 7
    %v3768 = vsub.s32 2, %v3767
    %v3769 = vrot.slane %v3595, %v3768
    %v3770 = vlaneseq
    %v3771 = vshrl.u32 %v3770, 7
    %v3772 = vsub.s32 3, %v3771
    %v3773 = vrot.slane %v3595, %v3772
    %v3774 = vlaneseq
    %v3775 = vshrl.u32 %v3774, 7
    %v3776 = vsub.s32 4, %v3775
    %v3777 = vrot.slane %v3595, %v3776
    %v3778 = vlaneseq
    %v3779 = vshrl.u32 %v3778, 7
    %v3780 = vsub.s32 5, %v3779
    %v3781 = vrot.slane %v3595, %v3780
    %v3782 = vlaneseq
    %v3783 = vshrl.u32 %v3782, 7
    %v3784 = vsub.s32 6, %v3783
    %v3785 = vrot.slane %v3595, %v3784
    %v3786 = vlaneseq
    %v3787 = vshrl.u32 %v3786, 7
    %v3788 = vsub.s32 7, %v3787
    %v3789 = vrot.slane %v3595, %v3788
    %v3790 = vlaneseq
    %v3791 = vshrl.u32 %v3790, 7
    %v3792 = vsub.s32 0, %v3791
    %v3793 = vrot.slane %v3599, %v3792
    %v3794 = vlaneseq
    %v3795 = vshrl.u32 %v3794, 7
    %v3796 = vsub.s32 1, %v3795
    %v3797 = vrot.slane %v3599, %v3796
    %v3798 = vlaneseq
    %v3799 = vshrl.u32 %v3798, 7
    %v3800 = vsub.s32 2, %v3799
    %v3801 = vrot.slane %v3599, %v3800
    %v3802 = vlaneseq
    %v3803 = vshrl.u32 %v3802, 7
    %v3804 = vsub.s32 3, %v3803
    %v3805 = vrot.slane %v3599, %v3804
    %v3806 = vlaneseq
    %v3807 = vshrl.u32 %v3806, 7
    %v3808 = vsub.s32 4, %v3807
    %v3809 = vrot.slane %v3599, %v3808
    %v3810 = vlaneseq
    %v3811 = vshrl.u32 %v3810, 7
    %v3812 = vsub.s32 5, %v3811
    %v3813 = vrot.slane %v3599, %v3812
    %v3814 = vlaneseq
    %v3815 = vshrl.u32 %v3814, 7
    %v3816 = vsub.s32 6, %v3815
    %v3817 = vrot.slane %v3599, %v3816
    %v3818 = vlaneseq
    %v3819 = vshrl.u32 %v3818, 7
    %v3820 = vsub.s32 7, %v3819
    %v3821 = vrot.slane %v3599, %v3820
    %v3822 = vcombine.low %v3633, %v3637
    %v3823 = vcombine.low %v3641, %v3645
    %v3824 = vcombine.low %v3649, %v3653
    %v3825 = vcombine.low %v3657, %v3661
    %v3826 = vcombine.low %v3665, %v3669
    %v3827 = vcombine.low %v3673, %v3677
    %v3828 = vcombine.low %v3681, %v3685
    %v3829 = vcombine.low %v3689, %v3693
    %v3830 = vcombine.low %v3697, %v3701
    %v3831 = vcombine.low %v3705, %v3709
    %v3832 = vcombine.low %v3713, %v3717
    %v3833 = vcombine.low %v3721, %v3725
    %v3834 = vcombine.low %v3729, %v3733
    %v3835 = vcombine.low %v3737, %v3741
    %v3836 = vcombine.low %v3745, %v3749
    %v3837 = vcombine.low %v3753, %v3757
    %v3838 = vcombine.low %v3761, %v3765
    %v3839 = vcombine.low %v3769, %v3773
    %v3840 = vcombine.low %v3777, %v3781
    %v3841 = vcombine.low %v3785, %v3789
    %v3842 = vcombine.low %v3793, %v3797
    %v3843 = vcombine.low %v3801, %v3805
    %v3844 = vcombine.low %v3809, %v3813
    %v3845 = vcombine.low %v3817, %v3821
    %v3870 = vsel %vm3600, %v3822, %v3552
    %v3871 = vsel %vm3601, %v3823, %v3553
    %v3872 = vsel %vm3602, %v3824, %v3554
    %v3873 = vsel %vm3603, %v3825, %v3555
    %v3874 = vsel %vm3604, %v3826, %v3556
    %v3875 = vsel %vm3605, %v3827, %v3557
    %v3876 = vsel %vm3606, %v3828, %v3558
    %v3877 = vsel %vm3607, %v3829, %v3559
    %v3878 = vsel %vm3608, %v3830, %v3560
    %v3879 = vsel %vm3609, %v3831, %v3561
    %v3880 = vsel %vm3610, %v3832, %v3562
    %v3881 = vsel %vm3611, %v3833, %v3563
    %v3882 = vsel %vm3612, %v3834, %v3564
    %v3883 = vsel %vm3613, %v3835, %v3565
    %v3884 = vsel %vm3614, %v3836, %v3566
    %v3885 = vsel %vm3615, %v3837, %v3567
    %v3886 = vsel %vm3616, %v3838, %v3568
    %v3887 = vsel %vm3617, %v3839, %v3569
    %v3888 = vsel %vm3618, %v3840, %v3570
    %v3889 = vsel %vm3619, %v3841, %v3571
    %v3890 = vsel %vm3620, %v3842, %v3572
    %v3891 = vsel %vm3621, %v3843, %v3573
    %v3892 = vsel %vm3622, %v3844, %v3574
    %v3893 = vsel %vm3623, %v3845, %v3575
    %s3894 = scalar_lea.vmem [#allocation3], 68
    %v3895 = vld [vmem:[%s3894] ss:$8 sm:$0xf]
    %v3896 = vld [vmem:[%s3894] ss:$8 sm:$0xf0]
    %v3897 = vor.u32 %v3895, %v3896
    %s3898 = scalar_lea.vmem [#allocation3], 196
    %v3899 = vld [vmem:[%s3898] ss:$8 sm:$0xf]
    %v3900 = vld [vmem:[%s3898] ss:$8 sm:$0xf0]
    %v3901 = vor.u32 %v3899, %v3900
    %s3902 = scalar_lea.vmem [#allocation3], 324
    %v3903 = vld [vmem:[%s3902] ss:$8 sm:$0xf]
    %v3904 = vld [vmem:[%s3902] ss:$8 sm:$0xf0]
    %v3905 = vor.u32 %v3903, %v3904
    %s3906 = scalar_lea.vmem [#allocation3], 452
    %v3907 = vld [vmem:[%s3906] ss:$8 sm:$0xf]
    %v3908 = vld [vmem:[%s3906] ss:$8 sm:$0xf0]
    %v3909 = vor.u32 %v3907, %v3908
    %s3910 = scalar_lea.vmem [#allocation3], 580
    %v3911 = vld [vmem:[%s3910] ss:$8 sm:$0xf]
    %v3912 = vld [vmem:[%s3910] ss:$8 sm:$0xf0]
    %v3913 = vor.u32 %v3911, %v3912
    %s3914 = scalar_lea.vmem [#allocation3], 708
    %v3915 = vld [vmem:[%s3914] ss:$8 sm:$0xf]
    %v3916 = vld [vmem:[%s3914] ss:$8 sm:$0xf0]
    %v3917 = vor.u32 %v3915, %v3916
    %vm3918 = vcmp.eq.s32.totalorder %v55, 12
    %vm3919 = vcmp.eq.s32.totalorder %v56, 12
    %vm3920 = vcmp.eq.s32.totalorder %v57, 12
    %vm3921 = vcmp.eq.s32.totalorder %v58, 12
    %vm3922 = vcmp.eq.s32.totalorder %v59, 12
    %vm3923 = vcmp.eq.s32.totalorder %v60, 12
    %vm3924 = vcmp.eq.s32.totalorder %v61, 12
    %vm3925 = vcmp.eq.s32.totalorder %v62, 12
    %vm3926 = vcmp.eq.s32.totalorder %v63, 12
    %vm3927 = vcmp.eq.s32.totalorder %v64, 12
    %vm3928 = vcmp.eq.s32.totalorder %v65, 12
    %vm3929 = vcmp.eq.s32.totalorder %v66, 12
    %vm3930 = vcmp.eq.s32.totalorder %v67, 12
    %vm3931 = vcmp.eq.s32.totalorder %v68, 12
    %vm3932 = vcmp.eq.s32.totalorder %v69, 12
    %vm3933 = vcmp.eq.s32.totalorder %v70, 12
    %vm3934 = vcmp.eq.s32.totalorder %v71, 12
    %vm3935 = vcmp.eq.s32.totalorder %v72, 12
    %vm3936 = vcmp.eq.s32.totalorder %v73, 12
    %vm3937 = vcmp.eq.s32.totalorder %v74, 12
    %vm3938 = vcmp.eq.s32.totalorder %v75, 12
    %vm3939 = vcmp.eq.s32.totalorder %v76, 12
    %vm3940 = vcmp.eq.s32.totalorder %v77, 12
    %vm3941 = vcmp.eq.s32.totalorder %v78, 12
    %v3948 = vlaneseq
    %v3949 = vshrl.u32 %v3948, 7
    %v3950 = vsub.s32 0, %v3949
    %v3951 = vrot.slane %v3897, %v3950
    %v3952 = vlaneseq
    %v3953 = vshrl.u32 %v3952, 7
    %v3954 = vsub.s32 1, %v3953
    %v3955 = vrot.slane %v3897, %v3954
    %v3956 = vlaneseq
    %v3957 = vshrl.u32 %v3956, 7
    %v3958 = vsub.s32 2, %v3957
    %v3959 = vrot.slane %v3897, %v3958
    %v3960 = vlaneseq
    %v3961 = vshrl.u32 %v3960, 7
    %v3962 = vsub.s32 3, %v3961
    %v3963 = vrot.slane %v3897, %v3962
    %v3964 = vlaneseq
    %v3965 = vshrl.u32 %v3964, 7
    %v3966 = vsub.s32 4, %v3965
    %v3967 = vrot.slane %v3897, %v3966
    %v3968 = vlaneseq
    %v3969 = vshrl.u32 %v3968, 7
    %v3970 = vsub.s32 5, %v3969
    %v3971 = vrot.slane %v3897, %v3970
    %v3972 = vlaneseq
    %v3973 = vshrl.u32 %v3972, 7
    %v3974 = vsub.s32 6, %v3973
    %v3975 = vrot.slane %v3897, %v3974
    %v3976 = vlaneseq
    %v3977 = vshrl.u32 %v3976, 7
    %v3978 = vsub.s32 7, %v3977
    %v3979 = vrot.slane %v3897, %v3978
    %v3980 = vlaneseq
    %v3981 = vshrl.u32 %v3980, 7
    %v3982 = vsub.s32 0, %v3981
    %v3983 = vrot.slane %v3901, %v3982
    %v3984 = vlaneseq
    %v3985 = vshrl.u32 %v3984, 7
    %v3986 = vsub.s32 1, %v3985
    %v3987 = vrot.slane %v3901, %v3986
    %v3988 = vlaneseq
    %v3989 = vshrl.u32 %v3988, 7
    %v3990 = vsub.s32 2, %v3989
    %v3991 = vrot.slane %v3901, %v3990
    %v3992 = vlaneseq
    %v3993 = vshrl.u32 %v3992, 7
    %v3994 = vsub.s32 3, %v3993
    %v3995 = vrot.slane %v3901, %v3994
    %v3996 = vlaneseq
    %v3997 = vshrl.u32 %v3996, 7
    %v3998 = vsub.s32 4, %v3997
    %v3999 = vrot.slane %v3901, %v3998
    %v4000 = vlaneseq
    %v4001 = vshrl.u32 %v4000, 7
    %v4002 = vsub.s32 5, %v4001
    %v4003 = vrot.slane %v3901, %v4002
    %v4004 = vlaneseq
    %v4005 = vshrl.u32 %v4004, 7
    %v4006 = vsub.s32 6, %v4005
    %v4007 = vrot.slane %v3901, %v4006
    %v4008 = vlaneseq
    %v4009 = vshrl.u32 %v4008, 7
    %v4010 = vsub.s32 7, %v4009
    %v4011 = vrot.slane %v3901, %v4010
    %v4012 = vlaneseq
    %v4013 = vshrl.u32 %v4012, 7
    %v4014 = vsub.s32 0, %v4013
    %v4015 = vrot.slane %v3905, %v4014
    %v4016 = vlaneseq
    %v4017 = vshrl.u32 %v4016, 7
    %v4018 = vsub.s32 1, %v4017
    %v4019 = vrot.slane %v3905, %v4018
    %v4020 = vlaneseq
    %v4021 = vshrl.u32 %v4020, 7
    %v4022 = vsub.s32 2, %v4021
    %v4023 = vrot.slane %v3905, %v4022
    %v4024 = vlaneseq
    %v4025 = vshrl.u32 %v4024, 7
    %v4026 = vsub.s32 3, %v4025
    %v4027 = vrot.slane %v3905, %v4026
    %v4028 = vlaneseq
    %v4029 = vshrl.u32 %v4028, 7
    %v4030 = vsub.s32 4, %v4029
    %v4031 = vrot.slane %v3905, %v4030
    %v4032 = vlaneseq
    %v4033 = vshrl.u32 %v4032, 7
    %v4034 = vsub.s32 5, %v4033
    %v4035 = vrot.slane %v3905, %v4034
    %v4036 = vlaneseq
    %v4037 = vshrl.u32 %v4036, 7
    %v4038 = vsub.s32 6, %v4037
    %v4039 = vrot.slane %v3905, %v4038
    %v4040 = vlaneseq
    %v4041 = vshrl.u32 %v4040, 7
    %v4042 = vsub.s32 7, %v4041
    %v4043 = vrot.slane %v3905, %v4042
    %v4044 = vlaneseq
    %v4045 = vshrl.u32 %v4044, 7
    %v4046 = vsub.s32 0, %v4045
    %v4047 = vrot.slane %v3909, %v4046
    %v4048 = vlaneseq
    %v4049 = vshrl.u32 %v4048, 7
    %v4050 = vsub.s32 1, %v4049
    %v4051 = vrot.slane %v3909, %v4050
    %v4052 = vlaneseq
    %v4053 = vshrl.u32 %v4052, 7
    %v4054 = vsub.s32 2, %v4053
    %v4055 = vrot.slane %v3909, %v4054
    %v4056 = vlaneseq
    %v4057 = vshrl.u32 %v4056, 7
    %v4058 = vsub.s32 3, %v4057
    %v4059 = vrot.slane %v3909, %v4058
    %v4060 = vlaneseq
    %v4061 = vshrl.u32 %v4060, 7
    %v4062 = vsub.s32 4, %v4061
    %v4063 = vrot.slane %v3909, %v4062
    %v4064 = vlaneseq
    %v4065 = vshrl.u32 %v4064, 7
    %v4066 = vsub.s32 5, %v4065
    %v4067 = vrot.slane %v3909, %v4066
    %v4068 = vlaneseq
    %v4069 = vshrl.u32 %v4068, 7
    %v4070 = vsub.s32 6, %v4069
    %v4071 = vrot.slane %v3909, %v4070
    %v4072 = vlaneseq
    %v4073 = vshrl.u32 %v4072, 7
    %v4074 = vsub.s32 7, %v4073
    %v4075 = vrot.slane %v3909, %v4074
    %v4076 = vlaneseq
    %v4077 = vshrl.u32 %v4076, 7
    %v4078 = vsub.s32 0, %v4077
    %v4079 = vrot.slane %v3913, %v4078
    %v4080 = vlaneseq
    %v4081 = vshrl.u32 %v4080, 7
    %v4082 = vsub.s32 1, %v4081
    %v4083 = vrot.slane %v3913, %v4082
    %v4084 = vlaneseq
    %v4085 = vshrl.u32 %v4084, 7
    %v4086 = vsub.s32 2, %v4085
    %v4087 = vrot.slane %v3913, %v4086
    %v4088 = vlaneseq
    %v4089 = vshrl.u32 %v4088, 7
    %v4090 = vsub.s32 3, %v4089
    %v4091 = vrot.slane %v3913, %v4090
    %v4092 = vlaneseq
    %v4093 = vshrl.u32 %v4092, 7
    %v4094 = vsub.s32 4, %v4093
    %v4095 = vrot.slane %v3913, %v4094
    %v4096 = vlaneseq
    %v4097 = vshrl.u32 %v4096, 7
    %v4098 = vsub.s32 5, %v4097
    %v4099 = vrot.slane %v3913, %v4098
    %v4100 = vlaneseq
    %v4101 = vshrl.u32 %v4100, 7
    %v4102 = vsub.s32 6, %v4101
    %v4103 = vrot.slane %v3913, %v4102
    %v4104 = vlaneseq
    %v4105 = vshrl.u32 %v4104, 7
    %v4106 = vsub.s32 7, %v4105
    %v4107 = vrot.slane %v3913, %v4106
    %v4108 = vlaneseq
    %v4109 = vshrl.u32 %v4108, 7
    %v4110 = vsub.s32 0, %v4109
    %v4111 = vrot.slane %v3917, %v4110
    %v4112 = vlaneseq
    %v4113 = vshrl.u32 %v4112, 7
    %v4114 = vsub.s32 1, %v4113
    %v4115 = vrot.slane %v3917, %v4114
    %v4116 = vlaneseq
    %v4117 = vshrl.u32 %v4116, 7
    %v4118 = vsub.s32 2, %v4117
    %v4119 = vrot.slane %v3917, %v4118
    %v4120 = vlaneseq
    %v4121 = vshrl.u32 %v4120, 7
    %v4122 = vsub.s32 3, %v4121
    %v4123 = vrot.slane %v3917, %v4122
    %v4124 = vlaneseq
    %v4125 = vshrl.u32 %v4124, 7
    %v4126 = vsub.s32 4, %v4125
    %v4127 = vrot.slane %v3917, %v4126
    %v4128 = vlaneseq
    %v4129 = vshrl.u32 %v4128, 7
    %v4130 = vsub.s32 5, %v4129
    %v4131 = vrot.slane %v3917, %v4130
    %v4132 = vlaneseq
    %v4133 = vshrl.u32 %v4132, 7
    %v4134 = vsub.s32 6, %v4133
    %v4135 = vrot.slane %v3917, %v4134
    %v4136 = vlaneseq
    %v4137 = vshrl.u32 %v4136, 7
    %v4138 = vsub.s32 7, %v4137
    %v4139 = vrot.slane %v3917, %v4138
    %v4140 = vcombine.low %v3951, %v3955
    %v4141 = vcombine.low %v3959, %v3963
    %v4142 = vcombine.low %v3967, %v3971
    %v4143 = vcombine.low %v3975, %v3979
    %v4144 = vcombine.low %v3983, %v3987
    %v4145 = vcombine.low %v3991, %v3995
    %v4146 = vcombine.low %v3999, %v4003
    %v4147 = vcombine.low %v4007, %v4011
    %v4148 = vcombine.low %v4015, %v4019
    %v4149 = vcombine.low %v4023, %v4027
    %v4150 = vcombine.low %v4031, %v4035
    %v4151 = vcombine.low %v4039, %v4043
    %v4152 = vcombine.low %v4047, %v4051
    %v4153 = vcombine.low %v4055, %v4059
    %v4154 = vcombine.low %v4063, %v4067
    %v4155 = vcombine.low %v4071, %v4075
    %v4156 = vcombine.low %v4079, %v4083
    %v4157 = vcombine.low %v4087, %v4091
    %v4158 = vcombine.low %v4095, %v4099
    %v4159 = vcombine.low %v4103, %v4107
    %v4160 = vcombine.low %v4111, %v4115
    %v4161 = vcombine.low %v4119, %v4123
    %v4162 = vcombine.low %v4127, %v4131
    %v4163 = vcombine.low %v4135, %v4139
    %v4188 = vsel %vm3918, %v4140, %v3870
    %v4189 = vsel %vm3919, %v4141, %v3871
    %v4190 = vsel %vm3920, %v4142, %v3872
    %v4191 = vsel %vm3921, %v4143, %v3873
    %v4192 = vsel %vm3922, %v4144, %v3874
    %v4193 = vsel %vm3923, %v4145, %v3875
    %v4194 = vsel %vm3924, %v4146, %v3876
    %v4195 = vsel %vm3925, %v4147, %v3877
    %v4196 = vsel %vm3926, %v4148, %v3878
    %v4197 = vsel %vm3927, %v4149, %v3879
    %v4198 = vsel %vm3928, %v4150, %v3880
    %v4199 = vsel %vm3929, %v4151, %v3881
    %v4200 = vsel %vm3930, %v4152, %v3882
    %v4201 = vsel %vm3931, %v4153, %v3883
    %v4202 = vsel %vm3932, %v4154, %v3884
    %v4203 = vsel %vm3933, %v4155, %v3885
    %v4204 = vsel %vm3934, %v4156, %v3886
    %v4205 = vsel %vm3935, %v4157, %v3887
    %v4206 = vsel %vm3936, %v4158, %v3888
    %v4207 = vsel %vm3937, %v4159, %v3889
    %v4208 = vsel %vm3938, %v4160, %v3890
    %v4209 = vsel %vm3939, %v4161, %v3891
    %v4210 = vsel %vm3940, %v4162, %v3892
    %v4211 = vsel %vm3941, %v4163, %v3893
    %s4212 = scalar_lea.vmem [#allocation3], 69
    %v4213 = vld [vmem:[%s4212] ss:$8 sm:$0xf]
    %v4214 = vld [vmem:[%s4212] ss:$8 sm:$0xf0]
    %v4215 = vor.u32 %v4213, %v4214
    %s4216 = scalar_lea.vmem [#allocation3], 197
    %v4217 = vld [vmem:[%s4216] ss:$8 sm:$0xf]
    %v4218 = vld [vmem:[%s4216] ss:$8 sm:$0xf0]
    %v4219 = vor.u32 %v4217, %v4218
    %s4220 = scalar_lea.vmem [#allocation3], 325
    %v4221 = vld [vmem:[%s4220] ss:$8 sm:$0xf]
    %v4222 = vld [vmem:[%s4220] ss:$8 sm:$0xf0]
    %v4223 = vor.u32 %v4221, %v4222
    %s4224 = scalar_lea.vmem [#allocation3], 453
    %v4225 = vld [vmem:[%s4224] ss:$8 sm:$0xf]
    %v4226 = vld [vmem:[%s4224] ss:$8 sm:$0xf0]
    %v4227 = vor.u32 %v4225, %v4226
    %s4228 = scalar_lea.vmem [#allocation3], 581
    %v4229 = vld [vmem:[%s4228] ss:$8 sm:$0xf]
    %v4230 = vld [vmem:[%s4228] ss:$8 sm:$0xf0]
    %v4231 = vor.u32 %v4229, %v4230
    %s4232 = scalar_lea.vmem [#allocation3], 709
    %v4233 = vld [vmem:[%s4232] ss:$8 sm:$0xf]
    %v4234 = vld [vmem:[%s4232] ss:$8 sm:$0xf0]
    %v4235 = vor.u32 %v4233, %v4234
    %vm4236 = vcmp.eq.s32.totalorder %v55, 13
    %vm4237 = vcmp.eq.s32.totalorder %v56, 13
    %vm4238 = vcmp.eq.s32.totalorder %v57, 13
    %vm4239 = vcmp.eq.s32.totalorder %v58, 13
    %vm4240 = vcmp.eq.s32.totalorder %v59, 13
    %vm4241 = vcmp.eq.s32.totalorder %v60, 13
    %vm4242 = vcmp.eq.s32.totalorder %v61, 13
    %vm4243 = vcmp.eq.s32.totalorder %v62, 13
    %vm4244 = vcmp.eq.s32.totalorder %v63, 13
    %vm4245 = vcmp.eq.s32.totalorder %v64, 13
    %vm4246 = vcmp.eq.s32.totalorder %v65, 13
    %vm4247 = vcmp.eq.s32.totalorder %v66, 13
    %vm4248 = vcmp.eq.s32.totalorder %v67, 13
    %vm4249 = vcmp.eq.s32.totalorder %v68, 13
    %vm4250 = vcmp.eq.s32.totalorder %v69, 13
    %vm4251 = vcmp.eq.s32.totalorder %v70, 13
    %vm4252 = vcmp.eq.s32.totalorder %v71, 13
    %vm4253 = vcmp.eq.s32.totalorder %v72, 13
    %vm4254 = vcmp.eq.s32.totalorder %v73, 13
    %vm4255 = vcmp.eq.s32.totalorder %v74, 13
    %vm4256 = vcmp.eq.s32.totalorder %v75, 13
    %vm4257 = vcmp.eq.s32.totalorder %v76, 13
    %vm4258 = vcmp.eq.s32.totalorder %v77, 13
    %vm4259 = vcmp.eq.s32.totalorder %v78, 13
    %v4266 = vlaneseq
    %v4267 = vshrl.u32 %v4266, 7
    %v4268 = vsub.s32 0, %v4267
    %v4269 = vrot.slane %v4215, %v4268
    %v4270 = vlaneseq
    %v4271 = vshrl.u32 %v4270, 7
    %v4272 = vsub.s32 1, %v4271
    %v4273 = vrot.slane %v4215, %v4272
    %v4274 = vlaneseq
    %v4275 = vshrl.u32 %v4274, 7
    %v4276 = vsub.s32 2, %v4275
    %v4277 = vrot.slane %v4215, %v4276
    %v4278 = vlaneseq
    %v4279 = vshrl.u32 %v4278, 7
    %v4280 = vsub.s32 3, %v4279
    %v4281 = vrot.slane %v4215, %v4280
    %v4282 = vlaneseq
    %v4283 = vshrl.u32 %v4282, 7
    %v4284 = vsub.s32 4, %v4283
    %v4285 = vrot.slane %v4215, %v4284
    %v4286 = vlaneseq
    %v4287 = vshrl.u32 %v4286, 7
    %v4288 = vsub.s32 5, %v4287
    %v4289 = vrot.slane %v4215, %v4288
    %v4290 = vlaneseq
    %v4291 = vshrl.u32 %v4290, 7
    %v4292 = vsub.s32 6, %v4291
    %v4293 = vrot.slane %v4215, %v4292
    %v4294 = vlaneseq
    %v4295 = vshrl.u32 %v4294, 7
    %v4296 = vsub.s32 7, %v4295
    %v4297 = vrot.slane %v4215, %v4296
    %v4298 = vlaneseq
    %v4299 = vshrl.u32 %v4298, 7
    %v4300 = vsub.s32 0, %v4299
    %v4301 = vrot.slane %v4219, %v4300
    %v4302 = vlaneseq
    %v4303 = vshrl.u32 %v4302, 7
    %v4304 = vsub.s32 1, %v4303
    %v4305 = vrot.slane %v4219, %v4304
    %v4306 = vlaneseq
    %v4307 = vshrl.u32 %v4306, 7
    %v4308 = vsub.s32 2, %v4307
    %v4309 = vrot.slane %v4219, %v4308
    %v4310 = vlaneseq
    %v4311 = vshrl.u32 %v4310, 7
    %v4312 = vsub.s32 3, %v4311
    %v4313 = vrot.slane %v4219, %v4312
    %v4314 = vlaneseq
    %v4315 = vshrl.u32 %v4314, 7
    %v4316 = vsub.s32 4, %v4315
    %v4317 = vrot.slane %v4219, %v4316
    %v4318 = vlaneseq
    %v4319 = vshrl.u32 %v4318, 7
    %v4320 = vsub.s32 5, %v4319
    %v4321 = vrot.slane %v4219, %v4320
    %v4322 = vlaneseq
    %v4323 = vshrl.u32 %v4322, 7
    %v4324 = vsub.s32 6, %v4323
    %v4325 = vrot.slane %v4219, %v4324
    %v4326 = vlaneseq
    %v4327 = vshrl.u32 %v4326, 7
    %v4328 = vsub.s32 7, %v4327
    %v4329 = vrot.slane %v4219, %v4328
    %v4330 = vlaneseq
    %v4331 = vshrl.u32 %v4330, 7
    %v4332 = vsub.s32 0, %v4331
    %v4333 = vrot.slane %v4223, %v4332
    %v4334 = vlaneseq
    %v4335 = vshrl.u32 %v4334, 7
    %v4336 = vsub.s32 1, %v4335
    %v4337 = vrot.slane %v4223, %v4336
    %v4338 = vlaneseq
    %v4339 = vshrl.u32 %v4338, 7
    %v4340 = vsub.s32 2, %v4339
    %v4341 = vrot.slane %v4223, %v4340
    %v4342 = vlaneseq
    %v4343 = vshrl.u32 %v4342, 7
    %v4344 = vsub.s32 3, %v4343
    %v4345 = vrot.slane %v4223, %v4344
    %v4346 = vlaneseq
    %v4347 = vshrl.u32 %v4346, 7
    %v4348 = vsub.s32 4, %v4347
    %v4349 = vrot.slane %v4223, %v4348
    %v4350 = vlaneseq
    %v4351 = vshrl.u32 %v4350, 7
    %v4352 = vsub.s32 5, %v4351
    %v4353 = vrot.slane %v4223, %v4352
    %v4354 = vlaneseq
    %v4355 = vshrl.u32 %v4354, 7
    %v4356 = vsub.s32 6, %v4355
    %v4357 = vrot.slane %v4223, %v4356
    %v4358 = vlaneseq
    %v4359 = vshrl.u32 %v4358, 7
    %v4360 = vsub.s32 7, %v4359
    %v4361 = vrot.slane %v4223, %v4360
    %v4362 = vlaneseq
    %v4363 = vshrl.u32 %v4362, 7
    %v4364 = vsub.s32 0, %v4363
    %v4365 = vrot.slane %v4227, %v4364
    %v4366 = vlaneseq
    %v4367 = vshrl.u32 %v4366, 7
    %v4368 = vsub.s32 1, %v4367
    %v4369 = vrot.slane %v4227, %v4368
    %v4370 = vlaneseq
    %v4371 = vshrl.u32 %v4370, 7
    %v4372 = vsub.s32 2, %v4371
    %v4373 = vrot.slane %v4227, %v4372
    %v4374 = vlaneseq
    %v4375 = vshrl.u32 %v4374, 7
    %v4376 = vsub.s32 3, %v4375
    %v4377 = vrot.slane %v4227, %v4376
    %v4378 = vlaneseq
    %v4379 = vshrl.u32 %v4378, 7
    %v4380 = vsub.s32 4, %v4379
    %v4381 = vrot.slane %v4227, %v4380
    %v4382 = vlaneseq
    %v4383 = vshrl.u32 %v4382, 7
    %v4384 = vsub.s32 5, %v4383
    %v4385 = vrot.slane %v4227, %v4384
    %v4386 = vlaneseq
    %v4387 = vshrl.u32 %v4386, 7
    %v4388 = vsub.s32 6, %v4387
    %v4389 = vrot.slane %v4227, %v4388
    %v4390 = vlaneseq
    %v4391 = vshrl.u32 %v4390, 7
    %v4392 = vsub.s32 7, %v4391
    %v4393 = vrot.slane %v4227, %v4392
    %v4394 = vlaneseq
    %v4395 = vshrl.u32 %v4394, 7
    %v4396 = vsub.s32 0, %v4395
    %v4397 = vrot.slane %v4231, %v4396
    %v4398 = vlaneseq
    %v4399 = vshrl.u32 %v4398, 7
    %v4400 = vsub.s32 1, %v4399
    %v4401 = vrot.slane %v4231, %v4400
    %v4402 = vlaneseq
    %v4403 = vshrl.u32 %v4402, 7
    %v4404 = vsub.s32 2, %v4403
    %v4405 = vrot.slane %v4231, %v4404
    %v4406 = vlaneseq
    %v4407 = vshrl.u32 %v4406, 7
    %v4408 = vsub.s32 3, %v4407
    %v4409 = vrot.slane %v4231, %v4408
    %v4410 = vlaneseq
    %v4411 = vshrl.u32 %v4410, 7
    %v4412 = vsub.s32 4, %v4411
    %v4413 = vrot.slane %v4231, %v4412
    %v4414 = vlaneseq
    %v4415 = vshrl.u32 %v4414, 7
    %v4416 = vsub.s32 5, %v4415
    %v4417 = vrot.slane %v4231, %v4416
    %v4418 = vlaneseq
    %v4419 = vshrl.u32 %v4418, 7
    %v4420 = vsub.s32 6, %v4419
    %v4421 = vrot.slane %v4231, %v4420
    %v4422 = vlaneseq
    %v4423 = vshrl.u32 %v4422, 7
    %v4424 = vsub.s32 7, %v4423
    %v4425 = vrot.slane %v4231, %v4424
    %v4426 = vlaneseq
    %v4427 = vshrl.u32 %v4426, 7
    %v4428 = vsub.s32 0, %v4427
    %v4429 = vrot.slane %v4235, %v4428
    %v4430 = vlaneseq
    %v4431 = vshrl.u32 %v4430, 7
    %v4432 = vsub.s32 1, %v4431
    %v4433 = vrot.slane %v4235, %v4432
    %v4434 = vlaneseq
    %v4435 = vshrl.u32 %v4434, 7
    %v4436 = vsub.s32 2, %v4435
    %v4437 = vrot.slane %v4235, %v4436
    %v4438 = vlaneseq
    %v4439 = vshrl.u32 %v4438, 7
    %v4440 = vsub.s32 3, %v4439
    %v4441 = vrot.slane %v4235, %v4440
    %v4442 = vlaneseq
    %v4443 = vshrl.u32 %v4442, 7
    %v4444 = vsub.s32 4, %v4443
    %v4445 = vrot.slane %v4235, %v4444
    %v4446 = vlaneseq
    %v4447 = vshrl.u32 %v4446, 7
    %v4448 = vsub.s32 5, %v4447
    %v4449 = vrot.slane %v4235, %v4448
    %v4450 = vlaneseq
    %v4451 = vshrl.u32 %v4450, 7
    %v4452 = vsub.s32 6, %v4451
    %v4453 = vrot.slane %v4235, %v4452
    %v4454 = vlaneseq
    %v4455 = vshrl.u32 %v4454, 7
    %v4456 = vsub.s32 7, %v4455
    %v4457 = vrot.slane %v4235, %v4456
    %v4458 = vcombine.low %v4269, %v4273
    %v4459 = vcombine.low %v4277, %v4281
    %v4460 = vcombine.low %v4285, %v4289
    %v4461 = vcombine.low %v4293, %v4297
    %v4462 = vcombine.low %v4301, %v4305
    %v4463 = vcombine.low %v4309, %v4313
    %v4464 = vcombine.low %v4317, %v4321
    %v4465 = vcombine.low %v4325, %v4329
    %v4466 = vcombine.low %v4333, %v4337
    %v4467 = vcombine.low %v4341, %v4345
    %v4468 = vcombine.low %v4349, %v4353
    %v4469 = vcombine.low %v4357, %v4361
    %v4470 = vcombine.low %v4365, %v4369
    %v4471 = vcombine.low %v4373, %v4377
    %v4472 = vcombine.low %v4381, %v4385
    %v4473 = vcombine.low %v4389, %v4393
    %v4474 = vcombine.low %v4397, %v4401
    %v4475 = vcombine.low %v4405, %v4409
    %v4476 = vcombine.low %v4413, %v4417
    %v4477 = vcombine.low %v4421, %v4425
    %v4478 = vcombine.low %v4429, %v4433
    %v4479 = vcombine.low %v4437, %v4441
    %v4480 = vcombine.low %v4445, %v4449
    %v4481 = vcombine.low %v4453, %v4457
    %v4506 = vsel %vm4236, %v4458, %v4188
    %v4507 = vsel %vm4237, %v4459, %v4189
    %v4508 = vsel %vm4238, %v4460, %v4190
    %v4509 = vsel %vm4239, %v4461, %v4191
    %v4510 = vsel %vm4240, %v4462, %v4192
    %v4511 = vsel %vm4241, %v4463, %v4193
    %v4512 = vsel %vm4242, %v4464, %v4194
    %v4513 = vsel %vm4243, %v4465, %v4195
    %v4514 = vsel %vm4244, %v4466, %v4196
    %v4515 = vsel %vm4245, %v4467, %v4197
    %v4516 = vsel %vm4246, %v4468, %v4198
    %v4517 = vsel %vm4247, %v4469, %v4199
    %v4518 = vsel %vm4248, %v4470, %v4200
    %v4519 = vsel %vm4249, %v4471, %v4201
    %v4520 = vsel %vm4250, %v4472, %v4202
    %v4521 = vsel %vm4251, %v4473, %v4203
    %v4522 = vsel %vm4252, %v4474, %v4204
    %v4523 = vsel %vm4253, %v4475, %v4205
    %v4524 = vsel %vm4254, %v4476, %v4206
    %v4525 = vsel %vm4255, %v4477, %v4207
    %v4526 = vsel %vm4256, %v4478, %v4208
    %v4527 = vsel %vm4257, %v4479, %v4209
    %v4528 = vsel %vm4258, %v4480, %v4210
    %v4529 = vsel %vm4259, %v4481, %v4211
    %s4530 = scalar_lea.vmem [#allocation3], 70
    %v4531 = vld [vmem:[%s4530] ss:$8 sm:$0xf]
    %v4532 = vld [vmem:[%s4530] ss:$8 sm:$0xf0]
    %v4533 = vor.u32 %v4531, %v4532
    %s4534 = scalar_lea.vmem [#allocation3], 198
    %v4535 = vld [vmem:[%s4534] ss:$8 sm:$0xf]
    %v4536 = vld [vmem:[%s4534] ss:$8 sm:$0xf0]
    %v4537 = vor.u32 %v4535, %v4536
    %s4538 = scalar_lea.vmem [#allocation3], 326
    %v4539 = vld [vmem:[%s4538] ss:$8 sm:$0xf]
    %v4540 = vld [vmem:[%s4538] ss:$8 sm:$0xf0]
    %v4541 = vor.u32 %v4539, %v4540
    %s4542 = scalar_lea.vmem [#allocation3], 454
    %v4543 = vld [vmem:[%s4542] ss:$8 sm:$0xf]
    %v4544 = vld [vmem:[%s4542] ss:$8 sm:$0xf0]
    %v4545 = vor.u32 %v4543, %v4544
    %s4546 = scalar_lea.vmem [#allocation3], 582
    %v4547 = vld [vmem:[%s4546] ss:$8 sm:$0xf]
    %v4548 = vld [vmem:[%s4546] ss:$8 sm:$0xf0]
    %v4549 = vor.u32 %v4547, %v4548
    %s4550 = scalar_lea.vmem [#allocation3], 710
    %v4551 = vld [vmem:[%s4550] ss:$8 sm:$0xf]
    %v4552 = vld [vmem:[%s4550] ss:$8 sm:$0xf0]
    %v4553 = vor.u32 %v4551, %v4552
    %vm4554 = vcmp.eq.s32.totalorder %v55, 14
    %vm4555 = vcmp.eq.s32.totalorder %v56, 14
    %vm4556 = vcmp.eq.s32.totalorder %v57, 14
    %vm4557 = vcmp.eq.s32.totalorder %v58, 14
    %vm4558 = vcmp.eq.s32.totalorder %v59, 14
    %vm4559 = vcmp.eq.s32.totalorder %v60, 14
    %vm4560 = vcmp.eq.s32.totalorder %v61, 14
    %vm4561 = vcmp.eq.s32.totalorder %v62, 14
    %vm4562 = vcmp.eq.s32.totalorder %v63, 14
    %vm4563 = vcmp.eq.s32.totalorder %v64, 14
    %vm4564 = vcmp.eq.s32.totalorder %v65, 14
    %vm4565 = vcmp.eq.s32.totalorder %v66, 14
    %vm4566 = vcmp.eq.s32.totalorder %v67, 14
    %vm4567 = vcmp.eq.s32.totalorder %v68, 14
    %vm4568 = vcmp.eq.s32.totalorder %v69, 14
    %vm4569 = vcmp.eq.s32.totalorder %v70, 14
    %vm4570 = vcmp.eq.s32.totalorder %v71, 14
    %vm4571 = vcmp.eq.s32.totalorder %v72, 14
    %vm4572 = vcmp.eq.s32.totalorder %v73, 14
    %vm4573 = vcmp.eq.s32.totalorder %v74, 14
    %vm4574 = vcmp.eq.s32.totalorder %v75, 14
    %vm4575 = vcmp.eq.s32.totalorder %v76, 14
    %vm4576 = vcmp.eq.s32.totalorder %v77, 14
    %vm4577 = vcmp.eq.s32.totalorder %v78, 14
    %v4584 = vlaneseq
    %v4585 = vshrl.u32 %v4584, 7
    %v4586 = vsub.s32 0, %v4585
    %v4587 = vrot.slane %v4533, %v4586
    %v4588 = vlaneseq
    %v4589 = vshrl.u32 %v4588, 7
    %v4590 = vsub.s32 1, %v4589
    %v4591 = vrot.slane %v4533, %v4590
    %v4592 = vlaneseq
    %v4593 = vshrl.u32 %v4592, 7
    %v4594 = vsub.s32 2, %v4593
    %v4595 = vrot.slane %v4533, %v4594
    %v4596 = vlaneseq
    %v4597 = vshrl.u32 %v4596, 7
    %v4598 = vsub.s32 3, %v4597
    %v4599 = vrot.slane %v4533, %v4598
    %v4600 = vlaneseq
    %v4601 = vshrl.u32 %v4600, 7
    %v4602 = vsub.s32 4, %v4601
    %v4603 = vrot.slane %v4533, %v4602
    %v4604 = vlaneseq
    %v4605 = vshrl.u32 %v4604, 7
    %v4606 = vsub.s32 5, %v4605
    %v4607 = vrot.slane %v4533, %v4606
    %v4608 = vlaneseq
    %v4609 = vshrl.u32 %v4608, 7
    %v4610 = vsub.s32 6, %v4609
    %v4611 = vrot.slane %v4533, %v4610
    %v4612 = vlaneseq
    %v4613 = vshrl.u32 %v4612, 7
    %v4614 = vsub.s32 7, %v4613
    %v4615 = vrot.slane %v4533, %v4614
    %v4616 = vlaneseq
    %v4617 = vshrl.u32 %v4616, 7
    %v4618 = vsub.s32 0, %v4617
    %v4619 = vrot.slane %v4537, %v4618
    %v4620 = vlaneseq
    %v4621 = vshrl.u32 %v4620, 7
    %v4622 = vsub.s32 1, %v4621
    %v4623 = vrot.slane %v4537, %v4622
    %v4624 = vlaneseq
    %v4625 = vshrl.u32 %v4624, 7
    %v4626 = vsub.s32 2, %v4625
    %v4627 = vrot.slane %v4537, %v4626
    %v4628 = vlaneseq
    %v4629 = vshrl.u32 %v4628, 7
    %v4630 = vsub.s32 3, %v4629
    %v4631 = vrot.slane %v4537, %v4630
    %v4632 = vlaneseq
    %v4633 = vshrl.u32 %v4632, 7
    %v4634 = vsub.s32 4, %v4633
    %v4635 = vrot.slane %v4537, %v4634
    %v4636 = vlaneseq
    %v4637 = vshrl.u32 %v4636, 7
    %v4638 = vsub.s32 5, %v4637
    %v4639 = vrot.slane %v4537, %v4638
    %v4640 = vlaneseq
    %v4641 = vshrl.u32 %v4640, 7
    %v4642 = vsub.s32 6, %v4641
    %v4643 = vrot.slane %v4537, %v4642
    %v4644 = vlaneseq
    %v4645 = vshrl.u32 %v4644, 7
    %v4646 = vsub.s32 7, %v4645
    %v4647 = vrot.slane %v4537, %v4646
    %v4648 = vlaneseq
    %v4649 = vshrl.u32 %v4648, 7
    %v4650 = vsub.s32 0, %v4649
    %v4651 = vrot.slane %v4541, %v4650
    %v4652 = vlaneseq
    %v4653 = vshrl.u32 %v4652, 7
    %v4654 = vsub.s32 1, %v4653
    %v4655 = vrot.slane %v4541, %v4654
    %v4656 = vlaneseq
    %v4657 = vshrl.u32 %v4656, 7
    %v4658 = vsub.s32 2, %v4657
    %v4659 = vrot.slane %v4541, %v4658
    %v4660 = vlaneseq
    %v4661 = vshrl.u32 %v4660, 7
    %v4662 = vsub.s32 3, %v4661
    %v4663 = vrot.slane %v4541, %v4662
    %v4664 = vlaneseq
    %v4665 = vshrl.u32 %v4664, 7
    %v4666 = vsub.s32 4, %v4665
    %v4667 = vrot.slane %v4541, %v4666
    %v4668 = vlaneseq
    %v4669 = vshrl.u32 %v4668, 7
    %v4670 = vsub.s32 5, %v4669
    %v4671 = vrot.slane %v4541, %v4670
    %v4672 = vlaneseq
    %v4673 = vshrl.u32 %v4672, 7
    %v4674 = vsub.s32 6, %v4673
    %v4675 = vrot.slane %v4541, %v4674
    %v4676 = vlaneseq
    %v4677 = vshrl.u32 %v4676, 7
    %v4678 = vsub.s32 7, %v4677
    %v4679 = vrot.slane %v4541, %v4678
    %v4680 = vlaneseq
    %v4681 = vshrl.u32 %v4680, 7
    %v4682 = vsub.s32 0, %v4681
    %v4683 = vrot.slane %v4545, %v4682
    %v4684 = vlaneseq
    %v4685 = vshrl.u32 %v4684, 7
    %v4686 = vsub.s32 1, %v4685
    %v4687 = vrot.slane %v4545, %v4686
    %v4688 = vlaneseq
    %v4689 = vshrl.u32 %v4688, 7
    %v4690 = vsub.s32 2, %v4689
    %v4691 = vrot.slane %v4545, %v4690
    %v4692 = vlaneseq
    %v4693 = vshrl.u32 %v4692, 7
    %v4694 = vsub.s32 3, %v4693
    %v4695 = vrot.slane %v4545, %v4694
    %v4696 = vlaneseq
    %v4697 = vshrl.u32 %v4696, 7
    %v4698 = vsub.s32 4, %v4697
    %v4699 = vrot.slane %v4545, %v4698
    %v4700 = vlaneseq
    %v4701 = vshrl.u32 %v4700, 7
    %v4702 = vsub.s32 5, %v4701
    %v4703 = vrot.slane %v4545, %v4702
    %v4704 = vlaneseq
    %v4705 = vshrl.u32 %v4704, 7
    %v4706 = vsub.s32 6, %v4705
    %v4707 = vrot.slane %v4545, %v4706
    %v4708 = vlaneseq
    %v4709 = vshrl.u32 %v4708, 7
    %v4710 = vsub.s32 7, %v4709
    %v4711 = vrot.slane %v4545, %v4710
    %v4712 = vlaneseq
    %v4713 = vshrl.u32 %v4712, 7
    %v4714 = vsub.s32 0, %v4713
    %v4715 = vrot.slane %v4549, %v4714
    %v4716 = vlaneseq
    %v4717 = vshrl.u32 %v4716, 7
    %v4718 = vsub.s32 1, %v4717
    %v4719 = vrot.slane %v4549, %v4718
    %v4720 = vlaneseq
    %v4721 = vshrl.u32 %v4720, 7
    %v4722 = vsub.s32 2, %v4721
    %v4723 = vrot.slane %v4549, %v4722
    %v4724 = vlaneseq
    %v4725 = vshrl.u32 %v4724, 7
    %v4726 = vsub.s32 3, %v4725
    %v4727 = vrot.slane %v4549, %v4726
    %v4728 = vlaneseq
    %v4729 = vshrl.u32 %v4728, 7
    %v4730 = vsub.s32 4, %v4729
    %v4731 = vrot.slane %v4549, %v4730
    %v4732 = vlaneseq
    %v4733 = vshrl.u32 %v4732, 7
    %v4734 = vsub.s32 5, %v4733
    %v4735 = vrot.slane %v4549, %v4734
    %v4736 = vlaneseq
    %v4737 = vshrl.u32 %v4736, 7
    %v4738 = vsub.s32 6, %v4737
    %v4739 = vrot.slane %v4549, %v4738
    %v4740 = vlaneseq
    %v4741 = vshrl.u32 %v4740, 7
    %v4742 = vsub.s32 7, %v4741
    %v4743 = vrot.slane %v4549, %v4742
    %v4744 = vlaneseq
    %v4745 = vshrl.u32 %v4744, 7
    %v4746 = vsub.s32 0, %v4745
    %v4747 = vrot.slane %v4553, %v4746
    %v4748 = vlaneseq
    %v4749 = vshrl.u32 %v4748, 7
    %v4750 = vsub.s32 1, %v4749
    %v4751 = vrot.slane %v4553, %v4750
    %v4752 = vlaneseq
    %v4753 = vshrl.u32 %v4752, 7
    %v4754 = vsub.s32 2, %v4753
    %v4755 = vrot.slane %v4553, %v4754
    %v4756 = vlaneseq
    %v4757 = vshrl.u32 %v4756, 7
    %v4758 = vsub.s32 3, %v4757
    %v4759 = vrot.slane %v4553, %v4758
    %v4760 = vlaneseq
    %v4761 = vshrl.u32 %v4760, 7
    %v4762 = vsub.s32 4, %v4761
    %v4763 = vrot.slane %v4553, %v4762
    %v4764 = vlaneseq
    %v4765 = vshrl.u32 %v4764, 7
    %v4766 = vsub.s32 5, %v4765
    %v4767 = vrot.slane %v4553, %v4766
    %v4768 = vlaneseq
    %v4769 = vshrl.u32 %v4768, 7
    %v4770 = vsub.s32 6, %v4769
    %v4771 = vrot.slane %v4553, %v4770
    %v4772 = vlaneseq
    %v4773 = vshrl.u32 %v4772, 7
    %v4774 = vsub.s32 7, %v4773
    %v4775 = vrot.slane %v4553, %v4774
    %v4776 = vcombine.low %v4587, %v4591
    %v4777 = vcombine.low %v4595, %v4599
    %v4778 = vcombine.low %v4603, %v4607
    %v4779 = vcombine.low %v4611, %v4615
    %v4780 = vcombine.low %v4619, %v4623
    %v4781 = vcombine.low %v4627, %v4631
    %v4782 = vcombine.low %v4635, %v4639
    %v4783 = vcombine.low %v4643, %v4647
    %v4784 = vcombine.low %v4651, %v4655
    %v4785 = vcombine.low %v4659, %v4663
    %v4786 = vcombine.low %v4667, %v4671
    %v4787 = vcombine.low %v4675, %v4679
    %v4788 = vcombine.low %v4683, %v4687
    %v4789 = vcombine.low %v4691, %v4695
    %v4790 = vcombine.low %v4699, %v4703
    %v4791 = vcombine.low %v4707, %v4711
    %v4792 = vcombine.low %v4715, %v4719
    %v4793 = vcombine.low %v4723, %v4727
    %v4794 = vcombine.low %v4731, %v4735
    %v4795 = vcombine.low %v4739, %v4743
    %v4796 = vcombine.low %v4747, %v4751
    %v4797 = vcombine.low %v4755, %v4759
    %v4798 = vcombine.low %v4763, %v4767
    %v4799 = vcombine.low %v4771, %v4775
    %v4824 = vsel %vm4554, %v4776, %v4506
    %v4825 = vsel %vm4555, %v4777, %v4507
    %v4826 = vsel %vm4556, %v4778, %v4508
    %v4827 = vsel %vm4557, %v4779, %v4509
    %v4828 = vsel %vm4558, %v4780, %v4510
    %v4829 = vsel %vm4559, %v4781, %v4511
    %v4830 = vsel %vm4560, %v4782, %v4512
    %v4831 = vsel %vm4561, %v4783, %v4513
    %v4832 = vsel %vm4562, %v4784, %v4514
    %v4833 = vsel %vm4563, %v4785, %v4515
    %v4834 = vsel %vm4564, %v4786, %v4516
    %v4835 = vsel %vm4565, %v4787, %v4517
    %v4836 = vsel %vm4566, %v4788, %v4518
    %v4837 = vsel %vm4567, %v4789, %v4519
    %v4838 = vsel %vm4568, %v4790, %v4520
    %v4839 = vsel %vm4569, %v4791, %v4521
    %v4840 = vsel %vm4570, %v4792, %v4522
    %v4841 = vsel %vm4571, %v4793, %v4523
    %v4842 = vsel %vm4572, %v4794, %v4524
    %v4843 = vsel %vm4573, %v4795, %v4525
    %v4844 = vsel %vm4574, %v4796, %v4526
    %v4845 = vsel %vm4575, %v4797, %v4527
    %v4846 = vsel %vm4576, %v4798, %v4528
    %v4847 = vsel %vm4577, %v4799, %v4529
    %s4848 = scalar_lea.vmem [#allocation3], 71
    %v4849 = vld [vmem:[%s4848] ss:$8 sm:$0xf]
    %v4850 = vld [vmem:[%s4848] ss:$8 sm:$0xf0]
    %v4851 = vor.u32 %v4849, %v4850
    %s4852 = scalar_lea.vmem [#allocation3], 199
    %v4853 = vld [vmem:[%s4852] ss:$8 sm:$0xf]
    %v4854 = vld [vmem:[%s4852] ss:$8 sm:$0xf0]
    %v4855 = vor.u32 %v4853, %v4854
    %s4856 = scalar_lea.vmem [#allocation3], 327
    %v4857 = vld [vmem:[%s4856] ss:$8 sm:$0xf]
    %v4858 = vld [vmem:[%s4856] ss:$8 sm:$0xf0]
    %v4859 = vor.u32 %v4857, %v4858
    %s4860 = scalar_lea.vmem [#allocation3], 455
    %v4861 = vld [vmem:[%s4860] ss:$8 sm:$0xf]
    %v4862 = vld [vmem:[%s4860] ss:$8 sm:$0xf0]
    %v4863 = vor.u32 %v4861, %v4862
    %s4864 = scalar_lea.vmem [#allocation3], 583
    %v4865 = vld [vmem:[%s4864] ss:$8 sm:$0xf]
    %v4866 = vld [vmem:[%s4864] ss:$8 sm:$0xf0]
    %v4867 = vor.u32 %v4865, %v4866
    %s4868 = scalar_lea.vmem [#allocation3], 711
    %v4869 = vld [vmem:[%s4868] ss:$8 sm:$0xf]
    %v4870 = vld [vmem:[%s4868] ss:$8 sm:$0xf0]
    %v4871 = vor.u32 %v4869, %v4870
    %vm4872 = vcmp.eq.s32.totalorder %v55, 15
    %vm4873 = vcmp.eq.s32.totalorder %v56, 15
    %vm4874 = vcmp.eq.s32.totalorder %v57, 15
    %vm4875 = vcmp.eq.s32.totalorder %v58, 15
    %vm4876 = vcmp.eq.s32.totalorder %v59, 15
    %vm4877 = vcmp.eq.s32.totalorder %v60, 15
    %vm4878 = vcmp.eq.s32.totalorder %v61, 15
    %vm4879 = vcmp.eq.s32.totalorder %v62, 15
    %vm4880 = vcmp.eq.s32.totalorder %v63, 15
    %vm4881 = vcmp.eq.s32.totalorder %v64, 15
    %vm4882 = vcmp.eq.s32.totalorder %v65, 15
    %vm4883 = vcmp.eq.s32.totalorder %v66, 15
    %vm4884 = vcmp.eq.s32.totalorder %v67, 15
    %vm4885 = vcmp.eq.s32.totalorder %v68, 15
    %vm4886 = vcmp.eq.s32.totalorder %v69, 15
    %vm4887 = vcmp.eq.s32.totalorder %v70, 15
    %vm4888 = vcmp.eq.s32.totalorder %v71, 15
    %vm4889 = vcmp.eq.s32.totalorder %v72, 15
    %vm4890 = vcmp.eq.s32.totalorder %v73, 15
    %vm4891 = vcmp.eq.s32.totalorder %v74, 15
    %vm4892 = vcmp.eq.s32.totalorder %v75, 15
    %vm4893 = vcmp.eq.s32.totalorder %v76, 15
    %vm4894 = vcmp.eq.s32.totalorder %v77, 15
    %vm4895 = vcmp.eq.s32.totalorder %v78, 15
    %v4902 = vlaneseq
    %v4903 = vshrl.u32 %v4902, 7
    %v4904 = vsub.s32 0, %v4903
    %v4905 = vrot.slane %v4851, %v4904
    %v4906 = vlaneseq
    %v4907 = vshrl.u32 %v4906, 7
    %v4908 = vsub.s32 1, %v4907
    %v4909 = vrot.slane %v4851, %v4908
    %v4910 = vlaneseq
    %v4911 = vshrl.u32 %v4910, 7
    %v4912 = vsub.s32 2, %v4911
    %v4913 = vrot.slane %v4851, %v4912
    %v4914 = vlaneseq
    %v4915 = vshrl.u32 %v4914, 7
    %v4916 = vsub.s32 3, %v4915
    %v4917 = vrot.slane %v4851, %v4916
    %v4918 = vlaneseq
    %v4919 = vshrl.u32 %v4918, 7
    %v4920 = vsub.s32 4, %v4919
    %v4921 = vrot.slane %v4851, %v4920
    %v4922 = vlaneseq
    %v4923 = vshrl.u32 %v4922, 7
    %v4924 = vsub.s32 5, %v4923
    %v4925 = vrot.slane %v4851, %v4924
    %v4926 = vlaneseq
    %v4927 = vshrl.u32 %v4926, 7
    %v4928 = vsub.s32 6, %v4927
    %v4929 = vrot.slane %v4851, %v4928
    %v4930 = vlaneseq
    %v4931 = vshrl.u32 %v4930, 7
    %v4932 = vsub.s32 7, %v4931
    %v4933 = vrot.slane %v4851, %v4932
    %v4934 = vlaneseq
    %v4935 = vshrl.u32 %v4934, 7
    %v4936 = vsub.s32 0, %v4935
    %v4937 = vrot.slane %v4855, %v4936
    %v4938 = vlaneseq
    %v4939 = vshrl.u32 %v4938, 7
    %v4940 = vsub.s32 1, %v4939
    %v4941 = vrot.slane %v4855, %v4940
    %v4942 = vlaneseq
    %v4943 = vshrl.u32 %v4942, 7
    %v4944 = vsub.s32 2, %v4943
    %v4945 = vrot.slane %v4855, %v4944
    %v4946 = vlaneseq
    %v4947 = vshrl.u32 %v4946, 7
    %v4948 = vsub.s32 3, %v4947
    %v4949 = vrot.slane %v4855, %v4948
    %v4950 = vlaneseq
    %v4951 = vshrl.u32 %v4950, 7
    %v4952 = vsub.s32 4, %v4951
    %v4953 = vrot.slane %v4855, %v4952
    %v4954 = vlaneseq
    %v4955 = vshrl.u32 %v4954, 7
    %v4956 = vsub.s32 5, %v4955
    %v4957 = vrot.slane %v4855, %v4956
    %v4958 = vlaneseq
    %v4959 = vshrl.u32 %v4958, 7
    %v4960 = vsub.s32 6, %v4959
    %v4961 = vrot.slane %v4855, %v4960
    %v4962 = vlaneseq
    %v4963 = vshrl.u32 %v4962, 7
    %v4964 = vsub.s32 7, %v4963
    %v4965 = vrot.slane %v4855, %v4964
    %v4966 = vlaneseq
    %v4967 = vshrl.u32 %v4966, 7
    %v4968 = vsub.s32 0, %v4967
    %v4969 = vrot.slane %v4859, %v4968
    %v4970 = vlaneseq
    %v4971 = vshrl.u32 %v4970, 7
    %v4972 = vsub.s32 1, %v4971
    %v4973 = vrot.slane %v4859, %v4972
    %v4974 = vlaneseq
    %v4975 = vshrl.u32 %v4974, 7
    %v4976 = vsub.s32 2, %v4975
    %v4977 = vrot.slane %v4859, %v4976
    %v4978 = vlaneseq
    %v4979 = vshrl.u32 %v4978, 7
    %v4980 = vsub.s32 3, %v4979
    %v4981 = vrot.slane %v4859, %v4980
    %v4982 = vlaneseq
    %v4983 = vshrl.u32 %v4982, 7
    %v4984 = vsub.s32 4, %v4983
    %v4985 = vrot.slane %v4859, %v4984
    %v4986 = vlaneseq
    %v4987 = vshrl.u32 %v4986, 7
    %v4988 = vsub.s32 5, %v4987
    %v4989 = vrot.slane %v4859, %v4988
    %v4990 = vlaneseq
    %v4991 = vshrl.u32 %v4990, 7
    %v4992 = vsub.s32 6, %v4991
    %v4993 = vrot.slane %v4859, %v4992
    %v4994 = vlaneseq
    %v4995 = vshrl.u32 %v4994, 7
    %v4996 = vsub.s32 7, %v4995
    %v4997 = vrot.slane %v4859, %v4996
    %v4998 = vlaneseq
    %v4999 = vshrl.u32 %v4998, 7
    %v5000 = vsub.s32 0, %v4999
    %v5001 = vrot.slane %v4863, %v5000
    %v5002 = vlaneseq
    %v5003 = vshrl.u32 %v5002, 7
    %v5004 = vsub.s32 1, %v5003
    %v5005 = vrot.slane %v4863, %v5004
    %v5006 = vlaneseq
    %v5007 = vshrl.u32 %v5006, 7
    %v5008 = vsub.s32 2, %v5007
    %v5009 = vrot.slane %v4863, %v5008
    %v5010 = vlaneseq
    %v5011 = vshrl.u32 %v5010, 7
    %v5012 = vsub.s32 3, %v5011
    %v5013 = vrot.slane %v4863, %v5012
    %v5014 = vlaneseq
    %v5015 = vshrl.u32 %v5014, 7
    %v5016 = vsub.s32 4, %v5015
    %v5017 = vrot.slane %v4863, %v5016
    %v5018 = vlaneseq
    %v5019 = vshrl.u32 %v5018, 7
    %v5020 = vsub.s32 5, %v5019
    %v5021 = vrot.slane %v4863, %v5020
    %v5022 = vlaneseq
    %v5023 = vshrl.u32 %v5022, 7
    %v5024 = vsub.s32 6, %v5023
    %v5025 = vrot.slane %v4863, %v5024
    %v5026 = vlaneseq
    %v5027 = vshrl.u32 %v5026, 7
    %v5028 = vsub.s32 7, %v5027
    %v5029 = vrot.slane %v4863, %v5028
    %v5030 = vlaneseq
    %v5031 = vshrl.u32 %v5030, 7
    %v5032 = vsub.s32 0, %v5031
    %v5033 = vrot.slane %v4867, %v5032
    %v5034 = vlaneseq
    %v5035 = vshrl.u32 %v5034, 7
    %v5036 = vsub.s32 1, %v5035
    %v5037 = vrot.slane %v4867, %v5036
    %v5038 = vlaneseq
    %v5039 = vshrl.u32 %v5038, 7
    %v5040 = vsub.s32 2, %v5039
    %v5041 = vrot.slane %v4867, %v5040
    %v5042 = vlaneseq
    %v5043 = vshrl.u32 %v5042, 7
    %v5044 = vsub.s32 3, %v5043
    %v5045 = vrot.slane %v4867, %v5044
    %v5046 = vlaneseq
    %v5047 = vshrl.u32 %v5046, 7
    %v5048 = vsub.s32 4, %v5047
    %v5049 = vrot.slane %v4867, %v5048
    %v5050 = vlaneseq
    %v5051 = vshrl.u32 %v5050, 7
    %v5052 = vsub.s32 5, %v5051
    %v5053 = vrot.slane %v4867, %v5052
    %v5054 = vlaneseq
    %v5055 = vshrl.u32 %v5054, 7
    %v5056 = vsub.s32 6, %v5055
    %v5057 = vrot.slane %v4867, %v5056
    %v5058 = vlaneseq
    %v5059 = vshrl.u32 %v5058, 7
    %v5060 = vsub.s32 7, %v5059
    %v5061 = vrot.slane %v4867, %v5060
    %v5062 = vlaneseq
    %v5063 = vshrl.u32 %v5062, 7
    %v5064 = vsub.s32 0, %v5063
    %v5065 = vrot.slane %v4871, %v5064
    %v5066 = vlaneseq
    %v5067 = vshrl.u32 %v5066, 7
    %v5068 = vsub.s32 1, %v5067
    %v5069 = vrot.slane %v4871, %v5068
    %v5070 = vlaneseq
    %v5071 = vshrl.u32 %v5070, 7
    %v5072 = vsub.s32 2, %v5071
    %v5073 = vrot.slane %v4871, %v5072
    %v5074 = vlaneseq
    %v5075 = vshrl.u32 %v5074, 7
    %v5076 = vsub.s32 3, %v5075
    %v5077 = vrot.slane %v4871, %v5076
    %v5078 = vlaneseq
    %v5079 = vshrl.u32 %v5078, 7
    %v5080 = vsub.s32 4, %v5079
    %v5081 = vrot.slane %v4871, %v5080
    %v5082 = vlaneseq
    %v5083 = vshrl.u32 %v5082, 7
    %v5084 = vsub.s32 5, %v5083
    %v5085 = vrot.slane %v4871, %v5084
    %v5086 = vlaneseq
    %v5087 = vshrl.u32 %v5086, 7
    %v5088 = vsub.s32 6, %v5087
    %v5089 = vrot.slane %v4871, %v5088
    %v5090 = vlaneseq
    %v5091 = vshrl.u32 %v5090, 7
    %v5092 = vsub.s32 7, %v5091
    %v5093 = vrot.slane %v4871, %v5092
    %v5094 = vcombine.low %v4905, %v4909
    %v5095 = vcombine.low %v4913, %v4917
    %v5096 = vcombine.low %v4921, %v4925
    %v5097 = vcombine.low %v4929, %v4933
    %v5098 = vcombine.low %v4937, %v4941
    %v5099 = vcombine.low %v4945, %v4949
    %v5100 = vcombine.low %v4953, %v4957
    %v5101 = vcombine.low %v4961, %v4965
    %v5102 = vcombine.low %v4969, %v4973
    %v5103 = vcombine.low %v4977, %v4981
    %v5104 = vcombine.low %v4985, %v4989
    %v5105 = vcombine.low %v4993, %v4997
    %v5106 = vcombine.low %v5001, %v5005
    %v5107 = vcombine.low %v5009, %v5013
    %v5108 = vcombine.low %v5017, %v5021
    %v5109 = vcombine.low %v5025, %v5029
    %v5110 = vcombine.low %v5033, %v5037
    %v5111 = vcombine.low %v5041, %v5045
    %v5112 = vcombine.low %v5049, %v5053
    %v5113 = vcombine.low %v5057, %v5061
    %v5114 = vcombine.low %v5065, %v5069
    %v5115 = vcombine.low %v5073, %v5077
    %v5116 = vcombine.low %v5081, %v5085
    %v5117 = vcombine.low %v5089, %v5093
    %v5142 = vsel %vm4872, %v5094, %v4824
    %v5143 = vsel %vm4873, %v5095, %v4825
    %v5144 = vsel %vm4874, %v5096, %v4826
    %v5145 = vsel %vm4875, %v5097, %v4827
    %v5146 = vsel %vm4876, %v5098, %v4828
    %v5147 = vsel %vm4877, %v5099, %v4829
    %v5148 = vsel %vm4878, %v5100, %v4830
    %v5149 = vsel %vm4879, %v5101, %v4831
    %v5150 = vsel %vm4880, %v5102, %v4832
    %v5151 = vsel %vm4881, %v5103, %v4833
    %v5152 = vsel %vm4882, %v5104, %v4834
    %v5153 = vsel %vm4883, %v5105, %v4835
    %v5154 = vsel %vm4884, %v5106, %v4836
    %v5155 = vsel %vm4885, %v5107, %v4837
    %v5156 = vsel %vm4886, %v5108, %v4838
    %v5157 = vsel %vm4887, %v5109, %v4839
    %v5158 = vsel %vm4888, %v5110, %v4840
    %v5159 = vsel %vm4889, %v5111, %v4841
    %v5160 = vsel %vm4890, %v5112, %v4842
    %v5161 = vsel %vm4891, %v5113, %v4843
    %v5162 = vsel %vm4892, %v5114, %v4844
    %v5163 = vsel %vm4893, %v5115, %v4845
    %v5164 = vsel %vm4894, %v5116, %v4846
    %v5165 = vsel %vm4895, %v5117, %v4847
    %v5166 = vld [vmem:[#allocation2] sm:$0x1]
    %v5167 = vld [vmem:[#allocation2 + $0x1] sm:$0x1]
    %v5168 = vld [vmem:[#allocation2 + $0x2] sm:$0x1]
    %v5169 = vld [vmem:[#allocation2 + $0x3] sm:$0x1]
    %v5170 = vld [vmem:[#allocation2 + $0x4] sm:$0x1]
    %v5171 = vld [vmem:[#allocation2 + $0x5] sm:$0x1]
    %v5196 = vcombine.high %v5142, %v5142
    %v5197 = vcombine.high %v5143, %v5143
    %v5198 = vcombine.high %v5144, %v5144
    %v5199 = vcombine.high %v5145, %v5145
    %v5200 = vcombine.high %v5146, %v5146
    %v5201 = vcombine.high %v5147, %v5147
    %v5202 = vcombine.high %v5148, %v5148
    %v5203 = vcombine.high %v5149, %v5149
    %v5204 = vcombine.high %v5150, %v5150
    %v5205 = vcombine.high %v5151, %v5151
    %v5206 = vcombine.high %v5152, %v5152
    %v5207 = vcombine.high %v5153, %v5153
    %v5208 = vcombine.high %v5154, %v5154
    %v5209 = vcombine.high %v5155, %v5155
    %v5210 = vcombine.high %v5156, %v5156
    %v5211 = vcombine.high %v5157, %v5157
    %v5212 = vcombine.high %v5158, %v5158
    %v5213 = vcombine.high %v5159, %v5159
    %v5214 = vcombine.high %v5160, %v5160
    %v5215 = vcombine.high %v5161, %v5161
    %v5216 = vcombine.high %v5162, %v5162
    %v5217 = vcombine.high %v5163, %v5163
    %v5218 = vcombine.high %v5164, %v5164
    %v5219 = vcombine.high %v5165, %v5165
    %vm5244 = vcmask 1042432
    %v5245 = vsel %vm5244, %v5142, 0.0
    %v5246 = vsel %vm5244, %v5196, 0.0
    %v5247 = vadd.f32 %v5245, %v5246
    %v5248 = vsel %vm5244, %v5143, 0.0
    %v5249 = vadd.f32 %v5247, %v5248
    %v5250 = vsel %vm5244, %v5197, 0.0
    %v5251 = vadd.f32 %v5249, %v5250
    %v5252 = vsel %vm5244, %v5144, 0.0
    %v5253 = vadd.f32 %v5251, %v5252
    %v5254 = vsel %vm5244, %v5198, 0.0
    %v5255 = vadd.f32 %v5253, %v5254
    %v5256 = vsel %vm5244, %v5145, 0.0
    %v5257 = vadd.f32 %v5255, %v5256
    %v5258 = vsel %vm5244, %v5199, 0.0
    %v5259 = vadd.f32 %v5257, %v5258
    %5260 = vadd.xlane.f32.xlu0 %v5259
    %v5261 = vpop.xlane.xlu0 %5260
    %v5262 = vsel %vm5244, %v5146, 0.0
    %v5263 = vsel %vm5244, %v5200, 0.0
    %v5264 = vadd.f32 %v5262, %v5263
    %v5265 = vsel %vm5244, %v5147, 0.0
    %v5266 = vadd.f32 %v5264, %v5265
    %v5267 = vsel %vm5244, %v5201, 0.0
    %v5268 = vadd.f32 %v5266, %v5267
    %v5269 = vsel %vm5244, %v5148, 0.0
    %v5270 = vadd.f32 %v5268, %v5269
    %v5271 = vsel %vm5244, %v5202, 0.0
    %v5272 = vadd.f32 %v5270, %v5271
    %v5273 = vsel %vm5244, %v5149, 0.0
    %v5274 = vadd.f32 %v5272, %v5273
    %v5275 = vsel %vm5244, %v5203, 0.0
    %v5276 = vadd.f32 %v5274, %v5275
    %5277 = vadd.xlane.f32.xlu0 %v5276
    %v5278 = vpop.xlane.xlu0 %5277
    %v5279 = vsel %vm5244, %v5150, 0.0
    %v5280 = vsel %vm5244, %v5204, 0.0
    %v5281 = vadd.f32 %v5279, %v5280
    %v5282 = vsel %vm5244, %v5151, 0.0
    %v5283 = vadd.f32 %v5281, %v5282
    %v5284 = vsel %vm5244, %v5205, 0.0
    %v5285 = vadd.f32 %v5283, %v5284
    %v5286 = vsel %vm5244, %v5152, 0.0
    %v5287 = vadd.f32 %v5285, %v5286
    %v5288 = vsel %vm5244, %v5206, 0.0
    %v5289 = vadd.f32 %v5287, %v5288
    %v5290 = vsel %vm5244, %v5153, 0.0
    %v5291 = vadd.f32 %v5289, %v5290
    %v5292 = vsel %vm5244, %v5207, 0.0
    %v5293 = vadd.f32 %v5291, %v5292
    %5294 = vadd.xlane.f32.xlu0 %v5293
    %v5295 = vpop.xlane.xlu0 %5294
    %v5296 = vsel %vm5244, %v5154, 0.0
    %v5297 = vsel %vm5244, %v5208, 0.0
    %v5298 = vadd.f32 %v5296, %v5297
    %v5299 = vsel %vm5244, %v5155, 0.0
    %v5300 = vadd.f32 %v5298, %v5299
    %v5301 = vsel %vm5244, %v5209, 0.0
    %v5302 = vadd.f32 %v5300, %v5301
    %v5303 = vsel %vm5244, %v5156, 0.0
    %v5304 = vadd.f32 %v5302, %v5303
    %v5305 = vsel %vm5244, %v5210, 0.0
    %v5306 = vadd.f32 %v5304, %v5305
    %v5307 = vsel %vm5244, %v5157, 0.0
    %v5308 = vadd.f32 %v5306, %v5307
    %v5309 = vsel %vm5244, %v5211, 0.0
    %v5310 = vadd.f32 %v5308, %v5309
    %5311 = vadd.xlane.f32.xlu0 %v5310
    %v5312 = vpop.xlane.xlu0 %5311
    %v5313 = vsel %vm5244, %v5158, 0.0
    %v5314 = vsel %vm5244, %v5212, 0.0
    %v5315 = vadd.f32 %v5313, %v5314
    %v5316 = vsel %vm5244, %v5159, 0.0
    %v5317 = vadd.f32 %v5315, %v5316
    %v5318 = vsel %vm5244, %v5213, 0.0
    %v5319 = vadd.f32 %v5317, %v5318
    %v5320 = vsel %vm5244, %v5160, 0.0
    %v5321 = vadd.f32 %v5319, %v5320
    %v5322 = vsel %vm5244, %v5214, 0.0
    %v5323 = vadd.f32 %v5321, %v5322
    %v5324 = vsel %vm5244, %v5161, 0.0
    %v5325 = vadd.f32 %v5323, %v5324
    %v5326 = vsel %vm5244, %v5215, 0.0
    %v5327 = vadd.f32 %v5325, %v5326
    %5328 = vadd.xlane.f32.xlu0 %v5327
    %v5329 = vpop.xlane.xlu0 %5328
    %v5330 = vsel %vm5244, %v5162, 0.0
    %v5331 = vsel %vm5244, %v5216, 0.0
    %v5332 = vadd.f32 %v5330, %v5331
    %v5333 = vsel %vm5244, %v5163, 0.0
    %v5334 = vadd.f32 %v5332, %v5333
    %v5335 = vsel %vm5244, %v5217, 0.0
    %v5336 = vadd.f32 %v5334, %v5335
    %v5337 = vsel %vm5244, %v5164, 0.0
    %v5338 = vadd.f32 %v5336, %v5337
    %v5339 = vsel %vm5244, %v5218, 0.0
    %v5340 = vadd.f32 %v5338, %v5339
    %v5341 = vsel %vm5244, %v5165, 0.0
    %v5342 = vadd.f32 %v5340, %v5341
    %v5343 = vsel %vm5244, %v5219, 0.0
    %v5344 = vadd.f32 %v5342, %v5343
    %5345 = vadd.xlane.f32.xlu0 %v5344
    %v5346 = vpop.xlane.xlu0 %5345
    %v5353 = vlaneseq
    %v5354 = vshrl.u32 %v5353, 7
    %v5355 = vsub.s32 0, %v5354
    %v5356 = vrot.slane %v5261, %v5355
    %v5357 = vlaneseq
    %v5358 = vshrl.u32 %v5357, 7
    %v5359 = vsub.s32 1, %v5358
    %v5360 = vrot.slane %v5261, %v5359
    %v5361 = vlaneseq
    %v5362 = vshrl.u32 %v5361, 7
    %v5363 = vsub.s32 2, %v5362
    %v5364 = vrot.slane %v5261, %v5363
    %v5365 = vlaneseq
    %v5366 = vshrl.u32 %v5365, 7
    %v5367 = vsub.s32 0, %v5366
    %v5368 = vrot.slane %v5278, %v5367
    %v5369 = vlaneseq
    %v5370 = vshrl.u32 %v5369, 7
    %v5371 = vsub.s32 1, %v5370
    %v5372 = vrot.slane %v5278, %v5371
    %v5373 = vlaneseq
    %v5374 = vshrl.u32 %v5373, 7
    %v5375 = vsub.s32 2, %v5374
    %v5376 = vrot.slane %v5278, %v5375
    %v5377 = vlaneseq
    %v5378 = vshrl.u32 %v5377, 7
    %v5379 = vsub.s32 0, %v5378
    %v5380 = vrot.slane %v5295, %v5379
    %v5381 = vlaneseq
    %v5382 = vshrl.u32 %v5381, 7
    %v5383 = vsub.s32 1, %v5382
    %v5384 = vrot.slane %v5295, %v5383
    %v5385 = vlaneseq
    %v5386 = vshrl.u32 %v5385, 7
    %v5387 = vsub.s32 2, %v5386
    %v5388 = vrot.slane %v5295, %v5387
    %v5389 = vlaneseq
    %v5390 = vshrl.u32 %v5389, 7
    %v5391 = vsub.s32 0, %v5390
    %v5392 = vrot.slane %v5312, %v5391
    %v5393 = vlaneseq
    %v5394 = vshrl.u32 %v5393, 7
    %v5395 = vsub.s32 1, %v5394
    %v5396 = vrot.slane %v5312, %v5395
    %v5397 = vlaneseq
    %v5398 = vshrl.u32 %v5397, 7
    %v5399 = vsub.s32 2, %v5398
    %v5400 = vrot.slane %v5312, %v5399
    %v5401 = vlaneseq
    %v5402 = vshrl.u32 %v5401, 7
    %v5403 = vsub.s32 0, %v5402
    %v5404 = vrot.slane %v5329, %v5403
    %v5405 = vlaneseq
    %v5406 = vshrl.u32 %v5405, 7
    %v5407 = vsub.s32 1, %v5406
    %v5408 = vrot.slane %v5329, %v5407
    %v5409 = vlaneseq
    %v5410 = vshrl.u32 %v5409, 7
    %v5411 = vsub.s32 2, %v5410
    %v5412 = vrot.slane %v5329, %v5411
    %v5413 = vlaneseq
    %v5414 = vshrl.u32 %v5413, 7
    %v5415 = vsub.s32 0, %v5414
    %v5416 = vrot.slane %v5346, %v5415
    %v5417 = vlaneseq
    %v5418 = vshrl.u32 %v5417, 7
    %v5419 = vsub.s32 1, %v5418
    %v5420 = vrot.slane %v5346, %v5419
    %v5421 = vlaneseq
    %v5422 = vshrl.u32 %v5421, 7
    %v5423 = vsub.s32 2, %v5422
    %v5424 = vrot.slane %v5346, %v5423
    %v5425 = vcombine.low %v5356, %v5360
    %v5427 = vunpack.c.l.s4 1966171168
    %v5428 = vunpack.c.0.s8 %v5427
    %v5429 = vlaneseq
    %v5430 = vshrl.u32 %v5429, 7
    %v5431 = vsub.s32 %v5428, %v5430
    %v5432 = vrot.slane %v5425, %v5431
    %v5434 = vunpack.c.l.s4 1966171168
    %v5435 = vunpack.c.0.s8 %v5434
    %v5436 = vlaneseq
    %v5437 = vshrl.u32 %v5436, 7
    %v5438 = vsub.s32 %v5435, %v5437
    %v5439 = vrot.slane %v5364, %v5438
    %v5440 = vcombine.low %v5432, %v5439
    %v5442 = vunpack.c.l.s4 1966171168
    %v5443 = vunpack.c.0.s8 %v5442
    %v5444 = vlaneseq
    %v5445 = vshrl.u32 %v5444, 7
    %v5446 = vsub.s32 %v5443, %v5445
    %v5447 = vrot.slane %v5440, %v5446
    %v5448 = vcombine.low %v5368, %v5372
    %v5450 = vunpack.c.l.s4 1966171168
    %v5451 = vunpack.c.0.s8 %v5450
    %v5452 = vlaneseq
    %v5453 = vshrl.u32 %v5452, 7
    %v5454 = vsub.s32 %v5451, %v5453
    %v5455 = vrot.slane %v5448, %v5454
    %v5457 = vunpack.c.l.s4 1966171168
    %v5458 = vunpack.c.0.s8 %v5457
    %v5459 = vlaneseq
    %v5460 = vshrl.u32 %v5459, 7
    %v5461 = vsub.s32 %v5458, %v5460
    %v5462 = vrot.slane %v5376, %v5461
    %v5463 = vcombine.low %v5455, %v5462
    %v5465 = vunpack.c.l.s4 1966171168
    %v5466 = vunpack.c.0.s8 %v5465
    %v5467 = vlaneseq
    %v5468 = vshrl.u32 %v5467, 7
    %v5469 = vsub.s32 %v5466, %v5468
    %v5470 = vrot.slane %v5463, %v5469
    %v5471 = vcombine.low %v5380, %v5384
    %v5473 = vunpack.c.l.s4 1966171168
    %v5474 = vunpack.c.0.s8 %v5473
    %v5475 = vlaneseq
    %v5476 = vshrl.u32 %v5475, 7
    %v5477 = vsub.s32 %v5474, %v5476
    %v5478 = vrot.slane %v5471, %v5477
    %v5480 = vunpack.c.l.s4 1966171168
    %v5481 = vunpack.c.0.s8 %v5480
    %v5482 = vlaneseq
    %v5483 = vshrl.u32 %v5482, 7
    %v5484 = vsub.s32 %v5481, %v5483
    %v5485 = vrot.slane %v5388, %v5484
    %v5486 = vcombine.low %v5478, %v5485
    %v5488 = vunpack.c.l.s4 1966171168
    %v5489 = vunpack.c.0.s8 %v5488
    %v5490 = vlaneseq
    %v5491 = vshrl.u32 %v5490, 7
    %v5492 = vsub.s32 %v5489, %v5491
    %v5493 = vrot.slane %v5486, %v5492
    %v5494 = vcombine.low %v5392, %v5396
    %v5496 = vunpack.c.l.s4 1966171168
    %v5497 = vunpack.c.0.s8 %v5496
    %v5498 = vlaneseq
    %v5499 = vshrl.u32 %v5498, 7
    %v5500 = vsub.s32 %v5497, %v5499
    %v5501 = vrot.slane %v5494, %v5500
    %v5503 = vunpack.c.l.s4 1966171168
    %v5504 = vunpack.c.0.s8 %v5503
    %v5505 = vlaneseq
    %v5506 = vshrl.u32 %v5505, 7
    %v5507 = vsub.s32 %v5504, %v5506
    %v5508 = vrot.slane %v5400, %v5507
    %v5509 = vcombine.low %v5501, %v5508
    %v5511 = vunpack.c.l.s4 1966171168
    %v5512 = vunpack.c.0.s8 %v5511
    %v5513 = vlaneseq
    %v5514 = vshrl.u32 %v5513, 7
    %v5515 = vsub.s32 %v5512, %v5514
    %v5516 = vrot.slane %v5509, %v5515
    %v5517 = vcombine.low %v5404, %v5408
    %v5519 = vunpack.c.l.s4 1966171168
    %v5520 = vunpack.c.0.s8 %v5519
    %v5521 = vlaneseq
    %v5522 = vshrl.u32 %v5521, 7
    %v5523 = vsub.s32 %v5520, %v5522
    %v5524 = vrot.slane %v5517, %v5523
    %v5526 = vunpack.c.l.s4 1966171168
    %v5527 = vunpack.c.0.s8 %v5526
    %v5528 = vlaneseq
    %v5529 = vshrl.u32 %v5528, 7
    %v5530 = vsub.s32 %v5527, %v5529
    %v5531 = vrot.slane %v5412, %v5530
    %v5532 = vcombine.low %v5524, %v5531
    %v5534 = vunpack.c.l.s4 1966171168
    %v5535 = vunpack.c.0.s8 %v5534
    %v5536 = vlaneseq
    %v5537 = vshrl.u32 %v5536, 7
    %v5538 = vsub.s32 %v5535, %v5537
    %v5539 = vrot.slane %v5532, %v5538
    %v5540 = vcombine.low %v5416, %v5420
    %v5542 = vunpack.c.l.s4 1966171168
    %v5543 = vunpack.c.0.s8 %v5542
    %v5544 = vlaneseq
    %v5545 = vshrl.u32 %v5544, 7
    %v5546 = vsub.s32 %v5543, %v5545
    %v5547 = vrot.slane %v5540, %v5546
    %v5549 = vunpack.c.l.s4 1966171168
    %v5550 = vunpack.c.0.s8 %v5549
    %v5551 = vlaneseq
    %v5552 = vshrl.u32 %v5551, 7
    %v5553 = vsub.s32 %v5550, %v5552
    %v5554 = vrot.slane %v5424, %v5553
    %v5555 = vcombine.low %v5547, %v5554
    %v5557 = vunpack.c.l.s4 1966171168
    %v5558 = vunpack.c.0.s8 %v5557
    %v5559 = vlaneseq
    %v5560 = vshrl.u32 %v5559, 7
    %v5561 = vsub.s32 %v5558, %v5560
    %v5562 = vrot.slane %v5555, %v5561
    %5563 = vset.pattern.permute.xlu0 0
    %5564 = vperm.xlu0 %5563, %v5447
    %v5565 = vpop.permute.xlu0 %5564
    %5566 = vset.pattern.permute.xlu0 0
    %5567 = vperm.xlu0 %5566, %v5470
    %v5568 = vpop.permute.xlu0 %5567
    %5569 = vset.pattern.permute.xlu0 0
    %5570 = vperm.xlu0 %5569, %v5493
    %v5571 = vpop.permute.xlu0 %5570
    %5572 = vset.pattern.permute.xlu0 0
    %5573 = vperm.xlu0 %5572, %v5516
    %v5574 = vpop.permute.xlu0 %5573
    %5575 = vset.pattern.permute.xlu0 0
    %5576 = vperm.xlu0 %5575, %v5539
    %v5577 = vpop.permute.xlu0 %5576
    %5578 = vset.pattern.permute.xlu0 0
    %5579 = vperm.xlu0 %5578, %v5562
    %v5580 = vpop.permute.xlu0 %5579
    %v5581 = vlaneseq
    %v5582 = vand.u32 %v5581, 127
    %v5583 = vlaneseq
    %v5584 = vshrl.u32 %v5583, 7
    %v5585 = vsub.s32 %v5582, %v5584
    %v5586 = vrot.slane %v5565, %v5585
    %v5587 = vlaneseq
    %v5588 = vshrl.u32 %v5587, 7
    %v5589 = vsub.s32 %v5582, %v5588
    %v5590 = vrot.slane %v5568, %v5589
    %v5591 = vlaneseq
    %v5592 = vshrl.u32 %v5591, 7
    %v5593 = vsub.s32 %v5582, %v5592
    %v5594 = vrot.slane %v5571, %v5593
    %v5595 = vlaneseq
    %v5596 = vshrl.u32 %v5595, 7
    %v5597 = vsub.s32 %v5582, %v5596
    %v5598 = vrot.slane %v5574, %v5597
    %v5599 = vlaneseq
    %v5600 = vshrl.u32 %v5599, 7
    %v5601 = vsub.s32 %v5582, %v5600
    %v5602 = vrot.slane %v5577, %v5601
    %v5603 = vlaneseq
    %v5604 = vshrl.u32 %v5603, 7
    %v5605 = vsub.s32 %v5582, %v5604
    %v5606 = vrot.slane %v5580, %v5605
    %v5608 = vunpack.c.l.s4 1966171168
    %v5609 = vunpack.c.0.s8 %v5608
    %v5610 = vlaneseq
    %v5611 = vshrl.u32 %v5610, 7
    %v5612 = vsub.s32 %v5609, %v5611
    %v5613 = vrot.slane %v5586, %v5612
    %v5615 = vunpack.c.l.s4 1966171168
    %v5616 = vunpack.c.0.s8 %v5615
    %v5617 = vlaneseq
    %v5618 = vshrl.u32 %v5617, 7
    %v5619 = vsub.s32 %v5616, %v5618
    %v5620 = vrot.slane %v5613, %v5619
    %v5622 = vunpack.c.l.s4 1966171168
    %v5623 = vunpack.c.0.s8 %v5622
    %v5624 = vlaneseq
    %v5625 = vshrl.u32 %v5624, 7
    %v5626 = vsub.s32 %v5623, %v5625
    %v5627 = vrot.slane %v5590, %v5626
    %v5629 = vunpack.c.l.s4 1966171168
    %v5630 = vunpack.c.0.s8 %v5629
    %v5631 = vlaneseq
    %v5632 = vshrl.u32 %v5631, 7
    %v5633 = vsub.s32 %v5630, %v5632
    %v5634 = vrot.slane %v5627, %v5633
    %v5636 = vunpack.c.l.s4 1966171168
    %v5637 = vunpack.c.0.s8 %v5636
    %v5638 = vlaneseq
    %v5639 = vshrl.u32 %v5638, 7
    %v5640 = vsub.s32 %v5637, %v5639
    %v5641 = vrot.slane %v5594, %v5640
    %v5643 = vunpack.c.l.s4 1966171168
    %v5644 = vunpack.c.0.s8 %v5643
    %v5645 = vlaneseq
    %v5646 = vshrl.u32 %v5645, 7
    %v5647 = vsub.s32 %v5644, %v5646
    %v5648 = vrot.slane %v5641, %v5647
    %v5650 = vunpack.c.l.s4 1966171168
    %v5651 = vunpack.c.0.s8 %v5650
    %v5652 = vlaneseq
    %v5653 = vshrl.u32 %v5652, 7
    %v5654 = vsub.s32 %v5651, %v5653
    %v5655 = vrot.slane %v5598, %v5654
    %v5657 = vunpack.c.l.s4 1966171168
    %v5658 = vunpack.c.0.s8 %v5657
    %v5659 = vlaneseq
    %v5660 = vshrl.u32 %v5659, 7
    %v5661 = vsub.s32 %v5658, %v5660
    %v5662 = vrot.slane %v5655, %v5661
    %v5664 = vunpack.c.l.s4 1966171168
    %v5665 = vunpack.c.0.s8 %v5664
    %v5666 = vlaneseq
    %v5667 = vshrl.u32 %v5666, 7
    %v5668 = vsub.s32 %v5665, %v5667
    %v5669 = vrot.slane %v5602, %v5668
    %v5671 = vunpack.c.l.s4 1966171168
    %v5672 = vunpack.c.0.s8 %v5671
    %v5673 = vlaneseq
    %v5674 = vshrl.u32 %v5673, 7
    %v5675 = vsub.s32 %v5672, %v5674
    %v5676 = vrot.slane %v5669, %v5675
    %v5678 = vunpack.c.l.s4 1966171168
    %v5679 = vunpack.c.0.s8 %v5678
    %v5680 = vlaneseq
    %v5681 = vshrl.u32 %v5680, 7
    %v5682 = vsub.s32 %v5679, %v5681
    %v5683 = vrot.slane %v5606, %v5682
    %v5685 = vunpack.c.l.s4 1966171168
    %v5686 = vunpack.c.0.s8 %v5685
    %v5687 = vlaneseq
    %v5688 = vshrl.u32 %v5687, 7
    %v5689 = vsub.s32 %v5686, %v5688
    %v5690 = vrot.slane %v5683, %v5689
    %v5697 = vadd.f32 %v5166, %v5620
    %v5698 = vadd.f32 %v5167, %v5634
    %v5699 = vadd.f32 %v5168, %v5648
    %v5700 = vadd.f32 %v5169, %v5662
    %v5701 = vadd.f32 %v5170, %v5676
    %v5702 = vadd.f32 %v5171, %v5690
    %vm5703 = vcmask 16384
    %5704 = vst.msk [vmem:[#allocation2] sm:$0x1] %vm5703, %v5697
    %5705 = vst.msk [vmem:[#allocation2 + $0x1] sm:$0x1] %vm5703, %v5698
    %5706 = vst.msk [vmem:[#allocation2 + $0x2] sm:$0x1] %vm5703, %v5699
    %5707 = vst.msk [vmem:[#allocation2 + $0x3] sm:$0x1] %vm5703, %v5700
    %5708 = vst.msk [vmem:[#allocation2 + $0x4] sm:$0x1] %vm5703, %v5701
    %5709 = vst.msk [vmem:[#allocation2 + $0x5] sm:$0x1] %vm5703, %v5702
    // Predicated region
    $region26: #{tpu_custom_call.1} parent=1 // pred_check
      %p5710 = pneg %p44
    $region27: #{tpu_custom_call.1} parent=1 // pred_check_branch
      %5712 = sbr.rel (%p5710) target = $region29
    $region28: #{tpu_custom_call.1} parent=1 // pred_region
      %v5713 = vld [vmem:[#allocation2] sm:$0x1]
      %v5714 = vld [vmem:[#allocation2 + $0x1] sm:$0x1]
      %v5715 = vld [vmem:[#allocation2 + $0x2] sm:$0x1]
      %v5716 = vld [vmem:[#allocation2 + $0x3] sm:$0x1]
      %v5717 = vld [vmem:[#allocation2 + $0x4] sm:$0x1]
      %v5718 = vld [vmem:[#allocation2 + $0x5] sm:$0x1]
      %v5719 = vmul.f32 %v5713, -0.0009765625
      %v5720 = vmul.f32 %v5714, -0.0009765625
      %v5721 = vmul.f32 %v5715, -0.0009765625
      %v5722 = vmul.f32 %v5716, -0.0009765625
      %v5723 = vmul.f32 %v5717, -0.0009765625
      %v5724 = vmul.f32 %v5718, -0.0009765625
      %5725 = vst.msk [vmem:[%s3] sm:$0x1] %vm5703, %v5719
      %5726 = vst.msk [vmem:[%s3 + $0x1] sm:$0x1] %vm5703, %v5720
      %5727 = vst.msk [vmem:[%s3 + $0x2] sm:$0x1] %vm5703, %v5721
      %5728 = vst.msk [vmem:[%s3 + $0x3] sm:$0x1] %vm5703, %v5722
      %5729 = vst.msk [vmem:[%s3 + $0x4] sm:$0x1] %vm5703, %v5723
      %5730 = vst.msk [vmem:[%s3 + $0x5] sm:$0x1] %vm5703, %v5724
      %v5731 = vsel %vm5703, %v5719, inf
      %5732 = vmin.xlane.f32.xlu0 %v5731
      %v5733 = vpop.xlane.xlu0 %5732
      %v5734 = vsel %vm5703, %v5720, inf
      %5735 = vmin.xlane.f32.xlu0 %v5734
      %v5736 = vpop.xlane.xlu0 %5735
      %v5737 = vsel %vm5703, %v5721, inf
      %5738 = vmin.xlane.f32.xlu0 %v5737
      %v5739 = vpop.xlane.xlu0 %5738
      %v5740 = vsel %vm5703, %v5722, inf
      %5741 = vmin.xlane.f32.xlu0 %v5740
      %v5742 = vpop.xlane.xlu0 %5741
      %v5743 = vsel %vm5703, %v5723, inf
      %5744 = vmin.xlane.f32.xlu0 %v5743
      %v5745 = vpop.xlane.xlu0 %5744
      %v5746 = vsel %vm5703, %v5724, inf
      %5747 = vmin.xlane.f32.xlu0 %v5746
      %v5748 = vpop.xlane.xlu0 %5747
      %v5749 = vld [vmem:[%s0] sm:$0x1]
      %v5750 = vld [vmem:[%s0 + $0x1] sm:$0x1]
      %v5751 = vld [vmem:[%s0 + $0x2] sm:$0x1]
      %v5752 = vld [vmem:[%s0 + $0x3] sm:$0x1]
      %v5753 = vld [vmem:[%s0 + $0x4] sm:$0x1]
      %v5754 = vld [vmem:[%s0 + $0x5] sm:$0x1]
      %vm5755 = vcmp.eq.s32.totalorder %v5749, 0
      %vm5756 = vcmp.eq.s32.totalorder %v5750, 0
      %vm5757 = vcmp.eq.s32.totalorder %v5751, 0
      %vm5758 = vcmp.eq.s32.totalorder %v5752, 0
      %vm5759 = vcmp.eq.s32.totalorder %v5753, 0
      %vm5760 = vcmp.eq.s32.totalorder %v5754, 0
      %v5761 = vsel %vm5755, %v5719, %v5733
      %v5762 = vsel %vm5756, %v5720, %v5736
      %v5763 = vsel %vm5757, %v5721, %v5739
      %v5764 = vsel %vm5758, %v5722, %v5742
      %v5765 = vsel %vm5759, %v5723, %v5745
      %v5766 = vsel %vm5760, %v5724, %v5748
      %vm5767 = vcmask 0
      %5768 = vst.msk [vmem:[%s4] sm:$0x1] %vm5767, %v5761
      %5769 = vst.msk [vmem:[%s4 + $0x1] sm:$0x1] %vm5767, %v5762
      %5770 = vst.msk [vmem:[%s4 + $0x2] sm:$0x1] %vm5767, %v5763
      %5771 = vst.msk [vmem:[%s4 + $0x3] sm:$0x1] %vm5767, %v5764
      %5772 = vst.msk [vmem:[%s4 + $0x4] sm:$0x1] %vm5767, %v5765
      %5773 = vst.msk [vmem:[%s4 + $0x5] sm:$0x1] %vm5767, %v5766
    $region29: #{tpu_custom_call.1} parent=1 // pred_fallthru
      _
    // Predicated region
    $region30: #{tpu_custom_call.1} parent=1 // pred_check
      _
    $region31: #{tpu_custom_call.1} parent=1 // pred_check_branch
      %5775 = sbr.rel (0) target = $region33
    $region32: #{tpu_custom_call.1} parent=1 // pred_region
      _
    $region33: #{tpu_custom_call.1} parent=1 // pred_fallthru
      _
    // Predicated region
    $region34: #{tpu_custom_call.1} parent=1 // pred_check
      _
    $region35: #{tpu_custom_call.1} parent=1 // pred_check_branch
      %5777 = sbr.rel (0) target = $region37
    $region36: #{tpu_custom_call.1} parent=1 // pred_region
      _
    $region37: #{tpu_custom_call.1} parent=1 // pred_fallthru
      _
    // Predicated region
    $region38: #{tpu_custom_call.1} parent=1 // pred_check
      _
    $region39: #{tpu_custom_call.1} parent=1 // pred_check_branch
      %5779 = sbr.rel (0) target = $region41
    $region40: #{tpu_custom_call.1} parent=1 // pred_region
      _
    $region41: #{tpu_custom_call.1} parent=1 // pred_fallthru
      _
    // Predicated region
    $region42: #{tpu_custom_call.1} parent=1 // pred_check
      _
    $region43: #{tpu_custom_call.1} parent=1 // pred_check_branch
      %5781 = sbr.rel (0) target = $region45
    $region44: #{tpu_custom_call.1} parent=1 // pred_region
      _
    $region45: #{tpu_custom_call.1} parent=1 // pred_fallthru
      _
    %5782 = vsyncpa [#allocation4], 1
    %5783 = vsyncpa [#allocation6], 1

</llo_original>
